<compile_context>
chip_gen: v6e
topology: v6e:2x2x1
jax: 0.10.0
libtpu: 0.0.40
codegen_flags: <defaults>
</compile_context>

<pallas_src>
import numpy as np
import jax
import jax.numpy as jnp
from jax.experimental import pallas as pl
from jax.experimental.pallas import tpu as pltpu


def _round_up(x, m):
    return (x + m - 1) // m * m


# ------------------------------ fused kernel -------------------------------- #
def _make_encoder_kernel(L, S, Bp, Hp, unroll_time):
    """Refs:
       inputs : x (S*Bp, In) bf16, h0 (L, Bp, Hp) f32,
                per layer: w_in (., 3Hp) bf16, b_in (1, 3Hp) f32,
                           w_hh (Hp, 3Hp) bf16, b_hn (1, Hp) f32
       outputs: out (S*Bp, Hp) f32 (last layer), h_n (L, Bp, Hp) f32
       scratch: gi (S*Bp, 3Hp) f32, act (S*Bp, Hp) bf16
    """
    G = 3 * Hp

    def kernel(*refs):
        x_ref, h0_ref = refs[0], refs[1]
        w_refs = refs[2:2 + 4 * L]
        out_ref = refs[2 + 4 * L]
        hn_ref = refs[3 + 4 * L]
        gi_scr = refs[4 + 4 * L]
        act_scr = refs[5 + 4 * L]

        for l in range(L):
            w_in_ref, b_in_ref, w_hh_ref, b_hn_ref = w_refs[4 * l:4 * l + 4]

            # Input projection for ALL timesteps in one big MXU matmul.
            # (b_hr, b_hz are already folded into b_in at weight-prep time.)
            src = x_ref[...] if l == 0 else act_scr[...]          # bf16
            gi_scr[...] = (
                jnp.dot(src, w_in_ref[...], preferred_element_type=jnp.float32)
                + b_in_ref[...])

            dst_ref = out_ref if l == L - 1 else act_scr
            dst_dtype = dst_ref.dtype

            # Hoist the b_hn broadcast out of the timestep loop (not CSE'd).
            b_hn_b = jnp.broadcast_to(b_hn_ref[...], (Bp, Hp))

            def gru_step(row, h_prev):
                gi = gi_scr[pl.ds(row, Bp), :]                    # (Bp, 3Hp) f32
                # TODO(synk): make W_hh MXU-resident (matmul_push_rhs / acc_lhs
                # / pop) instead of re-pushing it on every sequential step.
                gh = jnp.dot(h_prev.astype(jnp.bfloat16), w_hh_ref[...],
                             preferred_element_type=jnp.float32)  # (Bp, 3Hp)
                # PyTorch GRU gate order: r, z, n
                r = jax.nn.sigmoid(gi[:, 0:Hp] + gh[:, 0:Hp])
                z = jax.nn.sigmoid(gi[:, Hp:2 * Hp] + gh[:, Hp:2 * Hp])
                n = jnp.tanh(gi[:, 2 * Hp:G] + r * (gh[:, 2 * Hp:G] + b_hn_b))
                h_new = n + z * (h_prev - n)
                dst_ref[pl.ds(row, Bp), :] = h_new.astype(dst_dtype)
                return h_new

            h = h0_ref[l]                                         # (Bp, Hp) f32
            if unroll_time:
                # Short fixed sequence: fully unrolled, static slice starts,
                # h carried as a value (no scratch store on the serial path).
                for t in range(S):
                    h = gru_step(t * Bp, h)
            else:
                def body(t, h_carry):
                    row = pl.multiple_of(t * Bp, Bp)
                    return gru_step(row, h_carry)
                h = jax.lax.fori_loop(0, S, body, h, unroll=4)

            hn_ref[l] = h

    return kernel


# ----------------------------- weight preparation ---------------------------- #
def _pad_gate_matrix(w_t, in_pad, Hp):
    """w_t: (in_dim, 3H) -> (in_pad, 3*Hp) with each gate block placed at g*Hp."""
    in_dim, three_h = w_t.shape
    H = three_h // 3
    out = jnp.zeros((in_pad, 3 * Hp), jnp.float32)
    for g in range(3):
        out = out.at[:in_dim, g * Hp:g * Hp + H].set(w_t[:, g * H:(g + 1) * H])
    return out


def _pad_gate_bias(b, Hp):
    H = b.shape[0] // 3
    out = jnp.zeros((1, 3 * Hp), jnp.float32)
    for g in range(3):
        out = out.at[0, g * Hp:g * Hp + H].set(b[g * H:(g + 1) * H])
    return out


def _pad_row(b, Hp):
    out = jnp.zeros((1, Hp), jnp.float32)
    return out.at[0, :b.shape[0]].set(b)


# ----------------------------- EncoderRNN forward ---------------------------- #
def encoder_rnn_forward(params, inp, hidden):
    """inp: (B, S, input_size), hidden: (L, B, H) -> (output (B,S,H), h_n (L,B,H))."""
    B, S, In = inp.shape
    L, _, H = hidden.shape

    Bp = _round_up(max(B, 8), 8)          # sublane-aligned batch
    Hp = _round_up(H, 128)                # lane-aligned hidden

    # Fold Linear into layer-0 input projection (exact in f32).
    w_lin_t = params["linear_w"].T.astype(jnp.float32)               # (In, H)
    w_ih0_t = params["w_ih_l0"].T.astype(jnp.float32)                # (H, 3H)
    w_in0 = w_lin_t @ w_ih0_t                                        # (In, 3H)
    b_in0 = (params["linear_b"].astype(jnp.float32) @ w_ih0_t
             + params["b_ih_l0"].astype(jnp.float32))                # (3H,)

    weight_args = []
    for l in range(L):
        if l == 0:
            w_in_t, b_in, in_pad = w_in0, b_in0, In
        else:
            w_in_t = params[f"w_ih_l{l}"].T.astype(jnp.float32)
            b_in = params[f"b_ih_l{l}"].astype(jnp.float32)
            in_pad = Hp
        w_hh_t = params[f"w_hh_l{l}"].T.astype(jnp.float32)
        b_hh = params[f"b_hh_l{l}"].astype(jnp.float32)

        # Fold b_hr, b_hz (additive with the input bias) into b_in; keep b_hn
        # separate (it sits inside r * (gh_n + b_hn)).
        b_in_folded = b_in.at[:2 * H].add(b_hh[:2 * H])
        b_hn = b_hh[2 * H:3 * H]

        weight_args += [
            _pad_gate_matrix(w_in_t, in_pad, Hp).astype(jnp.bfloat16),
            _pad_gate_bias(b_in_folded, Hp),
            _pad_gate_matrix(w_hh_t, Hp, Hp).astype(jnp.bfloat16),
            _pad_row(b_hn, Hp),
        ]

    # Inputs: time-major, batch padded, flattened -> (S*Bp, In), bf16 for MXU.
    x_tm = jnp.transpose(inp.astype(jnp.float32), (1, 0, 2))         # (S, B, In)
    x_tm = jnp.pad(x_tm, ((0, 0), (0, Bp - B), (0, 0)))
    x_flat = x_tm.reshape(S * Bp, In).astype(jnp.bfloat16)

    h0 = jnp.pad(hidden.astype(jnp.float32),
                 ((0, 0), (0, Bp - B), (0, Hp - H)))                 # (L, Bp, Hp)

    # VMEM budget: no grid -> nothing double-buffered, so no 2x fudge.
    n_bytes = (x_flat.size * 2
               + h0.size * 4
               + sum(int(w.size) * w.dtype.itemsize for w in weight_args)
               + (S * Bp * Hp + L * Bp * Hp) * 4                     # outputs (f32)
               + S * Bp * 3 * Hp * 4                                 # gi scratch f32
               + S * Bp * Hp * 2)                                    # act scratch bf16
    try:
        vmem_cap = int(pltpu.get_tpu_info().vmem_capacity_bytes)
    except Exception:
        vmem_cap = 64 << 20                                          # v7x lower bound
    vmem_limit = int(min(max(n_bytes + (4 << 20), 16 << 20), (vmem_cap * 9) // 10))

    kernel = _make_encoder_kernel(L, S, Bp, Hp, unroll_time=(S <= 16))

    out_flat, h_n_p = pl.pallas_call(
        kernel,
        out_shape=(
            jax.ShapeDtypeStruct((S * Bp, Hp), jnp.float32),
            jax.ShapeDtypeStruct((L, Bp, Hp), jnp.float32),
        ),
        scratch_shapes=[
            pltpu.VMEM((S * Bp, 3 * Hp), jnp.float32),   # gi for all timesteps
            pltpu.VMEM((S * Bp, Hp), jnp.bfloat16),      # inter-layer activations
        ],
        compiler_params=pltpu.CompilerParams(vmem_limit_bytes=vmem_limit),
    )(x_flat, h0, *weight_args)

    # Transpose kept outside the kernel (batch-major stores inside the kernel
    # would be sublane-sparse masked stores).
    output = out_flat.reshape(S, Bp, Hp)[:, :B, :H].transpose(1, 0, 2)   # (B, S, H)
    h_n = h_n_p[:, :B, :H]                                               # (L, B, H)
    return output, h_n


# ------------------------------ pure-JAX reference --------------------------- #
def encoder_rnn_reference(params, inp, hidden):
    B, S, In = inp.shape
    L, _, H = hidden.shape
    x = inp.astype(jnp.float32) @ params["linear_w"].T + params["linear_b"]
    h_n = []
    for l in range(L):
        w_ih, w_hh = params[f"w_ih_l{l}"], params[f"w_hh_l{l}"]
        b_ih, b_hh = params[f"b_ih_l{l}"], params[f"b_hh_l{l}"]
        h = hidden[l]
        outs = []
        for t in range(S):
            gi = x[:, t, :] @ w_ih.T + b_ih
            gh = h @ w_hh.T + b_hh
            r = jax.nn.sigmoid(gi[:, :H] + gh[:, :H])
            z = jax.nn.sigmoid(gi[:, H:2 * H] + gh[:, H:2 * H])
            n = jnp.tanh(gi[:, 2 * H:] + r * gh[:, 2 * H:])
            h = (1.0 - z) * n + z * h
            outs.append(h)
        x = jnp.stack(outs, axis=1)
        h_n.append(h)
    return x, jnp.stack(h_n, axis=0)


def init_params(key, input_size, hidden_size, num_layers):
    k = 1.0 / (hidden_size ** 0.5)
    keys = jax.random.split(key, 2 + 4 * num_layers)
    params = {
        "linear_w": jax.random.uniform(keys[0], (hidden_size, input_size),
                                       jnp.float32, -k, k),
        "linear_b": jax.random.uniform(keys[1], (hidden_size,),
                                       jnp.float32, -k, k),
    }
    for l in range(num_layers):
        base = 2 + 4 * l
        params[f"w_ih_l{l}"] = jax.random.uniform(
            keys[base], (3 * hidden_size, hidden_size), jnp.float32, -k, k)
        params[f"w_hh_l{l}"] = jax.random.uniform(
            keys[base + 1], (3 * hidden_size, hidden_size), jnp.float32, -k, k)
        params[f"b_ih_l{l}"] = jax.random.uniform(
            keys[base + 2], (3 * hidden_size,), jnp.float32, -k, k)
        params[f"b_hh_l{l}"] = jax.random.uniform(
            keys[base + 3], (3 * hidden_size,), jnp.float32, -k, k)
    return params


if __name__ == "__main__":
    batch, seq, input_size, hidden_size, num_layers = 2, 8, 16, 32, 2

    key = jax.random.PRNGKey(0)
    k_param, k_inp = jax.random.split(key)

    params = init_params(k_param, input_size, hidden_size, num_layers)
    inp = jax.random.normal(k_inp, (batch, seq, input_size), jnp.float32)
    hidden0 = jnp.zeros((num_layers, batch, hidden_size), jnp.float32)  # init_hidden

    output, h_n = encoder_rnn_forward(params, inp, hidden0)
    jax.block_until_ready((output, h_n))

    assert output.shape == (batch, seq, hidden_size)
    assert h_n.shape == (num_layers, batch, hidden_size)

    # Correctness vs f32 pure-JAX reference (bf16 weights -> loose tolerance).
    ref_out, ref_hn = encoder_rnn_reference(params, inp, hidden0)
    np.testing.assert_allclose(np.asarray(output), np.asarray(ref_out),
                               rtol=5e-2, atol=5e-2)
    np.testing.assert_allclose(np.asarray(h_n), np.asarray(ref_hn),
                               rtol=5e-2, atol=5e-2)

    print("KERNEL_OK")
</pallas_src>

<mosaic_0001>
module attributes {stable_mosaic.version = 11 : i64} {
  func.func @kernel(%arg0: memref<64x16xbf16, #tpu.memory_space<vmem>>, %arg1: memref<2x8x128xf32, #tpu.memory_space<vmem>>, %arg2: memref<16x384xbf16, #tpu.memory_space<vmem>>, %arg3: memref<1x384xf32, #tpu.memory_space<vmem>>, %arg4: memref<128x384xbf16, #tpu.memory_space<vmem>>, %arg5: memref<1x128xf32, #tpu.memory_space<vmem>>, %arg6: memref<128x384xbf16, #tpu.memory_space<vmem>>, %arg7: memref<1x384xf32, #tpu.memory_space<vmem>>, %arg8: memref<128x384xbf16, #tpu.memory_space<vmem>>, %arg9: memref<1x128xf32, #tpu.memory_space<vmem>>, %arg10: memref<64x128xf32, #tpu.memory_space<vmem>>, %arg11: memref<2x8x128xf32, #tpu.memory_space<vmem>>, %arg12: memref<64x384xf32, #tpu.memory_space<vmem>>, %arg13: memref<64x128xbf16, #tpu.memory_space<vmem>>) attributes {dimension_semantics = [], scalar_prefetch = 0 : i64, scratch_operands = 2 : i64, tpu.core_type = #tpu.core_type<tc>} {
    %c0 = arith.constant 0 : index
    %c0_0 = arith.constant 0 : index
    %0 = vector.load %arg0[%c0, %c0_0] : memref<64x16xbf16, #tpu.memory_space<vmem>>, vector<64x16xbf16>
    %c0_1 = arith.constant 0 : index
    %c0_2 = arith.constant 0 : index
    %1 = vector.load %arg2[%c0_1, %c0_2] : memref<16x384xbf16, #tpu.memory_space<vmem>>, vector<16x384xbf16>
    %cst = arith.constant dense<0.000000e+00> : vector<64x384xf32>
    %2 = tpu.matmul %0, %1, %cst {dimension_numbers = #tpu.dot_dimension_numbers<[1], [0], [0], [1], [0, 0, 1, 1], [], []>} : vector<64x16xbf16>, vector<16x384xbf16>, vector<64x384xf32> -> vector<64x384xf32>
    %c0_3 = arith.constant 0 : index
    %c0_4 = arith.constant 0 : index
    %3 = vector.load %arg3[%c0_3, %c0_4] : memref<1x384xf32, #tpu.memory_space<vmem>>, vector<1x384xf32>
    %4 = vector.broadcast %3 : vector<1x384xf32> to vector<64x384xf32>
    %5 = arith.addf %2, %4 : vector<64x384xf32>
    %c0_5 = arith.constant 0 : index
    %c0_6 = arith.constant 0 : index
    %6 = vector.load %arg12[%c0_5, %c0_6] : memref<64x384xf32, #tpu.memory_space<vmem>>, vector<64x384xf32>
    tpu.vector_store %arg12[%c0_5, %c0_6], %5 {strides = array<i32>} : memref<64x384xf32, #tpu.memory_space<vmem>>, vector<64x384xf32>,
    %c0_7 = arith.constant 0 : index
    %c0_8 = arith.constant 0 : index
    %7 = vector.load %arg5[%c0_7, %c0_8] : memref<1x128xf32, #tpu.memory_space<vmem>>, vector<1x128xf32>
    %8 = vector.shape_cast %7 : vector<1x128xf32> to vector<1x128xf32>
    %9 = vector.broadcast %8 : vector<1x128xf32> to vector<8x128xf32>
    %c0_9 = arith.constant 0 : index
    %c0_10 = arith.constant 0 : index
    %c0_11 = arith.constant 0 : index
    %10 = vector.load %arg1[%c0_9, %c0_10, %c0_11] : memref<2x8x128xf32, #tpu.memory_space<vmem>>, vector<1x8x128xf32>
    %11 = vector.shape_cast %10 : vector<1x8x128xf32> to vector<8x128xf32>
    %c0_12 = arith.constant 0 : index
    %c0_13 = arith.constant 0 : index
    %12 = vector.load %arg12[%c0_12, %c0_13] : memref<64x384xf32, #tpu.memory_space<vmem>>, vector<8x384xf32>
    %13 = arith.truncf %11 : vector<8x128xf32> to vector<8x128xbf16>
    %c0_14 = arith.constant 0 : index
    %c0_15 = arith.constant 0 : index
    %14 = vector.load %arg4[%c0_14, %c0_15] : memref<128x384xbf16, #tpu.memory_space<vmem>>, vector<128x384xbf16>
    %cst_16 = arith.constant dense<0.000000e+00> : vector<8x384xf32>
    %15 = tpu.matmul %13, %14, %cst_16 {dimension_numbers = #tpu.dot_dimension_numbers<[1], [0], [0], [1], [0, 0, 1, 1], [], []>} : vector<8x128xbf16>, vector<128x384xbf16>, vector<8x384xf32> -> vector<8x384xf32>
    %16 = vector.extract_strided_slice %12 {offsets = [0, 0], sizes = [8, 128], strides = [1, 1]} : vector<8x384xf32> to vector<8x128xf32>
    %17 = vector.extract_strided_slice %15 {offsets = [0, 0], sizes = [8, 128], strides = [1, 1]} : vector<8x384xf32> to vector<8x128xf32>
    %18 = arith.addf %16, %17 : vector<8x128xf32>
    %19 = arith.negf %18 : vector<8x128xf32>
    %20 = math.exp %19 : vector<8x128xf32>
    %cst_17 = arith.constant 1.000000e+00 : f32
    %21 = vector.broadcast %cst_17 : f32 to vector<8x128xf32>
    %22 = arith.addf %21, %20 : vector<8x128xf32>
    %23 = arith.divf %21, %22 : vector<8x128xf32>
    %24 = vector.extract_strided_slice %12 {offsets = [0, 128], sizes = [8, 128], strides = [1, 1]} : vector<8x384xf32> to vector<8x128xf32>
    %25 = vector.extract_strided_slice %15 {offsets = [0, 128], sizes = [8, 128], strides = [1, 1]} : vector<8x384xf32> to vector<8x128xf32>
    %26 = arith.addf %24, %25 : vector<8x128xf32>
    %27 = arith.negf %26 : vector<8x128xf32>
    %28 = math.exp %27 : vector<8x128xf32>
    %cst_18 = arith.constant 1.000000e+00 : f32
    %29 = vector.broadcast %cst_18 : f32 to vector<8x128xf32>
    %30 = arith.addf %29, %28 : vector<8x128xf32>
    %31 = arith.divf %29, %30 : vector<8x128xf32>
    %32 = vector.extract_strided_slice %12 {offsets = [0, 256], sizes = [8, 128], strides = [1, 1]} : vector<8x384xf32> to vector<8x128xf32>
    %33 = vector.extract_strided_slice %15 {offsets = [0, 256], sizes = [8, 128], strides = [1, 1]} : vector<8x384xf32> to vector<8x128xf32>
    %34 = arith.addf %33, %9 : vector<8x128xf32>
    %35 = arith.mulf %23, %34 : vector<8x128xf32>
    %36 = arith.addf %32, %35 : vector<8x128xf32>
    %37 = math.tanh %36 : vector<8x128xf32>
    %38 = arith.subf %11, %37 : vector<8x128xf32>
    %39 = arith.mulf %31, %38 : vector<8x128xf32>
    %40 = arith.addf %37, %39 : vector<8x128xf32>
    %41 = arith.truncf %40 : vector<8x128xf32> to vector<8x128xbf16>
    %c0_19 = arith.constant 0 : index
    %c0_20 = arith.constant 0 : index
    %42 = vector.load %arg13[%c0_19, %c0_20] : memref<64x128xbf16, #tpu.memory_space<vmem>>, vector<8x128xbf16>
    tpu.vector_store %arg13[%c0_19, %c0_20], %41 {strides = array<i32>} : memref<64x128xbf16, #tpu.memory_space<vmem>>, vector<8x128xbf16>,
    %c8 = arith.constant 8 : index
    %c0_21 = arith.constant 0 : index
    %43 = vector.load %arg12[%c8, %c0_21] : memref<64x384xf32, #tpu.memory_space<vmem>>, vector<8x384xf32>
    %44 = arith.truncf %40 : vector<8x128xf32> to vector<8x128xbf16>
    %c0_22 = arith.constant 0 : index
    %c0_23 = arith.constant 0 : index
    %45 = vector.load %arg4[%c0_22, %c0_23] : memref<128x384xbf16, #tpu.memory_space<vmem>>, vector<128x384xbf16>
    %cst_24 = arith.constant dense<0.000000e+00> : vector<8x384xf32>
    %46 = tpu.matmul %44, %45, %cst_24 {dimension_numbers = #tpu.dot_dimension_numbers<[1], [0], [0], [1], [0, 0, 1, 1], [], []>} : vector<8x128xbf16>, vector<128x384xbf16>, vector<8x384xf32> -> vector<8x384xf32>
    %47 = vector.extract_strided_slice %43 {offsets = [0, 0], sizes = [8, 128], strides = [1, 1]} : vector<8x384xf32> to vector<8x128xf32>
    %48 = vector.extract_strided_slice %46 {offsets = [0, 0], sizes = [8, 128], strides = [1, 1]} : vector<8x384xf32> to vector<8x128xf32>
    %49 = arith.addf %47, %48 : vector<8x128xf32>
    %50 = arith.negf %49 : vector<8x128xf32>
    %51 = math.exp %50 : vector<8x128xf32>
    %cst_25 = arith.constant 1.000000e+00 : f32
    %52 = vector.broadcast %cst_25 : f32 to vector<8x128xf32>
    %53 = arith.addf %52, %51 : vector<8x128xf32>
    %54 = arith.divf %52, %53 : vector<8x128xf32>
    %55 = vector.extract_strided_slice %43 {offsets = [0, 128], sizes = [8, 128], strides = [1, 1]} : vector<8x384xf32> to vector<8x128xf32>
    %56 = vector.extract_strided_slice %46 {offsets = [0, 128], sizes = [8, 128], strides = [1, 1]} : vector<8x384xf32> to vector<8x128xf32>
    %57 = arith.addf %55, %56 : vector<8x128xf32>
    %58 = arith.negf %57 : vector<8x128xf32>
    %59 = math.exp %58 : vector<8x128xf32>
    %cst_26 = arith.constant 1.000000e+00 : f32
    %60 = vector.broadcast %cst_26 : f32 to vector<8x128xf32>
    %61 = arith.addf %60, %59 : vector<8x128xf32>
    %62 = arith.divf %60, %61 : vector<8x128xf32>
    %63 = vector.extract_strided_slice %43 {offsets = [0, 256], sizes = [8, 128], strides = [1, 1]} : vector<8x384xf32> to vector<8x128xf32>
    %64 = vector.extract_strided_slice %46 {offsets = [0, 256], sizes = [8, 128], strides = [1, 1]} : vector<8x384xf32> to vector<8x128xf32>
    %65 = arith.addf %64, %9 : vector<8x128xf32>
    %66 = arith.mulf %54, %65 : vector<8x128xf32>
    %67 = arith.addf %63, %66 : vector<8x128xf32>
    %68 = math.tanh %67 : vector<8x128xf32>
    %69 = arith.subf %40, %68 : vector<8x128xf32>
    %70 = arith.mulf %62, %69 : vector<8x128xf32>
    %71 = arith.addf %68, %70 : vector<8x128xf32>
    %72 = arith.truncf %71 : vector<8x128xf32> to vector<8x128xbf16>
    %c8_27 = arith.constant 8 : index
    %c0_28 = arith.constant 0 : index
    %73 = vector.load %arg13[%c8_27, %c0_28] : memref<64x128xbf16, #tpu.memory_space<vmem>>, vector<8x128xbf16>
    tpu.vector_store %arg13[%c8_27, %c0_28], %72 {strides = array<i32>} : memref<64x128xbf16, #tpu.memory_space<vmem>>, vector<8x128xbf16>,
    %c16 = arith.constant 16 : index
    %c0_29 = arith.constant 0 : index
    %74 = vector.load %arg12[%c16, %c0_29] : memref<64x384xf32, #tpu.memory_space<vmem>>, vector<8x384xf32>
    %75 = arith.truncf %71 : vector<8x128xf32> to vector<8x128xbf16>
    %c0_30 = arith.constant 0 : index
    %c0_31 = arith.constant 0 : index
    %76 = vector.load %arg4[%c0_30, %c0_31] : memref<128x384xbf16, #tpu.memory_space<vmem>>, vector<128x384xbf16>
    %cst_32 = arith.constant dense<0.000000e+00> : vector<8x384xf32>
    %77 = tpu.matmul %75, %76, %cst_32 {dimension_numbers = #tpu.dot_dimension_numbers<[1], [0], [0], [1], [0, 0, 1, 1], [], []>} : vector<8x128xbf16>, vector<128x384xbf16>, vector<8x384xf32> -> vector<8x384xf32>
    %78 = vector.extract_strided_slice %74 {offsets = [0, 0], sizes = [8, 128], strides = [1, 1]} : vector<8x384xf32> to vector<8x128xf32>
    %79 = vector.extract_strided_slice %77 {offsets = [0, 0], sizes = [8, 128], strides = [1, 1]} : vector<8x384xf32> to vector<8x128xf32>
    %80 = arith.addf %78, %79 : vector<8x128xf32>
    %81 = arith.negf %80 : vector<8x128xf32>
    %82 = math.exp %81 : vector<8x128xf32>
    %cst_33 = arith.constant 1.000000e+00 : f32
    %83 = vector.broadcast %cst_33 : f32 to vector<8x128xf32>
    %84 = arith.addf %83, %82 : vector<8x128xf32>
    %85 = arith.divf %83, %84 : vector<8x128xf32>
    %86 = vector.extract_strided_slice %74 {offsets = [0, 128], sizes = [8, 128], strides = [1, 1]} : vector<8x384xf32> to vector<8x128xf32>
    %87 = vector.extract_strided_slice %77 {offsets = [0, 128], sizes = [8, 128], strides = [1, 1]} : vector<8x384xf32> to vector<8x128xf32>
    %88 = arith.addf %86, %87 : vector<8x128xf32>
    %89 = arith.negf %88 : vector<8x128xf32>
    %90 = math.exp %89 : vector<8x128xf32>
    %cst_34 = arith.constant 1.000000e+00 : f32
    %91 = vector.broadcast %cst_34 : f32 to vector<8x128xf32>
    %92 = arith.addf %91, %90 : vector<8x128xf32>
    %93 = arith.divf %91, %92 : vector<8x128xf32>
    %94 = vector.extract_strided_slice %74 {offsets = [0, 256], sizes = [8, 128], strides = [1, 1]} : vector<8x384xf32> to vector<8x128xf32>
    %95 = vector.extract_strided_slice %77 {offsets = [0, 256], sizes = [8, 128], strides = [1, 1]} : vector<8x384xf32> to vector<8x128xf32>
    %96 = arith.addf %95, %9 : vector<8x128xf32>
    %97 = arith.mulf %85, %96 : vector<8x128xf32>
    %98 = arith.addf %94, %97 : vector<8x128xf32>
    %99 = math.tanh %98 : vector<8x128xf32>
    %100 = arith.subf %71, %99 : vector<8x128xf32>
    %101 = arith.mulf %93, %100 : vector<8x128xf32>
    %102 = arith.addf %99, %101 : vector<8x128xf32>
    %103 = arith.truncf %102 : vector<8x128xf32> to vector<8x128xbf16>
    %c16_35 = arith.constant 16 : index
    %c0_36 = arith.constant 0 : index
    %104 = vector.load %arg13[%c16_35, %c0_36] : memref<64x128xbf16, #tpu.memory_space<vmem>>, vector<8x128xbf16>
    tpu.vector_store %arg13[%c16_35, %c0_36], %103 {strides = array<i32>} : memref<64x128xbf16, #tpu.memory_space<vmem>>, vector<8x128xbf16>,
    %c24 = arith.constant 24 : index
    %c0_37 = arith.constant 0 : index
    %105 = vector.load %arg12[%c24, %c0_37] : memref<64x384xf32, #tpu.memory_space<vmem>>, vector<8x384xf32>
    %106 = arith.truncf %102 : vector<8x128xf32> to vector<8x128xbf16>
    %c0_38 = arith.constant 0 : index
    %c0_39 = arith.constant 0 : index
    %107 = vector.load %arg4[%c0_38, %c0_39] : memref<128x384xbf16, #tpu.memory_space<vmem>>, vector<128x384xbf16>
    %cst_40 = arith.constant dense<0.000000e+00> : vector<8x384xf32>
    %108 = tpu.matmul %106, %107, %cst_40 {dimension_numbers = #tpu.dot_dimension_numbers<[1], [0], [0], [1], [0, 0, 1, 1], [], []>} : vector<8x128xbf16>, vector<128x384xbf16>, vector<8x384xf32> -> vector<8x384xf32>
    %109 = vector.extract_strided_slice %105 {offsets = [0, 0], sizes = [8, 128], strides = [1, 1]} : vector<8x384xf32> to vector<8x128xf32>
    %110 = vector.extract_strided_slice %108 {offsets = [0, 0], sizes = [8, 128], strides = [1, 1]} : vector<8x384xf32> to vector<8x128xf32>
    %111 = arith.addf %109, %110 : vector<8x128xf32>
    %112 = arith.negf %111 : vector<8x128xf32>
    %113 = math.exp %112 : vector<8x128xf32>
    %cst_41 = arith.constant 1.000000e+00 : f32
    %114 = vector.broadcast %cst_41 : f32 to vector<8x128xf32>
    %115 = arith.addf %114, %113 : vector<8x128xf32>
    %116 = arith.divf %114, %115 : vector<8x128xf32>
    %117 = vector.extract_strided_slice %105 {offsets = [0, 128], sizes = [8, 128], strides = [1, 1]} : vector<8x384xf32> to vector<8x128xf32>
    %118 = vector.extract_strided_slice %108 {offsets = [0, 128], sizes = [8, 128], strides = [1, 1]} : vector<8x384xf32> to vector<8x128xf32>
    %119 = arith.addf %117, %118 : vector<8x128xf32>
    %120 = arith.negf %119 : vector<8x128xf32>
    %121 = math.exp %120 : vector<8x128xf32>
    %cst_42 = arith.constant 1.000000e+00 : f32
    %122 = vector.broadcast %cst_42 : f32 to vector<8x128xf32>
    %123 = arith.addf %122, %121 : vector<8x128xf32>
    %124 = arith.divf %122, %123 : vector<8x128xf32>
    %125 = vector.extract_strided_slice %105 {offsets = [0, 256], sizes = [8, 128], strides = [1, 1]} : vector<8x384xf32> to vector<8x128xf32>
    %126 = vector.extract_strided_slice %108 {offsets = [0, 256], sizes = [8, 128], strides = [1, 1]} : vector<8x384xf32> to vector<8x128xf32>
    %127 = arith.addf %126, %9 : vector<8x128xf32>
    %128 = arith.mulf %116, %127 : vector<8x128xf32>
    %129 = arith.addf %125, %128 : vector<8x128xf32>
    %130 = math.tanh %129 : vector<8x128xf32>
    %131 = arith.subf %102, %130 : vector<8x128xf32>
    %132 = arith.mulf %124, %131 : vector<8x128xf32>
    %133 = arith.addf %130, %132 : vector<8x128xf32>
    %134 = arith.truncf %133 : vector<8x128xf32> to vector<8x128xbf16>
    %c24_43 = arith.constant 24 : index
    %c0_44 = arith.constant 0 : index
    %135 = vector.load %arg13[%c24_43, %c0_44] : memref<64x128xbf16, #tpu.memory_space<vmem>>, vector<8x128xbf16>
    tpu.vector_store %arg13[%c24_43, %c0_44], %134 {strides = array<i32>} : memref<64x128xbf16, #tpu.memory_space<vmem>>, vector<8x128xbf16>,
    %c32 = arith.constant 32 : index
    %c0_45 = arith.constant 0 : index
    %136 = vector.load %arg12[%c32, %c0_45] : memref<64x384xf32, #tpu.memory_space<vmem>>, vector<8x384xf32>
    %137 = arith.truncf %133 : vector<8x128xf32> to vector<8x128xbf16>
    %c0_46 = arith.constant 0 : index
    %c0_47 = arith.constant 0 : index
    %138 = vector.load %arg4[%c0_46, %c0_47] : memref<128x384xbf16, #tpu.memory_space<vmem>>, vector<128x384xbf16>
    %cst_48 = arith.constant dense<0.000000e+00> : vector<8x384xf32>
    %139 = tpu.matmul %137, %138, %cst_48 {dimension_numbers = #tpu.dot_dimension_numbers<[1], [0], [0], [1], [0, 0, 1, 1], [], []>} : vector<8x128xbf16>, vector<128x384xbf16>, vector<8x384xf32> -> vector<8x384xf32>
    %140 = vector.extract_strided_slice %136 {offsets = [0, 0], sizes = [8, 128], strides = [1, 1]} : vector<8x384xf32> to vector<8x128xf32>
    %141 = vector.extract_strided_slice %139 {offsets = [0, 0], sizes = [8, 128], strides = [1, 1]} : vector<8x384xf32> to vector<8x128xf32>
    %142 = arith.addf %140, %141 : vector<8x128xf32>
    %143 = arith.negf %142 : vector<8x128xf32>
    %144 = math.exp %143 : vector<8x128xf32>
    %cst_49 = arith.constant 1.000000e+00 : f32
    %145 = vector.broadcast %cst_49 : f32 to vector<8x128xf32>
    %146 = arith.addf %145, %144 : vector<8x128xf32>
    %147 = arith.divf %145, %146 : vector<8x128xf32>
    %148 = vector.extract_strided_slice %136 {offsets = [0, 128], sizes = [8, 128], strides = [1, 1]} : vector<8x384xf32> to vector<8x128xf32>
    %149 = vector.extract_strided_slice %139 {offsets = [0, 128], sizes = [8, 128], strides = [1, 1]} : vector<8x384xf32> to vector<8x128xf32>
    %150 = arith.addf %148, %149 : vector<8x128xf32>
    %151 = arith.negf %150 : vector<8x128xf32>
    %152 = math.exp %151 : vector<8x128xf32>
    %cst_50 = arith.constant 1.000000e+00 : f32
    %153 = vector.broadcast %cst_50 : f32 to vector<8x128xf32>
    %154 = arith.addf %153, %152 : vector<8x128xf32>
    %155 = arith.divf %153, %154 : vector<8x128xf32>
    %156 = vector.extract_strided_slice %136 {offsets = [0, 256], sizes = [8, 128], strides = [1, 1]} : vector<8x384xf32> to vector<8x128xf32>
    %157 = vector.extract_strided_slice %139 {offsets = [0, 256], sizes = [8, 128], strides = [1, 1]} : vector<8x384xf32> to vector<8x128xf32>
    %158 = arith.addf %157, %9 : vector<8x128xf32>
    %159 = arith.mulf %147, %158 : vector<8x128xf32>
    %160 = arith.addf %156, %159 : vector<8x128xf32>
    %161 = math.tanh %160 : vector<8x128xf32>
    %162 = arith.subf %133, %161 : vector<8x128xf32>
    %163 = arith.mulf %155, %162 : vector<8x128xf32>
    %164 = arith.addf %161, %163 : vector<8x128xf32>
    %165 = arith.truncf %164 : vector<8x128xf32> to vector<8x128xbf16>
    %c32_51 = arith.constant 32 : index
    %c0_52 = arith.constant 0 : index
    %166 = vector.load %arg13[%c32_51, %c0_52] : memref<64x128xbf16, #tpu.memory_space<vmem>>, vector<8x128xbf16>
    tpu.vector_store %arg13[%c32_51, %c0_52], %165 {strides = array<i32>} : memref<64x128xbf16, #tpu.memory_space<vmem>>, vector<8x128xbf16>,
    %c40 = arith.constant 40 : index
    %c0_53 = arith.constant 0 : index
    %167 = vector.load %arg12[%c40, %c0_53] : memref<64x384xf32, #tpu.memory_space<vmem>>, vector<8x384xf32>
    %168 = arith.truncf %164 : vector<8x128xf32> to vector<8x128xbf16>
    %c0_54 = arith.constant 0 : index
    %c0_55 = arith.constant 0 : index
    %169 = vector.load %arg4[%c0_54, %c0_55] : memref<128x384xbf16, #tpu.memory_space<vmem>>, vector<128x384xbf16>
    %cst_56 = arith.constant dense<0.000000e+00> : vector<8x384xf32>
    %170 = tpu.matmul %168, %169, %cst_56 {dimension_numbers = #tpu.dot_dimension_numbers<[1], [0], [0], [1], [0, 0, 1, 1], [], []>} : vector<8x128xbf16>, vector<128x384xbf16>, vector<8x384xf32> -> vector<8x384xf32>
    %171 = vector.extract_strided_slice %167 {offsets = [0, 0], sizes = [8, 128], strides = [1, 1]} : vector<8x384xf32> to vector<8x128xf32>
    %172 = vector.extract_strided_slice %170 {offsets = [0, 0], sizes = [8, 128], strides = [1, 1]} : vector<8x384xf32> to vector<8x128xf32>
    %173 = arith.addf %171, %172 : vector<8x128xf32>
    %174 = arith.negf %173 : vector<8x128xf32>
    %175 = math.exp %174 : vector<8x128xf32>
    %cst_57 = arith.constant 1.000000e+00 : f32
    %176 = vector.broadcast %cst_57 : f32 to vector<8x128xf32>
    %177 = arith.addf %176, %175 : vector<8x128xf32>
    %178 = arith.divf %176, %177 : vector<8x128xf32>
    %179 = vector.extract_strided_slice %167 {offsets = [0, 128], sizes = [8, 128], strides = [1, 1]} : vector<8x384xf32> to vector<8x128xf32>
    %180 = vector.extract_strided_slice %170 {offsets = [0, 128], sizes = [8, 128], strides = [1, 1]} : vector<8x384xf32> to vector<8x128xf32>
    %181 = arith.addf %179, %180 : vector<8x128xf32>
    %182 = arith.negf %181 : vector<8x128xf32>
    %183 = math.exp %182 : vector<8x128xf32>
    %cst_58 = arith.constant 1.000000e+00 : f32
    %184 = vector.broadcast %cst_58 : f32 to vector<8x128xf32>
    %185 = arith.addf %184, %183 : vector<8x128xf32>
    %186 = arith.divf %184, %185 : vector<8x128xf32>
    %187 = vector.extract_strided_slice %167 {offsets = [0, 256], sizes = [8, 128], strides = [1, 1]} : vector<8x384xf32> to vector<8x128xf32>
    %188 = vector.extract_strided_slice %170 {offsets = [0, 256], sizes = [8, 128], strides = [1, 1]} : vector<8x384xf32> to vector<8x128xf32>
    %189 = arith.addf %188, %9 : vector<8x128xf32>
    %190 = arith.mulf %178, %189 : vector<8x128xf32>
    %191 = arith.addf %187, %190 : vector<8x128xf32>
    %192 = math.tanh %191 : vector<8x128xf32>
    %193 = arith.subf %164, %192 : vector<8x128xf32>
    %194 = arith.mulf %186, %193 : vector<8x128xf32>
    %195 = arith.addf %192, %194 : vector<8x128xf32>
    %196 = arith.truncf %195 : vector<8x128xf32> to vector<8x128xbf16>
    %c40_59 = arith.constant 40 : index
    %c0_60 = arith.constant 0 : index
    %197 = vector.load %arg13[%c40_59, %c0_60] : memref<64x128xbf16, #tpu.memory_space<vmem>>, vector<8x128xbf16>
    tpu.vector_store %arg13[%c40_59, %c0_60], %196 {strides = array<i32>} : memref<64x128xbf16, #tpu.memory_space<vmem>>, vector<8x128xbf16>,
    %c48 = arith.constant 48 : index
    %c0_61 = arith.constant 0 : index
    %198 = vector.load %arg12[%c48, %c0_61] : memref<64x384xf32, #tpu.memory_space<vmem>>, vector<8x384xf32>
    %199 = arith.truncf %195 : vector<8x128xf32> to vector<8x128xbf16>
    %c0_62 = arith.constant 0 : index
    %c0_63 = arith.constant 0 : index
    %200 = vector.load %arg4[%c0_62, %c0_63] : memref<128x384xbf16, #tpu.memory_space<vmem>>, vector<128x384xbf16>
    %cst_64 = arith.constant dense<0.000000e+00> : vector<8x384xf32>
    %201 = tpu.matmul %199, %200, %cst_64 {dimension_numbers = #tpu.dot_dimension_numbers<[1], [0], [0], [1], [0, 0, 1, 1], [], []>} : vector<8x128xbf16>, vector<128x384xbf16>, vector<8x384xf32> -> vector<8x384xf32>
    %202 = vector.extract_strided_slice %198 {offsets = [0, 0], sizes = [8, 128], strides = [1, 1]} : vector<8x384xf32> to vector<8x128xf32>
    %203 = vector.extract_strided_slice %201 {offsets = [0, 0], sizes = [8, 128], strides = [1, 1]} : vector<8x384xf32> to vector<8x128xf32>
    %204 = arith.addf %202, %203 : vector<8x128xf32>
    %205 = arith.negf %204 : vector<8x128xf32>
    %206 = math.exp %205 : vector<8x128xf32>
    %cst_65 = arith.constant 1.000000e+00 : f32
    %207 = vector.broadcast %cst_65 : f32 to vector<8x128xf32>
    %208 = arith.addf %207, %206 : vector<8x128xf32>
    %209 = arith.divf %207, %208 : vector<8x128xf32>
    %210 = vector.extract_strided_slice %198 {offsets = [0, 128], sizes = [8, 128], strides = [1, 1]} : vector<8x384xf32> to vector<8x128xf32>
    %211 = vector.extract_strided_slice %201 {offsets = [0, 128], sizes = [8, 128], strides = [1, 1]} : vector<8x384xf32> to vector<8x128xf32>
    %212 = arith.addf %210, %211 : vector<8x128xf32>
    %213 = arith.negf %212 : vector<8x128xf32>
    %214 = math.exp %213 : vector<8x128xf32>
    %cst_66 = arith.constant 1.000000e+00 : f32
    %215 = vector.broadcast %cst_66 : f32 to vector<8x128xf32>
    %216 = arith.addf %215, %214 : vector<8x128xf32>
    %217 = arith.divf %215, %216 : vector<8x128xf32>
    %218 = vector.extract_strided_slice %198 {offsets = [0, 256], sizes = [8, 128], strides = [1, 1]} : vector<8x384xf32> to vector<8x128xf32>
    %219 = vector.extract_strided_slice %201 {offsets = [0, 256], sizes = [8, 128], strides = [1, 1]} : vector<8x384xf32> to vector<8x128xf32>
    %220 = arith.addf %219, %9 : vector<8x128xf32>
    %221 = arith.mulf %209, %220 : vector<8x128xf32>
    %222 = arith.addf %218, %221 : vector<8x128xf32>
    %223 = math.tanh %222 : vector<8x128xf32>
    %224 = arith.subf %195, %223 : vector<8x128xf32>
    %225 = arith.mulf %217, %224 : vector<8x128xf32>
    %226 = arith.addf %223, %225 : vector<8x128xf32>
    %227 = arith.truncf %226 : vector<8x128xf32> to vector<8x128xbf16>
    %c48_67 = arith.constant 48 : index
    %c0_68 = arith.constant 0 : index
    %228 = vector.load %arg13[%c48_67, %c0_68] : memref<64x128xbf16, #tpu.memory_space<vmem>>, vector<8x128xbf16>
    tpu.vector_store %arg13[%c48_67, %c0_68], %227 {strides = array<i32>} : memref<64x128xbf16, #tpu.memory_space<vmem>>, vector<8x128xbf16>,
    %c56 = arith.constant 56 : index
    %c0_69 = arith.constant 0 : index
    %229 = vector.load %arg12[%c56, %c0_69] : memref<64x384xf32, #tpu.memory_space<vmem>>, vector<8x384xf32>
    %230 = arith.truncf %226 : vector<8x128xf32> to vector<8x128xbf16>
    %c0_70 = arith.constant 0 : index
    %c0_71 = arith.constant 0 : index
    %231 = vector.load %arg4[%c0_70, %c0_71] : memref<128x384xbf16, #tpu.memory_space<vmem>>, vector<128x384xbf16>
    %cst_72 = arith.constant dense<0.000000e+00> : vector<8x384xf32>
    %232 = tpu.matmul %230, %231, %cst_72 {dimension_numbers = #tpu.dot_dimension_numbers<[1], [0], [0], [1], [0, 0, 1, 1], [], []>} : vector<8x128xbf16>, vector<128x384xbf16>, vector<8x384xf32> -> vector<8x384xf32>
    %233 = vector.extract_strided_slice %229 {offsets = [0, 0], sizes = [8, 128], strides = [1, 1]} : vector<8x384xf32> to vector<8x128xf32>
    %234 = vector.extract_strided_slice %232 {offsets = [0, 0], sizes = [8, 128], strides = [1, 1]} : vector<8x384xf32> to vector<8x128xf32>
    %235 = arith.addf %233, %234 : vector<8x128xf32>
    %236 = arith.negf %235 : vector<8x128xf32>
    %237 = math.exp %236 : vector<8x128xf32>
    %cst_73 = arith.constant 1.000000e+00 : f32
    %238 = vector.broadcast %cst_73 : f32 to vector<8x128xf32>
    %239 = arith.addf %238, %237 : vector<8x128xf32>
    %240 = arith.divf %238, %239 : vector<8x128xf32>
    %241 = vector.extract_strided_slice %229 {offsets = [0, 128], sizes = [8, 128], strides = [1, 1]} : vector<8x384xf32> to vector<8x128xf32>
    %242 = vector.extract_strided_slice %232 {offsets = [0, 128], sizes = [8, 128], strides = [1, 1]} : vector<8x384xf32> to vector<8x128xf32>
    %243 = arith.addf %241, %242 : vector<8x128xf32>
    %244 = arith.negf %243 : vector<8x128xf32>
    %245 = math.exp %244 : vector<8x128xf32>
    %cst_74 = arith.constant 1.000000e+00 : f32
    %246 = vector.broadcast %cst_74 : f32 to vector<8x128xf32>
    %247 = arith.addf %246, %245 : vector<8x128xf32>
    %248 = arith.divf %246, %247 : vector<8x128xf32>
    %249 = vector.extract_strided_slice %229 {offsets = [0, 256], sizes = [8, 128], strides = [1, 1]} : vector<8x384xf32> to vector<8x128xf32>
    %250 = vector.extract_strided_slice %232 {offsets = [0, 256], sizes = [8, 128], strides = [1, 1]} : vector<8x384xf32> to vector<8x128xf32>
    %251 = arith.addf %250, %9 : vector<8x128xf32>
    %252 = arith.mulf %240, %251 : vector<8x128xf32>
    %253 = arith.addf %249, %252 : vector<8x128xf32>
    %254 = math.tanh %253 : vector<8x128xf32>
    %255 = arith.subf %226, %254 : vector<8x128xf32>
    %256 = arith.mulf %248, %255 : vector<8x128xf32>
    %257 = arith.addf %254, %256 : vector<8x128xf32>
    %258 = arith.truncf %257 : vector<8x128xf32> to vector<8x128xbf16>
    %c56_75 = arith.constant 56 : index
    %c0_76 = arith.constant 0 : index
    %259 = vector.load %arg13[%c56_75, %c0_76] : memref<64x128xbf16, #tpu.memory_space<vmem>>, vector<8x128xbf16>
    tpu.vector_store %arg13[%c56_75, %c0_76], %258 {strides = array<i32>} : memref<64x128xbf16, #tpu.memory_space<vmem>>, vector<8x128xbf16>,
    %c0_77 = arith.constant 0 : index
    %c0_78 = arith.constant 0 : index
    %c0_79 = arith.constant 0 : index
    %260 = vector.load %arg11[%c0_77, %c0_78, %c0_79] : memref<2x8x128xf32, #tpu.memory_space<vmem>>, vector<1x8x128xf32>
    %261 = vector.shape_cast %260 : vector<1x8x128xf32> to vector<8x128xf32>
    %262 = vector.shape_cast %257 : vector<8x128xf32> to vector<1x8x128xf32>
    tpu.vector_store %arg11[%c0_77, %c0_78, %c0_79], %262 {strides = array<i32>} : memref<2x8x128xf32, #tpu.memory_space<vmem>>, vector<1x8x128xf32>,
    %c0_80 = arith.constant 0 : index
    %c0_81 = arith.constant 0 : index
    %263 = vector.load %arg13[%c0_80, %c0_81] : memref<64x128xbf16, #tpu.memory_space<vmem>>, vector<64x128xbf16>
    %c0_82 = arith.constant 0 : index
    %c0_83 = arith.constant 0 : index
    %264 = vector.load %arg6[%c0_82, %c0_83] : memref<128x384xbf16, #tpu.memory_space<vmem>>, vector<128x384xbf16>
    %cst_84 = arith.constant dense<0.000000e+00> : vector<64x384xf32>
    %265 = tpu.matmul %263, %264, %cst_84 {dimension_numbers = #tpu.dot_dimension_numbers<[1], [0], [0], [1], [0, 0, 1, 1], [], []>} : vector<64x128xbf16>, vector<128x384xbf16>, vector<64x384xf32> -> vector<64x384xf32>
    %c0_85 = arith.constant 0 : index
    %c0_86 = arith.constant 0 : index
    %266 = vector.load %arg7[%c0_85, %c0_86] : memref<1x384xf32, #tpu.memory_space<vmem>>, vector<1x384xf32>
    %267 = vector.broadcast %266 : vector<1x384xf32> to vector<64x384xf32>
    %268 = arith.addf %265, %267 : vector<64x384xf32>
    %c0_87 = arith.constant 0 : index
    %c0_88 = arith.constant 0 : index
    %269 = vector.load %arg12[%c0_87, %c0_88] : memref<64x384xf32, #tpu.memory_space<vmem>>, vector<64x384xf32>
    tpu.vector_store %arg12[%c0_87, %c0_88], %268 {strides = array<i32>} : memref<64x384xf32, #tpu.memory_space<vmem>>, vector<64x384xf32>,
    %c0_89 = arith.constant 0 : index
    %c0_90 = arith.constant 0 : index
    %270 = vector.load %arg9[%c0_89, %c0_90] : memref<1x128xf32, #tpu.memory_space<vmem>>, vector<1x128xf32>
    %271 = vector.shape_cast %270 : vector<1x128xf32> to vector<1x128xf32>
    %272 = vector.broadcast %271 : vector<1x128xf32> to vector<8x128xf32>
    %c1 = arith.constant 1 : index
    %c0_91 = arith.constant 0 : index
    %c0_92 = arith.constant 0 : index
    %273 = vector.load %arg1[%c1, %c0_91, %c0_92] : memref<2x8x128xf32, #tpu.memory_space<vmem>>, vector<1x8x128xf32>
    %274 = vector.shape_cast %273 : vector<1x8x128xf32> to vector<8x128xf32>
    %c0_93 = arith.constant 0 : index
    %c0_94 = arith.constant 0 : index
    %275 = vector.load %arg12[%c0_93, %c0_94] : memref<64x384xf32, #tpu.memory_space<vmem>>, vector<8x384xf32>
    %276 = arith.truncf %274 : vector<8x128xf32> to vector<8x128xbf16>
    %c0_95 = arith.constant 0 : index
    %c0_96 = arith.constant 0 : index
    %277 = vector.load %arg8[%c0_95, %c0_96] : memref<128x384xbf16, #tpu.memory_space<vmem>>, vector<128x384xbf16>
    %cst_97 = arith.constant dense<0.000000e+00> : vector<8x384xf32>
    %278 = tpu.matmul %276, %277, %cst_97 {dimension_numbers = #tpu.dot_dimension_numbers<[1], [0], [0], [1], [0, 0, 1, 1], [], []>} : vector<8x128xbf16>, vector<128x384xbf16>, vector<8x384xf32> -> vector<8x384xf32>
    %279 = vector.extract_strided_slice %275 {offsets = [0, 0], sizes = [8, 128], strides = [1, 1]} : vector<8x384xf32> to vector<8x128xf32>
    %280 = vector.extract_strided_slice %278 {offsets = [0, 0], sizes = [8, 128], strides = [1, 1]} : vector<8x384xf32> to vector<8x128xf32>
    %281 = arith.addf %279, %280 : vector<8x128xf32>
    %282 = arith.negf %281 : vector<8x128xf32>
    %283 = math.exp %282 : vector<8x128xf32>
    %cst_98 = arith.constant 1.000000e+00 : f32
    %284 = vector.broadcast %cst_98 : f32 to vector<8x128xf32>
    %285 = arith.addf %284, %283 : vector<8x128xf32>
    %286 = arith.divf %284, %285 : vector<8x128xf32>
    %287 = vector.extract_strided_slice %275 {offsets = [0, 128], sizes = [8, 128], strides = [1, 1]} : vector<8x384xf32> to vector<8x128xf32>
    %288 = vector.extract_strided_slice %278 {offsets = [0, 128], sizes = [8, 128], strides = [1, 1]} : vector<8x384xf32> to vector<8x128xf32>
    %289 = arith.addf %287, %288 : vector<8x128xf32>
    %290 = arith.negf %289 : vector<8x128xf32>
    %291 = math.exp %290 : vector<8x128xf32>
    %cst_99 = arith.constant 1.000000e+00 : f32
    %292 = vector.broadcast %cst_99 : f32 to vector<8x128xf32>
    %293 = arith.addf %292, %291 : vector<8x128xf32>
    %294 = arith.divf %292, %293 : vector<8x128xf32>
    %295 = vector.extract_strided_slice %275 {offsets = [0, 256], sizes = [8, 128], strides = [1, 1]} : vector<8x384xf32> to vector<8x128xf32>
    %296 = vector.extract_strided_slice %278 {offsets = [0, 256], sizes = [8, 128], strides = [1, 1]} : vector<8x384xf32> to vector<8x128xf32>
    %297 = arith.addf %296, %272 : vector<8x128xf32>
    %298 = arith.mulf %286, %297 : vector<8x128xf32>
    %299 = arith.addf %295, %298 : vector<8x128xf32>
    %300 = math.tanh %299 : vector<8x128xf32>
    %301 = arith.subf %274, %300 : vector<8x128xf32>
    %302 = arith.mulf %294, %301 : vector<8x128xf32>
    %303 = arith.addf %300, %302 : vector<8x128xf32>
    %c0_100 = arith.constant 0 : index
    %c0_101 = arith.constant 0 : index
    %304 = vector.load %arg10[%c0_100, %c0_101] : memref<64x128xf32, #tpu.memory_space<vmem>>, vector<8x128xf32>
    tpu.vector_store %arg10[%c0_100, %c0_101], %303 {strides = array<i32>} : memref<64x128xf32, #tpu.memory_space<vmem>>, vector<8x128xf32>,
    %c8_102 = arith.constant 8 : index
    %c0_103 = arith.constant 0 : index
    %305 = vector.load %arg12[%c8_102, %c0_103] : memref<64x384xf32, #tpu.memory_space<vmem>>, vector<8x384xf32>
    %306 = arith.truncf %303 : vector<8x128xf32> to vector<8x128xbf16>
    %c0_104 = arith.constant 0 : index
    %c0_105 = arith.constant 0 : index
    %307 = vector.load %arg8[%c0_104, %c0_105] : memref<128x384xbf16, #tpu.memory_space<vmem>>, vector<128x384xbf16>
    %cst_106 = arith.constant dense<0.000000e+00> : vector<8x384xf32>
    %308 = tpu.matmul %306, %307, %cst_106 {dimension_numbers = #tpu.dot_dimension_numbers<[1], [0], [0], [1], [0, 0, 1, 1], [], []>} : vector<8x128xbf16>, vector<128x384xbf16>, vector<8x384xf32> -> vector<8x384xf32>
    %309 = vector.extract_strided_slice %305 {offsets = [0, 0], sizes = [8, 128], strides = [1, 1]} : vector<8x384xf32> to vector<8x128xf32>
    %310 = vector.extract_strided_slice %308 {offsets = [0, 0], sizes = [8, 128], strides = [1, 1]} : vector<8x384xf32> to vector<8x128xf32>
    %311 = arith.addf %309, %310 : vector<8x128xf32>
    %312 = arith.negf %311 : vector<8x128xf32>
    %313 = math.exp %312 : vector<8x128xf32>
    %cst_107 = arith.constant 1.000000e+00 : f32
    %314 = vector.broadcast %cst_107 : f32 to vector<8x128xf32>
    %315 = arith.addf %314, %313 : vector<8x128xf32>
    %316 = arith.divf %314, %315 : vector<8x128xf32>
    %317 = vector.extract_strided_slice %305 {offsets = [0, 128], sizes = [8, 128], strides = [1, 1]} : vector<8x384xf32> to vector<8x128xf32>
    %318 = vector.extract_strided_slice %308 {offsets = [0, 128], sizes = [8, 128], strides = [1, 1]} : vector<8x384xf32> to vector<8x128xf32>
    %319 = arith.addf %317, %318 : vector<8x128xf32>
    %320 = arith.negf %319 : vector<8x128xf32>
    %321 = math.exp %320 : vector<8x128xf32>
    %cst_108 = arith.constant 1.000000e+00 : f32
    %322 = vector.broadcast %cst_108 : f32 to vector<8x128xf32>
    %323 = arith.addf %322, %321 : vector<8x128xf32>
    %324 = arith.divf %322, %323 : vector<8x128xf32>
    %325 = vector.extract_strided_slice %305 {offsets = [0, 256], sizes = [8, 128], strides = [1, 1]} : vector<8x384xf32> to vector<8x128xf32>
    %326 = vector.extract_strided_slice %308 {offsets = [0, 256], sizes = [8, 128], strides = [1, 1]} : vector<8x384xf32> to vector<8x128xf32>
    %327 = arith.addf %326, %272 : vector<8x128xf32>
    %328 = arith.mulf %316, %327 : vector<8x128xf32>
    %329 = arith.addf %325, %328 : vector<8x128xf32>
    %330 = math.tanh %329 : vector<8x128xf32>
    %331 = arith.subf %303, %330 : vector<8x128xf32>
    %332 = arith.mulf %324, %331 : vector<8x128xf32>
    %333 = arith.addf %330, %332 : vector<8x128xf32>
    %c8_109 = arith.constant 8 : index
    %c0_110 = arith.constant 0 : index
    %334 = vector.load %arg10[%c8_109, %c0_110] : memref<64x128xf32, #tpu.memory_space<vmem>>, vector<8x128xf32>
    tpu.vector_store %arg10[%c8_109, %c0_110], %333 {strides = array<i32>} : memref<64x128xf32, #tpu.memory_space<vmem>>, vector<8x128xf32>,
    %c16_111 = arith.constant 16 : index
    %c0_112 = arith.constant 0 : index
    %335 = vector.load %arg12[%c16_111, %c0_112] : memref<64x384xf32, #tpu.memory_space<vmem>>, vector<8x384xf32>
    %336 = arith.truncf %333 : vector<8x128xf32> to vector<8x128xbf16>
    %c0_113 = arith.constant 0 : index
    %c0_114 = arith.constant 0 : index
    %337 = vector.load %arg8[%c0_113, %c0_114] : memref<128x384xbf16, #tpu.memory_space<vmem>>, vector<128x384xbf16>
    %cst_115 = arith.constant dense<0.000000e+00> : vector<8x384xf32>
    %338 = tpu.matmul %336, %337, %cst_115 {dimension_numbers = #tpu.dot_dimension_numbers<[1], [0], [0], [1], [0, 0, 1, 1], [], []>} : vector<8x128xbf16>, vector<128x384xbf16>, vector<8x384xf32> -> vector<8x384xf32>
    %339 = vector.extract_strided_slice %335 {offsets = [0, 0], sizes = [8, 128], strides = [1, 1]} : vector<8x384xf32> to vector<8x128xf32>
    %340 = vector.extract_strided_slice %338 {offsets = [0, 0], sizes = [8, 128], strides = [1, 1]} : vector<8x384xf32> to vector<8x128xf32>
    %341 = arith.addf %339, %340 : vector<8x128xf32>
    %342 = arith.negf %341 : vector<8x128xf32>
    %343 = math.exp %342 : vector<8x128xf32>
    %cst_116 = arith.constant 1.000000e+00 : f32
    %344 = vector.broadcast %cst_116 : f32 to vector<8x128xf32>
    %345 = arith.addf %344, %343 : vector<8x128xf32>
    %346 = arith.divf %344, %345 : vector<8x128xf32>
    %347 = vector.extract_strided_slice %335 {offsets = [0, 128], sizes = [8, 128], strides = [1, 1]} : vector<8x384xf32> to vector<8x128xf32>
    %348 = vector.extract_strided_slice %338 {offsets = [0, 128], sizes = [8, 128], strides = [1, 1]} : vector<8x384xf32> to vector<8x128xf32>
    %349 = arith.addf %347, %348 : vector<8x128xf32>
    %350 = arith.negf %349 : vector<8x128xf32>
    %351 = math.exp %350 : vector<8x128xf32>
    %cst_117 = arith.constant 1.000000e+00 : f32
    %352 = vector.broadcast %cst_117 : f32 to vector<8x128xf32>
    %353 = arith.addf %352, %351 : vector<8x128xf32>
    %354 = arith.divf %352, %353 : vector<8x128xf32>
    %355 = vector.extract_strided_slice %335 {offsets = [0, 256], sizes = [8, 128], strides = [1, 1]} : vector<8x384xf32> to vector<8x128xf32>
    %356 = vector.extract_strided_slice %338 {offsets = [0, 256], sizes = [8, 128], strides = [1, 1]} : vector<8x384xf32> to vector<8x128xf32>
    %357 = arith.addf %356, %272 : vector<8x128xf32>
    %358 = arith.mulf %346, %357 : vector<8x128xf32>
    %359 = arith.addf %355, %358 : vector<8x128xf32>
    %360 = math.tanh %359 : vector<8x128xf32>
    %361 = arith.subf %333, %360 : vector<8x128xf32>
    %362 = arith.mulf %354, %361 : vector<8x128xf32>
    %363 = arith.addf %360, %362 : vector<8x128xf32>
    %c16_118 = arith.constant 16 : index
    %c0_119 = arith.constant 0 : index
    %364 = vector.load %arg10[%c16_118, %c0_119] : memref<64x128xf32, #tpu.memory_space<vmem>>, vector<8x128xf32>
    tpu.vector_store %arg10[%c16_118, %c0_119], %363 {strides = array<i32>} : memref<64x128xf32, #tpu.memory_space<vmem>>, vector<8x128xf32>,
    %c24_120 = arith.constant 24 : index
    %c0_121 = arith.constant 0 : index
    %365 = vector.load %arg12[%c24_120, %c0_121] : memref<64x384xf32, #tpu.memory_space<vmem>>, vector<8x384xf32>
    %366 = arith.truncf %363 : vector<8x128xf32> to vector<8x128xbf16>
    %c0_122 = arith.constant 0 : index
    %c0_123 = arith.constant 0 : index
    %367 = vector.load %arg8[%c0_122, %c0_123] : memref<128x384xbf16, #tpu.memory_space<vmem>>, vector<128x384xbf16>
    %cst_124 = arith.constant dense<0.000000e+00> : vector<8x384xf32>
    %368 = tpu.matmul %366, %367, %cst_124 {dimension_numbers = #tpu.dot_dimension_numbers<[1], [0], [0], [1], [0, 0, 1, 1], [], []>} : vector<8x128xbf16>, vector<128x384xbf16>, vector<8x384xf32> -> vector<8x384xf32>
    %369 = vector.extract_strided_slice %365 {offsets = [0, 0], sizes = [8, 128], strides = [1, 1]} : vector<8x384xf32> to vector<8x128xf32>
    %370 = vector.extract_strided_slice %368 {offsets = [0, 0], sizes = [8, 128], strides = [1, 1]} : vector<8x384xf32> to vector<8x128xf32>
    %371 = arith.addf %369, %370 : vector<8x128xf32>
    %372 = arith.negf %371 : vector<8x128xf32>
    %373 = math.exp %372 : vector<8x128xf32>
    %cst_125 = arith.constant 1.000000e+00 : f32
    %374 = vector.broadcast %cst_125 : f32 to vector<8x128xf32>
    %375 = arith.addf %374, %373 : vector<8x128xf32>
    %376 = arith.divf %374, %375 : vector<8x128xf32>
    %377 = vector.extract_strided_slice %365 {offsets = [0, 128], sizes = [8, 128], strides = [1, 1]} : vector<8x384xf32> to vector<8x128xf32>
    %378 = vector.extract_strided_slice %368 {offsets = [0, 128], sizes = [8, 128], strides = [1, 1]} : vector<8x384xf32> to vector<8x128xf32>
    %379 = arith.addf %377, %378 : vector<8x128xf32>
    %380 = arith.negf %379 : vector<8x128xf32>
    %381 = math.exp %380 : vector<8x128xf32>
    %cst_126 = arith.constant 1.000000e+00 : f32
    %382 = vector.broadcast %cst_126 : f32 to vector<8x128xf32>
    %383 = arith.addf %382, %381 : vector<8x128xf32>
    %384 = arith.divf %382, %383 : vector<8x128xf32>
    %385 = vector.extract_strided_slice %365 {offsets = [0, 256], sizes = [8, 128], strides = [1, 1]} : vector<8x384xf32> to vector<8x128xf32>
    %386 = vector.extract_strided_slice %368 {offsets = [0, 256], sizes = [8, 128], strides = [1, 1]} : vector<8x384xf32> to vector<8x128xf32>
    %387 = arith.addf %386, %272 : vector<8x128xf32>
    %388 = arith.mulf %376, %387 : vector<8x128xf32>
    %389 = arith.addf %385, %388 : vector<8x128xf32>
    %390 = math.tanh %389 : vector<8x128xf32>
    %391 = arith.subf %363, %390 : vector<8x128xf32>
    %392 = arith.mulf %384, %391 : vector<8x128xf32>
    %393 = arith.addf %390, %392 : vector<8x128xf32>
    %c24_127 = arith.constant 24 : index
    %c0_128 = arith.constant 0 : index
    %394 = vector.load %arg10[%c24_127, %c0_128] : memref<64x128xf32, #tpu.memory_space<vmem>>, vector<8x128xf32>
    tpu.vector_store %arg10[%c24_127, %c0_128], %393 {strides = array<i32>} : memref<64x128xf32, #tpu.memory_space<vmem>>, vector<8x128xf32>,
    %c32_129 = arith.constant 32 : index
    %c0_130 = arith.constant 0 : index
    %395 = vector.load %arg12[%c32_129, %c0_130] : memref<64x384xf32, #tpu.memory_space<vmem>>, vector<8x384xf32>
    %396 = arith.truncf %393 : vector<8x128xf32> to vector<8x128xbf16>
    %c0_131 = arith.constant 0 : index
    %c0_132 = arith.constant 0 : index
    %397 = vector.load %arg8[%c0_131, %c0_132] : memref<128x384xbf16, #tpu.memory_space<vmem>>, vector<128x384xbf16>
    %cst_133 = arith.constant dense<0.000000e+00> : vector<8x384xf32>
    %398 = tpu.matmul %396, %397, %cst_133 {dimension_numbers = #tpu.dot_dimension_numbers<[1], [0], [0], [1], [0, 0, 1, 1], [], []>} : vector<8x128xbf16>, vector<128x384xbf16>, vector<8x384xf32> -> vector<8x384xf32>
    %399 = vector.extract_strided_slice %395 {offsets = [0, 0], sizes = [8, 128], strides = [1, 1]} : vector<8x384xf32> to vector<8x128xf32>
    %400 = vector.extract_strided_slice %398 {offsets = [0, 0], sizes = [8, 128], strides = [1, 1]} : vector<8x384xf32> to vector<8x128xf32>
    %401 = arith.addf %399, %400 : vector<8x128xf32>
    %402 = arith.negf %401 : vector<8x128xf32>
    %403 = math.exp %402 : vector<8x128xf32>
    %cst_134 = arith.constant 1.000000e+00 : f32
    %404 = vector.broadcast %cst_134 : f32 to vector<8x128xf32>
    %405 = arith.addf %404, %403 : vector<8x128xf32>
    %406 = arith.divf %404, %405 : vector<8x128xf32>
    %407 = vector.extract_strided_slice %395 {offsets = [0, 128], sizes = [8, 128], strides = [1, 1]} : vector<8x384xf32> to vector<8x128xf32>
    %408 = vector.extract_strided_slice %398 {offsets = [0, 128], sizes = [8, 128], strides = [1, 1]} : vector<8x384xf32> to vector<8x128xf32>
    %409 = arith.addf %407, %408 : vector<8x128xf32>
    %410 = arith.negf %409 : vector<8x128xf32>
    %411 = math.exp %410 : vector<8x128xf32>
    %cst_135 = arith.constant 1.000000e+00 : f32
    %412 = vector.broadcast %cst_135 : f32 to vector<8x128xf32>
    %413 = arith.addf %412, %411 : vector<8x128xf32>
    %414 = arith.divf %412, %413 : vector<8x128xf32>
    %415 = vector.extract_strided_slice %395 {offsets = [0, 256], sizes = [8, 128], strides = [1, 1]} : vector<8x384xf32> to vector<8x128xf32>
    %416 = vector.extract_strided_slice %398 {offsets = [0, 256], sizes = [8, 128], strides = [1, 1]} : vector<8x384xf32> to vector<8x128xf32>
    %417 = arith.addf %416, %272 : vector<8x128xf32>
    %418 = arith.mulf %406, %417 : vector<8x128xf32>
    %419 = arith.addf %415, %418 : vector<8x128xf32>
    %420 = math.tanh %419 : vector<8x128xf32>
    %421 = arith.subf %393, %420 : vector<8x128xf32>
    %422 = arith.mulf %414, %421 : vector<8x128xf32>
    %423 = arith.addf %420, %422 : vector<8x128xf32>
    %c32_136 = arith.constant 32 : index
    %c0_137 = arith.constant 0 : index
    %424 = vector.load %arg10[%c32_136, %c0_137] : memref<64x128xf32, #tpu.memory_space<vmem>>, vector<8x128xf32>
    tpu.vector_store %arg10[%c32_136, %c0_137], %423 {strides = array<i32>} : memref<64x128xf32, #tpu.memory_space<vmem>>, vector<8x128xf32>,
    %c40_138 = arith.constant 40 : index
    %c0_139 = arith.constant 0 : index
    %425 = vector.load %arg12[%c40_138, %c0_139] : memref<64x384xf32, #tpu.memory_space<vmem>>, vector<8x384xf32>
    %426 = arith.truncf %423 : vector<8x128xf32> to vector<8x128xbf16>
    %c0_140 = arith.constant 0 : index
    %c0_141 = arith.constant 0 : index
    %427 = vector.load %arg8[%c0_140, %c0_141] : memref<128x384xbf16, #tpu.memory_space<vmem>>, vector<128x384xbf16>
    %cst_142 = arith.constant dense<0.000000e+00> : vector<8x384xf32>
    %428 = tpu.matmul %426, %427, %cst_142 {dimension_numbers = #tpu.dot_dimension_numbers<[1], [0], [0], [1], [0, 0, 1, 1], [], []>} : vector<8x128xbf16>, vector<128x384xbf16>, vector<8x384xf32> -> vector<8x384xf32>
    %429 = vector.extract_strided_slice %425 {offsets = [0, 0], sizes = [8, 128], strides = [1, 1]} : vector<8x384xf32> to vector<8x128xf32>
    %430 = vector.extract_strided_slice %428 {offsets = [0, 0], sizes = [8, 128], strides = [1, 1]} : vector<8x384xf32> to vector<8x128xf32>
    %431 = arith.addf %429, %430 : vector<8x128xf32>
    %432 = arith.negf %431 : vector<8x128xf32>
    %433 = math.exp %432 : vector<8x128xf32>
    %cst_143 = arith.constant 1.000000e+00 : f32
    %434 = vector.broadcast %cst_143 : f32 to vector<8x128xf32>
    %435 = arith.addf %434, %433 : vector<8x128xf32>
    %436 = arith.divf %434, %435 : vector<8x128xf32>
    %437 = vector.extract_strided_slice %425 {offsets = [0, 128], sizes = [8, 128], strides = [1, 1]} : vector<8x384xf32> to vector<8x128xf32>
    %438 = vector.extract_strided_slice %428 {offsets = [0, 128], sizes = [8, 128], strides = [1, 1]} : vector<8x384xf32> to vector<8x128xf32>
    %439 = arith.addf %437, %438 : vector<8x128xf32>
    %440 = arith.negf %439 : vector<8x128xf32>
    %441 = math.exp %440 : vector<8x128xf32>
    %cst_144 = arith.constant 1.000000e+00 : f32
    %442 = vector.broadcast %cst_144 : f32 to vector<8x128xf32>
    %443 = arith.addf %442, %441 : vector<8x128xf32>
    %444 = arith.divf %442, %443 : vector<8x128xf32>
    %445 = vector.extract_strided_slice %425 {offsets = [0, 256], sizes = [8, 128], strides = [1, 1]} : vector<8x384xf32> to vector<8x128xf32>
    %446 = vector.extract_strided_slice %428 {offsets = [0, 256], sizes = [8, 128], strides = [1, 1]} : vector<8x384xf32> to vector<8x128xf32>
    %447 = arith.addf %446, %272 : vector<8x128xf32>
    %448 = arith.mulf %436, %447 : vector<8x128xf32>
    %449 = arith.addf %445, %448 : vector<8x128xf32>
    %450 = math.tanh %449 : vector<8x128xf32>
    %451 = arith.subf %423, %450 : vector<8x128xf32>
    %452 = arith.mulf %444, %451 : vector<8x128xf32>
    %453 = arith.addf %450, %452 : vector<8x128xf32>
    %c40_145 = arith.constant 40 : index
    %c0_146 = arith.constant 0 : index
    %454 = vector.load %arg10[%c40_145, %c0_146] : memref<64x128xf32, #tpu.memory_space<vmem>>, vector<8x128xf32>
    tpu.vector_store %arg10[%c40_145, %c0_146], %453 {strides = array<i32>} : memref<64x128xf32, #tpu.memory_space<vmem>>, vector<8x128xf32>,
    %c48_147 = arith.constant 48 : index
    %c0_148 = arith.constant 0 : index
    %455 = vector.load %arg12[%c48_147, %c0_148] : memref<64x384xf32, #tpu.memory_space<vmem>>, vector<8x384xf32>
    %456 = arith.truncf %453 : vector<8x128xf32> to vector<8x128xbf16>
    %c0_149 = arith.constant 0 : index
    %c0_150 = arith.constant 0 : index
    %457 = vector.load %arg8[%c0_149, %c0_150] : memref<128x384xbf16, #tpu.memory_space<vmem>>, vector<128x384xbf16>
    %cst_151 = arith.constant dense<0.000000e+00> : vector<8x384xf32>
    %458 = tpu.matmul %456, %457, %cst_151 {dimension_numbers = #tpu.dot_dimension_numbers<[1], [0], [0], [1], [0, 0, 1, 1], [], []>} : vector<8x128xbf16>, vector<128x384xbf16>, vector<8x384xf32> -> vector<8x384xf32>
    %459 = vector.extract_strided_slice %455 {offsets = [0, 0], sizes = [8, 128], strides = [1, 1]} : vector<8x384xf32> to vector<8x128xf32>
    %460 = vector.extract_strided_slice %458 {offsets = [0, 0], sizes = [8, 128], strides = [1, 1]} : vector<8x384xf32> to vector<8x128xf32>
    %461 = arith.addf %459, %460 : vector<8x128xf32>
    %462 = arith.negf %461 : vector<8x128xf32>
    %463 = math.exp %462 : vector<8x128xf32>
    %cst_152 = arith.constant 1.000000e+00 : f32
    %464 = vector.broadcast %cst_152 : f32 to vector<8x128xf32>
    %465 = arith.addf %464, %463 : vector<8x128xf32>
    %466 = arith.divf %464, %465 : vector<8x128xf32>
    %467 = vector.extract_strided_slice %455 {offsets = [0, 128], sizes = [8, 128], strides = [1, 1]} : vector<8x384xf32> to vector<8x128xf32>
    %468 = vector.extract_strided_slice %458 {offsets = [0, 128], sizes = [8, 128], strides = [1, 1]} : vector<8x384xf32> to vector<8x128xf32>
    %469 = arith.addf %467, %468 : vector<8x128xf32>
    %470 = arith.negf %469 : vector<8x128xf32>
    %471 = math.exp %470 : vector<8x128xf32>
    %cst_153 = arith.constant 1.000000e+00 : f32
    %472 = vector.broadcast %cst_153 : f32 to vector<8x128xf32>
    %473 = arith.addf %472, %471 : vector<8x128xf32>
    %474 = arith.divf %472, %473 : vector<8x128xf32>
    %475 = vector.extract_strided_slice %455 {offsets = [0, 256], sizes = [8, 128], strides = [1, 1]} : vector<8x384xf32> to vector<8x128xf32>
    %476 = vector.extract_strided_slice %458 {offsets = [0, 256], sizes = [8, 128], strides = [1, 1]} : vector<8x384xf32> to vector<8x128xf32>
    %477 = arith.addf %476, %272 : vector<8x128xf32>
    %478 = arith.mulf %466, %477 : vector<8x128xf32>
    %479 = arith.addf %475, %478 : vector<8x128xf32>
    %480 = math.tanh %479 : vector<8x128xf32>
    %481 = arith.subf %453, %480 : vector<8x128xf32>
    %482 = arith.mulf %474, %481 : vector<8x128xf32>
    %483 = arith.addf %480, %482 : vector<8x128xf32>
    %c48_154 = arith.constant 48 : index
    %c0_155 = arith.constant 0 : index
    %484 = vector.load %arg10[%c48_154, %c0_155] : memref<64x128xf32, #tpu.memory_space<vmem>>, vector<8x128xf32>
    tpu.vector_store %arg10[%c48_154, %c0_155], %483 {strides = array<i32>} : memref<64x128xf32, #tpu.memory_space<vmem>>, vector<8x128xf32>,
    %c56_156 = arith.constant 56 : index
    %c0_157 = arith.constant 0 : index
    %485 = vector.load %arg12[%c56_156, %c0_157] : memref<64x384xf32, #tpu.memory_space<vmem>>, vector<8x384xf32>
    %486 = arith.truncf %483 : vector<8x128xf32> to vector<8x128xbf16>
    %c0_158 = arith.constant 0 : index
    %c0_159 = arith.constant 0 : index
    %487 = vector.load %arg8[%c0_158, %c0_159] : memref<128x384xbf16, #tpu.memory_space<vmem>>, vector<128x384xbf16>
    %cst_160 = arith.constant dense<0.000000e+00> : vector<8x384xf32>
    %488 = tpu.matmul %486, %487, %cst_160 {dimension_numbers = #tpu.dot_dimension_numbers<[1], [0], [0], [1], [0, 0, 1, 1], [], []>} : vector<8x128xbf16>, vector<128x384xbf16>, vector<8x384xf32> -> vector<8x384xf32>
    %489 = vector.extract_strided_slice %485 {offsets = [0, 0], sizes = [8, 128], strides = [1, 1]} : vector<8x384xf32> to vector<8x128xf32>
    %490 = vector.extract_strided_slice %488 {offsets = [0, 0], sizes = [8, 128], strides = [1, 1]} : vector<8x384xf32> to vector<8x128xf32>
    %491 = arith.addf %489, %490 : vector<8x128xf32>
    %492 = arith.negf %491 : vector<8x128xf32>
    %493 = math.exp %492 : vector<8x128xf32>
    %cst_161 = arith.constant 1.000000e+00 : f32
    %494 = vector.broadcast %cst_161 : f32 to vector<8x128xf32>
    %495 = arith.addf %494, %493 : vector<8x128xf32>
    %496 = arith.divf %494, %495 : vector<8x128xf32>
    %497 = vector.extract_strided_slice %485 {offsets = [0, 128], sizes = [8, 128], strides = [1, 1]} : vector<8x384xf32> to vector<8x128xf32>
    %498 = vector.extract_strided_slice %488 {offsets = [0, 128], sizes = [8, 128], strides = [1, 1]} : vector<8x384xf32> to vector<8x128xf32>
    %499 = arith.addf %497, %498 : vector<8x128xf32>
    %500 = arith.negf %499 : vector<8x128xf32>
    %501 = math.exp %500 : vector<8x128xf32>
    %cst_162 = arith.constant 1.000000e+00 : f32
    %502 = vector.broadcast %cst_162 : f32 to vector<8x128xf32>
    %503 = arith.addf %502, %501 : vector<8x128xf32>
    %504 = arith.divf %502, %503 : vector<8x128xf32>
    %505 = vector.extract_strided_slice %485 {offsets = [0, 256], sizes = [8, 128], strides = [1, 1]} : vector<8x384xf32> to vector<8x128xf32>
    %506 = vector.extract_strided_slice %488 {offsets = [0, 256], sizes = [8, 128], strides = [1, 1]} : vector<8x384xf32> to vector<8x128xf32>
    %507 = arith.addf %506, %272 : vector<8x128xf32>
    %508 = arith.mulf %496, %507 : vector<8x128xf32>
    %509 = arith.addf %505, %508 : vector<8x128xf32>
    %510 = math.tanh %509 : vector<8x128xf32>
    %511 = arith.subf %483, %510 : vector<8x128xf32>
    %512 = arith.mulf %504, %511 : vector<8x128xf32>
    %513 = arith.addf %510, %512 : vector<8x128xf32>
    %c56_163 = arith.constant 56 : index
    %c0_164 = arith.constant 0 : index
    %514 = vector.load %arg10[%c56_163, %c0_164] : memref<64x128xf32, #tpu.memory_space<vmem>>, vector<8x128xf32>
    tpu.vector_store %arg10[%c56_163, %c0_164], %513 {strides = array<i32>} : memref<64x128xf32, #tpu.memory_space<vmem>>, vector<8x128xf32>,
    %c1_165 = arith.constant 1 : index
    %c0_166 = arith.constant 0 : index
    %c0_167 = arith.constant 0 : index
    %515 = vector.load %arg11[%c1_165, %c0_166, %c0_167] : memref<2x8x128xf32, #tpu.memory_space<vmem>>, vector<1x8x128xf32>
    %516 = vector.shape_cast %515 : vector<1x8x128xf32> to vector<8x128xf32>
    %517 = vector.shape_cast %513 : vector<8x128xf32> to vector<1x8x128xf32>
    tpu.vector_store %arg11[%c1_165, %c0_166, %c0_167], %517 {strides = array<i32>} : memref<2x8x128xf32, #tpu.memory_space<vmem>>, vector<1x8x128xf32>,
    return
  }
}

</mosaic_0001>

<llo_original>
// kernel: tpu_custom_call.1
$region0: #{tpu_custom_call.1}
  #allocation0 [shape = 'u32[]', space=smem, size = 0x4, offset = 0x4, fixed_abs, tag = 'smem constant byte address 0x4 - core index']
  #allocation1 [shape = 'u32[144,128]{1,0:T(1,128)}', space=vmem, size = 0x12000, scoped, tag = 'internal scratch']
  #allocation2 [shape = 'f32[64,384]{1,0:T(8,128)}', space=vmem, size = 0x18000, scoped, tag = 'scratch operand']
  #allocation3 [shape = 'bf16[64,128]{1,0:T(8,128)(2,1)}', space=vmem, size = 0x4000, scoped, tag = 'scratch operand']
  %s0 = inlined_call_operand.vmem [shape: bf16[64,16], index: 0, kind: input, shape index: {}]
  %s1 = inlined_call_operand.vmem [shape: f32[2,8,128], index: 1, kind: input, shape index: {}]
  %s2 = inlined_call_operand.vmem [shape: bf16[16,384], index: 2, kind: input, shape index: {}]
  %s3 = inlined_call_operand.vmem [shape: f32[1,384], index: 3, kind: input, shape index: {}]
  %s4 = inlined_call_operand.hbm [shape: bf16[128,384], index: 4, kind: input, shape index: {}]
  %s5 = inlined_call_operand.vmem [shape: f32[1,128], index: 5, kind: input, shape index: {}]
  %s6 = inlined_call_operand.hbm [shape: bf16[128,384], index: 6, kind: input, shape index: {}]
  %s7 = inlined_call_operand.vmem [shape: f32[1,384], index: 7, kind: input, shape index: {}]
  %s8 = inlined_call_operand.hbm [shape: bf16[128,384], index: 8, kind: input, shape index: {}]
  %s9 = inlined_call_operand.vmem [shape: f32[1,128], index: 9, kind: input, shape index: {}]
  %s10 = inlined_call_operand.hbm [shape: f32[64,128], index: 10, kind: output, shape index: {0}]
  %s11 = inlined_call_operand.hbm [shape: f32[2,8,128], index: 11, kind: output, shape index: {1}]
  %12 = xla_tuple %s10, %s11
  %s13 = sld [smem:[#allocation0]]
  $region70: #{tpu_custom_call.1} parent=0
    _
  %s15 = ssub.s32 1, %s13
  %s16 = scalar_select 0, %s15, %s13
  $region1: #{tpu_custom_call.1} parent=0
    #allocation4 [shape = 'u8[98304]{0}', space=vmem, size = 0x18000, scoped, tag = 'input window, operand 4, single buffered']
    #allocation5 [shape = 's32[1]{0}', space=sflag, size = 0x4, scoped, tag = 'scoped memory for tpu_custom_call.1']
    #allocation6 [shape = 's32[1]{0}', space=sflag, size = 0x4, scoped, tag = 'scoped memory for tpu_custom_call.1']
    #allocation7 [shape = 'u8[98304]{0}', space=vmem, size = 0x18000, scoped, tag = 'input window, operand 6, single buffered']
    #allocation8 [shape = 's32[1]{0}', space=sflag, size = 0x4, scoped, tag = 'scoped memory for tpu_custom_call.1']
    #allocation9 [shape = 'u8[98304]{0}', space=vmem, size = 0x18000, scoped, tag = 'input window, operand 8, single buffered']
    #allocation10 [shape = 'u8[32768]{0}', space=vmem, size = 0x8000, scoped, tag = 'output window, operand 0, single buffered']
    #allocation11 [shape = 'u8[8192]{0}', space=vmem, size = 0x2000, scoped, tag = 'output window, operand 1, single buffered']
    #allocation12 [shape = 's32[1]{0}', space=sflag, size = 0x4, scoped, tag = 'scoped memory for tpu_custom_call.1']
    %17 = vsyncpa [#allocation5], 0
    %18 = vsyncpa [#allocation8], 0
    %19 = vsyncpa [#allocation6], 0
    %20 = vsyncpa [#allocation12], 0
    // Predicated region
    $region2: #{tpu_custom_call.1} parent=1 // pred_check
      _
    $region3: #{tpu_custom_call.1} parent=1 // pred_check_branch
      %22 = sbr.rel (0) target = $region5
    $region4: #{tpu_custom_call.1} parent=1 // pred_region
      _
    $region5: #{tpu_custom_call.1} parent=1 // pred_fallthru
      _
    // Predicated region
    $region6: #{tpu_custom_call.1} parent=1 // pred_check
      _
    $region7: #{tpu_custom_call.1} parent=1 // pred_check_branch
      %24 = sbr.rel (0) target = $region9
    $region8: #{tpu_custom_call.1} parent=1 // pred_region
      _
    $region9: #{tpu_custom_call.1} parent=1 // pred_fallthru
      _
    // Predicated region
    $region10: #{tpu_custom_call.1} parent=1 // pred_check
      _
    $region11: #{tpu_custom_call.1} parent=1 // pred_check_branch
      %26 = sbr.rel (0) target = $region13
    $region12: #{tpu_custom_call.1} parent=1 // pred_region
      _
    $region13: #{tpu_custom_call.1} parent=1 // pred_fallthru
      _
    // Predicated region
    $region14: #{tpu_custom_call.1} parent=1 // pred_check
      _
    $region15: #{tpu_custom_call.1} parent=1 // pred_check_branch
      %28 = sbr.rel (0) target = $region17
    $region16: #{tpu_custom_call.1} parent=1 // pred_region
      _
    $region17: #{tpu_custom_call.1} parent=1 // pred_fallthru
      _
    // Predicated region
    $region18: #{tpu_custom_call.1} parent=1 // pred_check
      _
    $region19: #{tpu_custom_call.1} parent=1 // pred_check_branch
      %30 = sbr.rel (0) target = $region21
    $region20: #{tpu_custom_call.1} parent=1 // pred_region
      %s32 = ssub.s32 3072, 3072
      %33 = vsyncadd [#allocation5], %s32
      %s34 = sshll.u32 [#allocation4], 4
      %s35 = int_to_ptr.vmem [resolvable:$true] %s34
      %40 = dma.hbm_to_vmem [thread:$0]  %s4, 3072, %s35, [#allocation5], 192, 192, 12
    $region21: #{tpu_custom_call.1} parent=1 // pred_fallthru
      _
    // Predicated region
    $region22: #{tpu_custom_call.1} parent=1 // pred_check
      _
    $region23: #{tpu_custom_call.1} parent=1 // pred_check_branch
      %42 = sbr.rel (0) target = $region25
    $region24: #{tpu_custom_call.1} parent=1 // pred_region
      _
    $region25: #{tpu_custom_call.1} parent=1 // pred_fallthru
      _
    // Predicated region
    $region26: #{tpu_custom_call.1} parent=1 // pred_check
      _
    $region27: #{tpu_custom_call.1} parent=1 // pred_check_branch
      %44 = sbr.rel (0) target = $region29
    $region28: #{tpu_custom_call.1} parent=1 // pred_region
      %s46 = ssub.s32 3072, 3072
      %47 = vsyncadd [#allocation8], %s46
      %s48 = sshll.u32 [#allocation7], 4
      %s49 = int_to_ptr.vmem [resolvable:$true] %s48
      %54 = dma.hbm_to_vmem [thread:$0]  %s6, 3072, %s49, [#allocation8], 192, 192, 12
    $region29: #{tpu_custom_call.1} parent=1 // pred_fallthru
      _
    // Predicated region
    $region30: #{tpu_custom_call.1} parent=1 // pred_check
      _
    $region31: #{tpu_custom_call.1} parent=1 // pred_check_branch
      %56 = sbr.rel (0) target = $region33
    $region32: #{tpu_custom_call.1} parent=1 // pred_region
      _
    $region33: #{tpu_custom_call.1} parent=1 // pred_fallthru
      _
    // Predicated region
    $region34: #{tpu_custom_call.1} parent=1 // pred_check
      _
    $region35: #{tpu_custom_call.1} parent=1 // pred_check_branch
      %58 = sbr.rel (0) target = $region37
    $region36: #{tpu_custom_call.1} parent=1 // pred_region
      %s60 = ssub.s32 3072, 3072
      %61 = vsyncadd [#allocation8], %s60
      %s62 = sshll.u32 [#allocation9], 4
      %s63 = int_to_ptr.vmem [resolvable:$true] %s62
      %68 = dma.hbm_to_vmem [thread:$0]  %s8, 3072, %s63, [#allocation8], 192, 192, 12
    $region37: #{tpu_custom_call.1} parent=1 // pred_fallthru
      _
    // Predicated region
    $region38: #{tpu_custom_call.1} parent=1 // pred_check
      _
    $region39: #{tpu_custom_call.1} parent=1 // pred_check_branch
      %70 = sbr.rel (0) target = $region41
    $region40: #{tpu_custom_call.1} parent=1 // pred_region
      _
    $region41: #{tpu_custom_call.1} parent=1 // pred_fallthru
      _
    // Predicated region
    $region42: #{tpu_custom_call.1} parent=1 // pred_check
      _
    $region43: #{tpu_custom_call.1} parent=1 // pred_check_branch
      %72 = sbr.rel (0) target = $region45
    $region44: #{tpu_custom_call.1} parent=1 // pred_region
      %73 = dma.done [#allocation5], 3072
    $region45: #{tpu_custom_call.1} parent=1 // pred_fallthru
      _
    // Predicated region
    $region46: #{tpu_custom_call.1} parent=1 // pred_check
      _
    $region47: #{tpu_custom_call.1} parent=1 // pred_check_branch
      %75 = sbr.rel (0) target = $region49
    $region48: #{tpu_custom_call.1} parent=1 // pred_region
      %76 = dma.done [#allocation8], 3072
    $region49: #{tpu_custom_call.1} parent=1 // pred_fallthru
      _
    // Predicated region
    $region50: #{tpu_custom_call.1} parent=1 // pred_check
      _
    $region51: #{tpu_custom_call.1} parent=1 // pred_check_branch
      %78 = sbr.rel (0) target = $region53
    $region52: #{tpu_custom_call.1} parent=1 // pred_region
      %79 = dma.done [#allocation8], 3072
    $region53: #{tpu_custom_call.1} parent=1 // pred_fallthru
      _
    %v81 = vld [vmem:[%s0] sm:$0xf]
    %v82 = vld [vmem:[%s0 + $0x4] sm:$0xf]
    %v83 = vld [vmem:[%s0 + $0x8] sm:$0xf]
    %v84 = vld [vmem:[%s0 + $0xc] sm:$0xf]
    %v85 = vld [vmem:[%s0 + $0x10] sm:$0xf]
    %v86 = vld [vmem:[%s0 + $0x14] sm:$0xf]
    %v87 = vld [vmem:[%s0 + $0x18] sm:$0xf]
    %v88 = vld [vmem:[%s0 + $0x1c] sm:$0xf]
    %v89 = vld [vmem:[%s2] sm:$0xff]
    %v90 = vld [vmem:[%s2 + $0x8] sm:$0xf]
    %v91 = vld [vmem:[%s2 + $0xc] sm:$0xff]
    %v92 = vld [vmem:[%s2 + $0x14] sm:$0xf]
    %v93 = vld [vmem:[%s3] sm:$0x7]
    %v95 = vlaneseq
    %v96 = vshrl.u32 %v95, 7
    %v97 = vsub.s32 0, %v96
    %v98 = vrot.slane %v93, %v97
    %v99 = vlaneseq
    %v100 = vshrl.u32 %v99, 7
    %v101 = vsub.s32 1, %v100
    %v102 = vrot.slane %v93, %v101
    %v103 = vlaneseq
    %v104 = vshrl.u32 %v103, 7
    %v105 = vsub.s32 2, %v104
    %v106 = vrot.slane %v93, %v105
    %v118 = vunpack.c.l.b16 %v81
    %v119 = vunpack.c.l.b16 %v82
    %v120 = vunpack.c.l.b16 %v83
    %v121 = vunpack.c.l.b16 %v84
    %v122 = vunpack.c.l.b16 %v85
    %v123 = vunpack.c.l.b16 %v86
    %v124 = vunpack.c.l.b16 %v87
    %v125 = vunpack.c.l.b16 %v88
    %v126 = vpack.c.b16 %v119, %v118
    %v127 = vpack.c.b16 %v121, %v120
    %v128 = vpack.c.b16 %v123, %v122
    %v129 = vpack.c.b16 %v125, %v124
    %v134 = vunpack.c.l.b16 %v89
    %v135 = vunpack.c.h.b16 %v89
    %v136 = vunpack.c.l.b16 %v90
    %v137 = vunpack.c.l.b16 %v91
    %v138 = vunpack.c.h.b16 %v91
    %v139 = vunpack.c.l.b16 %v92
    %v140 = vpack.c.b16 %v137, %v134
    %v141 = vpack.c.b16 %v138, %v135
    %v142 = vpack.c.b16 %v139, %v136
    %vm146 = vcmask 130048
    %v148 = vsel %vm146, %v126, 0
    %v151 = vsel %vm146, %v127, 0
    %v154 = vsel %vm146, %v128, 0
    %v157 = vsel %vm146, %v129, 0
    %159 = vmatprep.subr.bf16.mxu0 0
    %160 = vmatpush1.bf16.msra.mxu0 0
    %161 = vmatprep.subr.bf16.mxu0 0
    %162 = vmatpush1.bf16.msra.mxu0 0
    %163 = vmatprep.subr.bf16.mxu0 0
    %164 = vmatpush1.bf16.msra.mxu0 0
    %165 = vmatprep.subr.bf16.mxu0 0
    %166 = vmatpush1.bf16.msra.mxu0 0
    %167 = vmatprep.subr.bf16.mxu0 0
    %168 = vmatpush1.bf16.msra.mxu0 0
    %169 = vmatprep.subr.bf16.mxu0 0
    %170 = vmatpush1.bf16.msra.mxu0 0
    %171 = vmatprep.subr.bf16.mxu0 0
    %172 = vmatpush1.bf16.msra.mxu0 0
    %173 = vmatprep.subr.bf16.mxu0 %v141
    %174 = vmatpush1.bf16.msra.mxu0 %v140
    %175 = vmatprep.subr.bf16.mxu0 0
    %176 = vmatpush2.bf16.msra.mxu0 0
    %177 = vmatprep.subr.bf16.mxu0 0
    %178 = vmatpush2.bf16.msra.mxu0 0
    %179 = vmatprep.subr.bf16.mxu0 0
    %180 = vmatpush2.bf16.msra.mxu0 0
    %181 = vmatprep.subr.bf16.mxu0 0
    %182 = vmatpush2.bf16.msra.mxu0 0
    %183 = vmatprep.subr.bf16.mxu0 0
    %184 = vmatpush2.bf16.msra.mxu0 0
    %185 = vmatprep.subr.bf16.mxu0 0
    %186 = vmatpush2.bf16.msra.mxu0 0
    %187 = vmatprep.subr.bf16.mxu0 0
    %188 = vmatpush2.bf16.msra.mxu0 0
    %189 = vmatprep.subr.bf16.mxu0 0
    %190 = vmatpush2.bf16.msra.mxu0 0
    %191 = vmatprep.mubr.bf16.mxu0 0
    %192 = vmatmul.mubr.bf16.gmra.mxu0 %v148
    %v193 = vpop.f32.mrf.mxu0
    %v194 = vadd.f32 %v98, %v193
    %v195 = vpop.f32.mrf.mxu0
    %v196 = vadd.f32 %v102, %v195
    %v197 = vpop.f32.mrf.mxu0
    %v198 = vadd.f32 %v98, %v197
    %v199 = vpop.f32.mrf.mxu0
    %v200 = vadd.f32 %v102, %v199
    %201 = vmatprep.mubr.bf16.mxu0 0
    %202 = vmatmul.mubr.bf16.gmra.mxu0 %v151
    %v203 = vpop.f32.mrf.mxu0
    %v204 = vadd.f32 %v98, %v203
    %v205 = vpop.f32.mrf.mxu0
    %v206 = vadd.f32 %v102, %v205
    %v207 = vpop.f32.mrf.mxu0
    %v208 = vadd.f32 %v98, %v207
    %v209 = vpop.f32.mrf.mxu0
    %v210 = vadd.f32 %v102, %v209
    %211 = vmatprep.mubr.bf16.mxu0 0
    %212 = vmatmul.mubr.bf16.gmra.mxu0 %v154
    %v213 = vpop.f32.mrf.mxu0
    %v214 = vadd.f32 %v98, %v213
    %v215 = vpop.f32.mrf.mxu0
    %v216 = vadd.f32 %v102, %v215
    %v217 = vpop.f32.mrf.mxu0
    %v218 = vadd.f32 %v98, %v217
    %v219 = vpop.f32.mrf.mxu0
    %v220 = vadd.f32 %v102, %v219
    %221 = vmatprep.mubr.bf16.mxu0 0
    %222 = vmatmul.mubr.bf16.gmra.mxu0 %v157
    %v223 = vpop.f32.mrf.mxu0
    %v224 = vadd.f32 %v98, %v223
    %v225 = vpop.f32.mrf.mxu0
    %v226 = vadd.f32 %v102, %v225
    %v227 = vpop.f32.mrf.mxu0
    %v228 = vadd.f32 %v98, %v227
    %v229 = vpop.f32.mrf.mxu0
    %v230 = vadd.f32 %v102, %v229
    %231 = vdwg.mxu0
    %232 = vmatprep.subr.bf16.mxu0 0
    %233 = vmatpush1.bf16.msra.mxu0 0
    %234 = vmatprep.subr.bf16.mxu0 0
    %235 = vmatpush1.bf16.msra.mxu0 0
    %236 = vmatprep.subr.bf16.mxu0 0
    %237 = vmatpush1.bf16.msra.mxu0 0
    %238 = vmatprep.subr.bf16.mxu0 0
    %239 = vmatpush1.bf16.msra.mxu0 0
    %240 = vmatprep.subr.bf16.mxu0 0
    %241 = vmatpush1.bf16.msra.mxu0 0
    %242 = vmatprep.subr.bf16.mxu0 0
    %243 = vmatpush1.bf16.msra.mxu0 0
    %244 = vmatprep.subr.bf16.mxu0 0
    %245 = vmatpush1.bf16.msra.mxu0 0
    %246 = vmatprep.subr.bf16.mxu0 0
    %247 = vmatpush1.bf16.msra.mxu0 %v142
    %248 = vmatprep.subr.bf16.mxu0 0
    %249 = vmatpush2.bf16.msra.mxu0 0
    %250 = vmatprep.subr.bf16.mxu0 0
    %251 = vmatpush2.bf16.msra.mxu0 0
    %252 = vmatprep.subr.bf16.mxu0 0
    %253 = vmatpush2.bf16.msra.mxu0 0
    %254 = vmatprep.subr.bf16.mxu0 0
    %255 = vmatpush2.bf16.msra.mxu0 0
    %256 = vmatprep.subr.bf16.mxu0 0
    %257 = vmatpush2.bf16.msra.mxu0 0
    %258 = vmatprep.subr.bf16.mxu0 0
    %259 = vmatpush2.bf16.msra.mxu0 0
    %260 = vmatprep.subr.bf16.mxu0 0
    %261 = vmatpush2.bf16.msra.mxu0 0
    %262 = vmatprep.subr.bf16.mxu0 0
    %263 = vmatpush2.bf16.msra.mxu0 0
    %264 = vmatprep.mubr.bf16.mxu0 0
    %265 = vmatmul.mubr.bf16.gmra.mxu0 %v148
    %v266 = vpop.f32.mrf.mxu0
    %v267 = vadd.f32 %v106, %v266
    %v268 = vpop.f32.mrf.mxu0
    %v269 = vpop.f32.mrf.mxu0
    %v270 = vadd.f32 %v106, %v269
    %v271 = vpop.f32.mrf.mxu0
    %272 = vmatprep.mubr.bf16.mxu0 0
    %273 = vmatmul.mubr.bf16.gmra.mxu0 %v151
    %v274 = vpop.f32.mrf.mxu0
    %v275 = vadd.f32 %v106, %v274
    %v276 = vpop.f32.mrf.mxu0
    %v277 = vpop.f32.mrf.mxu0
    %v278 = vadd.f32 %v106, %v277
    %v279 = vpop.f32.mrf.mxu0
    %280 = vmatprep.mubr.bf16.mxu0 0
    %281 = vmatmul.mubr.bf16.gmra.mxu0 %v154
    %v282 = vpop.f32.mrf.mxu0
    %v283 = vadd.f32 %v106, %v282
    %v284 = vpop.f32.mrf.mxu0
    %v285 = vpop.f32.mrf.mxu0
    %v286 = vadd.f32 %v106, %v285
    %v287 = vpop.f32.mrf.mxu0
    %288 = vmatprep.mubr.bf16.mxu0 0
    %289 = vmatmul.mubr.bf16.gmra.mxu0 %v157
    %v290 = vpop.f32.mrf.mxu0
    %v291 = vadd.f32 %v106, %v290
    %v292 = vpop.f32.mrf.mxu0
    %v293 = vpop.f32.mrf.mxu0
    %v294 = vadd.f32 %v106, %v293
    %v295 = vpop.f32.mrf.mxu0
    %296 = vdwg.mxu0
    %297 = vst [vmem:[#allocation2] sm:$0xff] %v194
    %298 = vst [vmem:[#allocation2 + $0x8] sm:$0xff] %v196
    %299 = vst [vmem:[#allocation2 + $0x10] sm:$0xff] %v267
    %300 = vst [vmem:[#allocation2 + $0x18] sm:$0xff] %v198
    %301 = vst [vmem:[#allocation2 + $0x20] sm:$0xff] %v200
    %302 = vst [vmem:[#allocation2 + $0x28] sm:$0xff] %v270
    %303 = vst [vmem:[#allocation2 + $0x30] sm:$0xff] %v204
    %304 = vst [vmem:[#allocation2 + $0x38] sm:$0xff] %v206
    %305 = vst [vmem:[#allocation2 + $0x40] sm:$0xff] %v275
    %306 = vst [vmem:[#allocation2 + $0x48] sm:$0xff] %v208
    %307 = vst [vmem:[#allocation2 + $0x50] sm:$0xff] %v210
    %308 = vst [vmem:[#allocation2 + $0x58] sm:$0xff] %v278
    %309 = vst [vmem:[#allocation2 + $0x60] sm:$0xff] %v214
    %310 = vst [vmem:[#allocation2 + $0x68] sm:$0xff] %v216
    %311 = vst [vmem:[#allocation2 + $0x70] sm:$0xff] %v283
    %312 = vst [vmem:[#allocation2 + $0x78] sm:$0xff] %v218
    %313 = vst [vmem:[#allocation2 + $0x80] sm:$0xff] %v220
    %314 = vst [vmem:[#allocation2 + $0x88] sm:$0xff] %v286
    %315 = vst [vmem:[#allocation2 + $0x90] sm:$0xff] %v224
    %316 = vst [vmem:[#allocation2 + $0x98] sm:$0xff] %v226
    %317 = vst [vmem:[#allocation2 + $0xa0] sm:$0xff] %v291
    %318 = vst [vmem:[#allocation2 + $0xa8] sm:$0xff] %v228
    %319 = vst [vmem:[#allocation2 + $0xb0] sm:$0xff] %v230
    %320 = vst [vmem:[#allocation2 + $0xb8] sm:$0xff] %v294
    %v321 = vld [vmem:[%s5] sm:$0x1]
    %v323 = vlaneseq
    %v324 = vshrl.u32 %v323, 7
    %v325 = vsub.s32 0, %v324
    %v326 = vrot.slane %v321, %v325
    %v328 = vld [vmem:[%s1] sm:$0xff]
    %v329 = vld [vmem:[#allocation2] sm:$0xff]
    %v330 = vld [vmem:[#allocation2 + $0x8] sm:$0xff]
    %v331 = vld [vmem:[#allocation2 + $0x10] sm:$0xff]
    %v332 = vpack.c.bf16 %v328, %v328
    %v333 = vld [vmem:[#allocation4] sm:$0xff]
    %v334 = vld [vmem:[#allocation4 + $0x8] sm:$0xf]
    %v335 = vld [vmem:[#allocation4 + $0xc] sm:$0xff]
    %v336 = vld [vmem:[#allocation4 + $0x14] sm:$0xf]
    %v337 = vld [vmem:[#allocation4 + $0x18] sm:$0xff]
    %v338 = vld [vmem:[#allocation4 + $0x20] sm:$0xf]
    %v339 = vld [vmem:[#allocation4 + $0x24] sm:$0xff]
    %v340 = vld [vmem:[#allocation4 + $0x2c] sm:$0xf]
    %v341 = vld [vmem:[#allocation4 + $0x30] sm:$0xff]
    %v342 = vld [vmem:[#allocation4 + $0x38] sm:$0xf]
    %v343 = vld [vmem:[#allocation4 + $0x3c] sm:$0xff]
    %v344 = vld [vmem:[#allocation4 + $0x44] sm:$0xf]
    %v345 = vld [vmem:[#allocation4 + $0x48] sm:$0xff]
    %v346 = vld [vmem:[#allocation4 + $0x50] sm:$0xf]
    %v347 = vld [vmem:[#allocation4 + $0x54] sm:$0xff]
    %v348 = vld [vmem:[#allocation4 + $0x5c] sm:$0xf]
    %v349 = vld [vmem:[#allocation4 + $0x60] sm:$0xff]
    %v350 = vld [vmem:[#allocation4 + $0x68] sm:$0xf]
    %v351 = vld [vmem:[#allocation4 + $0x6c] sm:$0xff]
    %v352 = vld [vmem:[#allocation4 + $0x74] sm:$0xf]
    %v353 = vld [vmem:[#allocation4 + $0x78] sm:$0xff]
    %v354 = vld [vmem:[#allocation4 + $0x80] sm:$0xf]
    %v355 = vld [vmem:[#allocation4 + $0x84] sm:$0xff]
    %v356 = vld [vmem:[#allocation4 + $0x8c] sm:$0xf]
    %v357 = vld [vmem:[#allocation4 + $0x90] sm:$0xff]
    %v358 = vld [vmem:[#allocation4 + $0x98] sm:$0xf]
    %v359 = vld [vmem:[#allocation4 + $0x9c] sm:$0xff]
    %v360 = vld [vmem:[#allocation4 + $0xa4] sm:$0xf]
    %v361 = vld [vmem:[#allocation4 + $0xa8] sm:$0xff]
    %v362 = vld [vmem:[#allocation4 + $0xb0] sm:$0xf]
    %v363 = vld [vmem:[#allocation4 + $0xb4] sm:$0xff]
    %v364 = vld [vmem:[#allocation4 + $0xbc] sm:$0xf]
    %v397 = vunpack.c.l.b16 %v333
    %v398 = vunpack.c.h.b16 %v333
    %v399 = vunpack.c.l.b16 %v334
    %v400 = vunpack.c.l.b16 %v335
    %v401 = vunpack.c.h.b16 %v335
    %v402 = vunpack.c.l.b16 %v336
    %v403 = vunpack.c.l.b16 %v337
    %v404 = vunpack.c.h.b16 %v337
    %v405 = vunpack.c.l.b16 %v338
    %v406 = vunpack.c.l.b16 %v339
    %v407 = vunpack.c.h.b16 %v339
    %v408 = vunpack.c.l.b16 %v340
    %v409 = vunpack.c.l.b16 %v341
    %v410 = vunpack.c.h.b16 %v341
    %v411 = vunpack.c.l.b16 %v342
    %v412 = vunpack.c.l.b16 %v343
    %v413 = vunpack.c.h.b16 %v343
    %v414 = vunpack.c.l.b16 %v344
    %v415 = vunpack.c.l.b16 %v345
    %v416 = vunpack.c.h.b16 %v345
    %v417 = vunpack.c.l.b16 %v346
    %v418 = vunpack.c.l.b16 %v347
    %v419 = vunpack.c.h.b16 %v347
    %v420 = vunpack.c.l.b16 %v348
    %v421 = vunpack.c.l.b16 %v349
    %v422 = vunpack.c.h.b16 %v349
    %v423 = vunpack.c.l.b16 %v350
    %v424 = vunpack.c.l.b16 %v351
    %v425 = vunpack.c.h.b16 %v351
    %v426 = vunpack.c.l.b16 %v352
    %v427 = vunpack.c.l.b16 %v353
    %v428 = vunpack.c.h.b16 %v353
    %v429 = vunpack.c.l.b16 %v354
    %v430 = vunpack.c.l.b16 %v355
    %v431 = vunpack.c.h.b16 %v355
    %v432 = vunpack.c.l.b16 %v356
    %v433 = vunpack.c.l.b16 %v357
    %v434 = vunpack.c.h.b16 %v357
    %v435 = vunpack.c.l.b16 %v358
    %v436 = vunpack.c.l.b16 %v359
    %v437 = vunpack.c.h.b16 %v359
    %v438 = vunpack.c.l.b16 %v360
    %v439 = vunpack.c.l.b16 %v361
    %v440 = vunpack.c.h.b16 %v361
    %v441 = vunpack.c.l.b16 %v362
    %v442 = vunpack.c.l.b16 %v363
    %v443 = vunpack.c.h.b16 %v363
    %v444 = vunpack.c.l.b16 %v364
    %v445 = vpack.c.b16 %v400, %v397
    %v446 = vpack.c.b16 %v401, %v398
    %v447 = vpack.c.b16 %v402, %v399
    %v448 = vpack.c.b16 %v406, %v403
    %v449 = vpack.c.b16 %v407, %v404
    %v450 = vpack.c.b16 %v408, %v405
    %v451 = vpack.c.b16 %v412, %v409
    %v452 = vpack.c.b16 %v413, %v410
    %v453 = vpack.c.b16 %v414, %v411
    %v454 = vpack.c.b16 %v418, %v415
    %v455 = vpack.c.b16 %v419, %v416
    %v456 = vpack.c.b16 %v420, %v417
    %v457 = vpack.c.b16 %v424, %v421
    %v458 = vpack.c.b16 %v425, %v422
    %v459 = vpack.c.b16 %v426, %v423
    %v460 = vpack.c.b16 %v430, %v427
    %v461 = vpack.c.b16 %v431, %v428
    %v462 = vpack.c.b16 %v432, %v429
    %v463 = vpack.c.b16 %v436, %v433
    %v464 = vpack.c.b16 %v437, %v434
    %v465 = vpack.c.b16 %v438, %v435
    %v466 = vpack.c.b16 %v442, %v439
    %v467 = vpack.c.b16 %v443, %v440
    %v468 = vpack.c.b16 %v444, %v441
    %493 = vmatprep.subr.bf16.mxu0 %v467
    %494 = vmatpush1.bf16.msra.mxu0 %v466
    %495 = vmatprep.subr.bf16.mxu0 %v464
    %496 = vmatpush1.bf16.msra.mxu0 %v463
    %497 = vmatprep.subr.bf16.mxu0 %v461
    %498 = vmatpush1.bf16.msra.mxu0 %v460
    %499 = vmatprep.subr.bf16.mxu0 %v458
    %500 = vmatpush1.bf16.msra.mxu0 %v457
    %501 = vmatprep.subr.bf16.mxu0 %v455
    %502 = vmatpush1.bf16.msra.mxu0 %v454
    %503 = vmatprep.subr.bf16.mxu0 %v452
    %504 = vmatpush1.bf16.msra.mxu0 %v451
    %505 = vmatprep.subr.bf16.mxu0 %v449
    %506 = vmatpush1.bf16.msra.mxu0 %v448
    %507 = vmatprep.subr.bf16.mxu0 %v446
    %508 = vmatpush1.bf16.msra.mxu0 %v445
    %509 = vmatprep.subr.bf16.mxu0 0
    %510 = vmatpush2.bf16.msra.mxu0 0
    %511 = vmatprep.subr.bf16.mxu0 0
    %512 = vmatpush2.bf16.msra.mxu0 0
    %513 = vmatprep.subr.bf16.mxu0 0
    %514 = vmatpush2.bf16.msra.mxu0 0
    %515 = vmatprep.subr.bf16.mxu0 0
    %516 = vmatpush2.bf16.msra.mxu0 0
    %517 = vmatprep.subr.bf16.mxu0 0
    %518 = vmatpush2.bf16.msra.mxu0 0
    %519 = vmatprep.subr.bf16.mxu0 0
    %520 = vmatpush2.bf16.msra.mxu0 0
    %521 = vmatprep.subr.bf16.mxu0 0
    %522 = vmatpush2.bf16.msra.mxu0 0
    %523 = vmatprep.subr.bf16.mxu0 0
    %524 = vmatpush2.bf16.msra.mxu0 0
    %525 = vmatprep.mubr.bf16.mxu0 0
    %526 = vmatmul.mubr.bf16.gmra.mxu0 %v332
    %v527 = vpop.f32.mrf.mxu0
    %v528 = vadd.f32 0.0, %v527
    %v529 = vpop.f32.mrf.mxu0
    %v530 = vadd.f32 0.0, %v529
    %v531 = vpop.f32.mrf.mxu0
    %v532 = vpop.f32.mrf.mxu0
    %533 = vdwg.mxu0
    %534 = vmatprep.subr.bf16.mxu0 0
    %535 = vmatpush1.bf16.msra.mxu0 %v468
    %536 = vmatprep.subr.bf16.mxu0 0
    %537 = vmatpush1.bf16.msra.mxu0 %v465
    %538 = vmatprep.subr.bf16.mxu0 0
    %539 = vmatpush1.bf16.msra.mxu0 %v462
    %540 = vmatprep.subr.bf16.mxu0 0
    %541 = vmatpush1.bf16.msra.mxu0 %v459
    %542 = vmatprep.subr.bf16.mxu0 0
    %543 = vmatpush1.bf16.msra.mxu0 %v456
    %544 = vmatprep.subr.bf16.mxu0 0
    %545 = vmatpush1.bf16.msra.mxu0 %v453
    %546 = vmatprep.subr.bf16.mxu0 0
    %547 = vmatpush1.bf16.msra.mxu0 %v450
    %548 = vmatprep.subr.bf16.mxu0 0
    %549 = vmatpush1.bf16.msra.mxu0 %v447
    %550 = vmatprep.subr.bf16.mxu0 0
    %551 = vmatpush2.bf16.msra.mxu0 0
    %552 = vmatprep.subr.bf16.mxu0 0
    %553 = vmatpush2.bf16.msra.mxu0 0
    %554 = vmatprep.subr.bf16.mxu0 0
    %555 = vmatpush2.bf16.msra.mxu0 0
    %556 = vmatprep.subr.bf16.mxu0 0
    %557 = vmatpush2.bf16.msra.mxu0 0
    %558 = vmatprep.subr.bf16.mxu0 0
    %559 = vmatpush2.bf16.msra.mxu0 0
    %560 = vmatprep.subr.bf16.mxu0 0
    %561 = vmatpush2.bf16.msra.mxu0 0
    %562 = vmatprep.subr.bf16.mxu0 0
    %563 = vmatpush2.bf16.msra.mxu0 0
    %564 = vmatprep.subr.bf16.mxu0 0
    %565 = vmatpush2.bf16.msra.mxu0 0
    %566 = vmatprep.mubr.bf16.mxu0 0
    %567 = vmatmul.mubr.bf16.gmra.mxu0 %v332
    %v568 = vpop.f32.mrf.mxu0
    %v569 = vadd.f32 0.0, %v568
    %v570 = vpop.f32.mrf.mxu0
    %v571 = vpop.f32.mrf.mxu0
    %v572 = vpop.f32.mrf.mxu0
    %573 = vdwg.mxu0
    %v574 = vadd.f32 %v329, %v528
    %v575 = vxor.u32 %v574, 2147483648
    %v576 = vmul.f32 %v575, 1.442695
    %v577 = vpow.pop %v576
    %v578 = vadd.f32 %v577, 1.0
    %v579 = vrcp.pop %v578
    %v580 = vmul.f32 1.0, %v579
    %v581 = vadd.f32 %v330, %v530
    %v582 = vxor.u32 %v581, 2147483648
    %v583 = vmul.f32 %v582, 1.442695
    %v584 = vpow.pop %v583
    %v585 = vadd.f32 %v584, 1.0
    %v586 = vrcp.pop %v585
    %v587 = vmul.f32 1.0, %v586
    %v588 = vadd.f32 %v569, %v326
    %v589 = vmul.f32 %v580, %v588
    %v590 = vadd.f32 %v331, %v589
    %v591 = vtanh.pop %v590
    %v592 = vsub.f32 %v328, %v591
    %v593 = vmul.f32 %v587, %v592
    %v594 = vadd.f32 %v591, %v593
    %v595 = vpack.c.bf16 %v594, %v594
    %596 = vst [vmem:[#allocation3] sm:$0xf] %v595
    %v597 = vld [vmem:[#allocation2 + $0x18] sm:$0xff]
    %v598 = vld [vmem:[#allocation2 + $0x20] sm:$0xff]
    %v599 = vld [vmem:[#allocation2 + $0x28] sm:$0xff]
    %v600 = vld [vmem:[#allocation4] sm:$0xff]
    %v601 = vld [vmem:[#allocation4 + $0x8] sm:$0xf]
    %v602 = vld [vmem:[#allocation4 + $0xc] sm:$0xff]
    %v603 = vld [vmem:[#allocation4 + $0x14] sm:$0xf]
    %v604 = vld [vmem:[#allocation4 + $0x18] sm:$0xff]
    %v605 = vld [vmem:[#allocation4 + $0x20] sm:$0xf]
    %v606 = vld [vmem:[#allocation4 + $0x24] sm:$0xff]
    %v607 = vld [vmem:[#allocation4 + $0x2c] sm:$0xf]
    %v608 = vld [vmem:[#allocation4 + $0x30] sm:$0xff]
    %v609 = vld [vmem:[#allocation4 + $0x38] sm:$0xf]
    %v610 = vld [vmem:[#allocation4 + $0x3c] sm:$0xff]
    %v611 = vld [vmem:[#allocation4 + $0x44] sm:$0xf]
    %v612 = vld [vmem:[#allocation4 + $0x48] sm:$0xff]
    %v613 = vld [vmem:[#allocation4 + $0x50] sm:$0xf]
    %v614 = vld [vmem:[#allocation4 + $0x54] sm:$0xff]
    %v615 = vld [vmem:[#allocation4 + $0x5c] sm:$0xf]
    %v616 = vld [vmem:[#allocation4 + $0x60] sm:$0xff]
    %v617 = vld [vmem:[#allocation4 + $0x68] sm:$0xf]
    %v618 = vld [vmem:[#allocation4 + $0x6c] sm:$0xff]
    %v619 = vld [vmem:[#allocation4 + $0x74] sm:$0xf]
    %v620 = vld [vmem:[#allocation4 + $0x78] sm:$0xff]
    %v621 = vld [vmem:[#allocation4 + $0x80] sm:$0xf]
    %v622 = vld [vmem:[#allocation4 + $0x84] sm:$0xff]
    %v623 = vld [vmem:[#allocation4 + $0x8c] sm:$0xf]
    %v624 = vld [vmem:[#allocation4 + $0x90] sm:$0xff]
    %v625 = vld [vmem:[#allocation4 + $0x98] sm:$0xf]
    %v626 = vld [vmem:[#allocation4 + $0x9c] sm:$0xff]
    %v627 = vld [vmem:[#allocation4 + $0xa4] sm:$0xf]
    %v628 = vld [vmem:[#allocation4 + $0xa8] sm:$0xff]
    %v629 = vld [vmem:[#allocation4 + $0xb0] sm:$0xf]
    %v630 = vld [vmem:[#allocation4 + $0xb4] sm:$0xff]
    %v631 = vld [vmem:[#allocation4 + $0xbc] sm:$0xf]
    %v664 = vunpack.c.l.b16 %v600
    %v665 = vunpack.c.h.b16 %v600
    %v666 = vunpack.c.l.b16 %v601
    %v667 = vunpack.c.l.b16 %v602
    %v668 = vunpack.c.h.b16 %v602
    %v669 = vunpack.c.l.b16 %v603
    %v670 = vunpack.c.l.b16 %v604
    %v671 = vunpack.c.h.b16 %v604
    %v672 = vunpack.c.l.b16 %v605
    %v673 = vunpack.c.l.b16 %v606
    %v674 = vunpack.c.h.b16 %v606
    %v675 = vunpack.c.l.b16 %v607
    %v676 = vunpack.c.l.b16 %v608
    %v677 = vunpack.c.h.b16 %v608
    %v678 = vunpack.c.l.b16 %v609
    %v679 = vunpack.c.l.b16 %v610
    %v680 = vunpack.c.h.b16 %v610
    %v681 = vunpack.c.l.b16 %v611
    %v682 = vunpack.c.l.b16 %v612
    %v683 = vunpack.c.h.b16 %v612
    %v684 = vunpack.c.l.b16 %v613
    %v685 = vunpack.c.l.b16 %v614
    %v686 = vunpack.c.h.b16 %v614
    %v687 = vunpack.c.l.b16 %v615
    %v688 = vunpack.c.l.b16 %v616
    %v689 = vunpack.c.h.b16 %v616
    %v690 = vunpack.c.l.b16 %v617
    %v691 = vunpack.c.l.b16 %v618
    %v692 = vunpack.c.h.b16 %v618
    %v693 = vunpack.c.l.b16 %v619
    %v694 = vunpack.c.l.b16 %v620
    %v695 = vunpack.c.h.b16 %v620
    %v696 = vunpack.c.l.b16 %v621
    %v697 = vunpack.c.l.b16 %v622
    %v698 = vunpack.c.h.b16 %v622
    %v699 = vunpack.c.l.b16 %v623
    %v700 = vunpack.c.l.b16 %v624
    %v701 = vunpack.c.h.b16 %v624
    %v702 = vunpack.c.l.b16 %v625
    %v703 = vunpack.c.l.b16 %v626
    %v704 = vunpack.c.h.b16 %v626
    %v705 = vunpack.c.l.b16 %v627
    %v706 = vunpack.c.l.b16 %v628
    %v707 = vunpack.c.h.b16 %v628
    %v708 = vunpack.c.l.b16 %v629
    %v709 = vunpack.c.l.b16 %v630
    %v710 = vunpack.c.h.b16 %v630
    %v711 = vunpack.c.l.b16 %v631
    %v712 = vpack.c.b16 %v667, %v664
    %v713 = vpack.c.b16 %v668, %v665
    %v714 = vpack.c.b16 %v669, %v666
    %v715 = vpack.c.b16 %v673, %v670
    %v716 = vpack.c.b16 %v674, %v671
    %v717 = vpack.c.b16 %v675, %v672
    %v718 = vpack.c.b16 %v679, %v676
    %v719 = vpack.c.b16 %v680, %v677
    %v720 = vpack.c.b16 %v681, %v678
    %v721 = vpack.c.b16 %v685, %v682
    %v722 = vpack.c.b16 %v686, %v683
    %v723 = vpack.c.b16 %v687, %v684
    %v724 = vpack.c.b16 %v691, %v688
    %v725 = vpack.c.b16 %v692, %v689
    %v726 = vpack.c.b16 %v693, %v690
    %v727 = vpack.c.b16 %v697, %v694
    %v728 = vpack.c.b16 %v698, %v695
    %v729 = vpack.c.b16 %v699, %v696
    %v730 = vpack.c.b16 %v703, %v700
    %v731 = vpack.c.b16 %v704, %v701
    %v732 = vpack.c.b16 %v705, %v702
    %v733 = vpack.c.b16 %v709, %v706
    %v734 = vpack.c.b16 %v710, %v707
    %v735 = vpack.c.b16 %v711, %v708
    %760 = vmatprep.subr.bf16.mxu0 %v734
    %761 = vmatpush1.bf16.msra.mxu0 %v733
    %762 = vmatprep.subr.bf16.mxu0 %v731
    %763 = vmatpush1.bf16.msra.mxu0 %v730
    %764 = vmatprep.subr.bf16.mxu0 %v728
    %765 = vmatpush1.bf16.msra.mxu0 %v727
    %766 = vmatprep.subr.bf16.mxu0 %v725
    %767 = vmatpush1.bf16.msra.mxu0 %v724
    %768 = vmatprep.subr.bf16.mxu0 %v722
    %769 = vmatpush1.bf16.msra.mxu0 %v721
    %770 = vmatprep.subr.bf16.mxu0 %v719
    %771 = vmatpush1.bf16.msra.mxu0 %v718
    %772 = vmatprep.subr.bf16.mxu0 %v716
    %773 = vmatpush1.bf16.msra.mxu0 %v715
    %774 = vmatprep.subr.bf16.mxu0 %v713
    %775 = vmatpush1.bf16.msra.mxu0 %v712
    %776 = vmatprep.subr.bf16.mxu0 0
    %777 = vmatpush2.bf16.msra.mxu0 0
    %778 = vmatprep.subr.bf16.mxu0 0
    %779 = vmatpush2.bf16.msra.mxu0 0
    %780 = vmatprep.subr.bf16.mxu0 0
    %781 = vmatpush2.bf16.msra.mxu0 0
    %782 = vmatprep.subr.bf16.mxu0 0
    %783 = vmatpush2.bf16.msra.mxu0 0
    %784 = vmatprep.subr.bf16.mxu0 0
    %785 = vmatpush2.bf16.msra.mxu0 0
    %786 = vmatprep.subr.bf16.mxu0 0
    %787 = vmatpush2.bf16.msra.mxu0 0
    %788 = vmatprep.subr.bf16.mxu0 0
    %789 = vmatpush2.bf16.msra.mxu0 0
    %790 = vmatprep.subr.bf16.mxu0 0
    %791 = vmatpush2.bf16.msra.mxu0 0
    %792 = vmatprep.mubr.bf16.mxu0 0
    %793 = vmatmul.mubr.bf16.gmra.mxu0 %v595
    %v794 = vpop.f32.mrf.mxu0
    %v795 = vadd.f32 0.0, %v794
    %v796 = vpop.f32.mrf.mxu0
    %v797 = vadd.f32 0.0, %v796
    %v798 = vpop.f32.mrf.mxu0
    %v799 = vpop.f32.mrf.mxu0
    %800 = vdwg.mxu0
    %801 = vmatprep.subr.bf16.mxu0 0
    %802 = vmatpush1.bf16.msra.mxu0 %v735
    %803 = vmatprep.subr.bf16.mxu0 0
    %804 = vmatpush1.bf16.msra.mxu0 %v732
    %805 = vmatprep.subr.bf16.mxu0 0
    %806 = vmatpush1.bf16.msra.mxu0 %v729
    %807 = vmatprep.subr.bf16.mxu0 0
    %808 = vmatpush1.bf16.msra.mxu0 %v726
    %809 = vmatprep.subr.bf16.mxu0 0
    %810 = vmatpush1.bf16.msra.mxu0 %v723
    %811 = vmatprep.subr.bf16.mxu0 0
    %812 = vmatpush1.bf16.msra.mxu0 %v720
    %813 = vmatprep.subr.bf16.mxu0 0
    %814 = vmatpush1.bf16.msra.mxu0 %v717
    %815 = vmatprep.subr.bf16.mxu0 0
    %816 = vmatpush1.bf16.msra.mxu0 %v714
    %817 = vmatprep.subr.bf16.mxu0 0
    %818 = vmatpush2.bf16.msra.mxu0 0
    %819 = vmatprep.subr.bf16.mxu0 0
    %820 = vmatpush2.bf16.msra.mxu0 0
    %821 = vmatprep.subr.bf16.mxu0 0
    %822 = vmatpush2.bf16.msra.mxu0 0
    %823 = vmatprep.subr.bf16.mxu0 0
    %824 = vmatpush2.bf16.msra.mxu0 0
    %825 = vmatprep.subr.bf16.mxu0 0
    %826 = vmatpush2.bf16.msra.mxu0 0
    %827 = vmatprep.subr.bf16.mxu0 0
    %828 = vmatpush2.bf16.msra.mxu0 0
    %829 = vmatprep.subr.bf16.mxu0 0
    %830 = vmatpush2.bf16.msra.mxu0 0
    %831 = vmatprep.subr.bf16.mxu0 0
    %832 = vmatpush2.bf16.msra.mxu0 0
    %833 = vmatprep.mubr.bf16.mxu0 0
    %834 = vmatmul.mubr.bf16.gmra.mxu0 %v595
    %v835 = vpop.f32.mrf.mxu0
    %v836 = vadd.f32 0.0, %v835
    %v837 = vpop.f32.mrf.mxu0
    %v838 = vpop.f32.mrf.mxu0
    %v839 = vpop.f32.mrf.mxu0
    %840 = vdwg.mxu0
    %v841 = vadd.f32 %v597, %v795
    %v842 = vxor.u32 %v841, 2147483648
    %v843 = vmul.f32 %v842, 1.442695
    %v844 = vpow.pop %v843
    %v845 = vadd.f32 %v844, 1.0
    %v846 = vrcp.pop %v845
    %v847 = vmul.f32 1.0, %v846
    %v848 = vadd.f32 %v598, %v797
    %v849 = vxor.u32 %v848, 2147483648
    %v850 = vmul.f32 %v849, 1.442695
    %v851 = vpow.pop %v850
    %v852 = vadd.f32 %v851, 1.0
    %v853 = vrcp.pop %v852
    %v854 = vmul.f32 1.0, %v853
    %v855 = vadd.f32 %v836, %v326
    %v856 = vmul.f32 %v847, %v855
    %v857 = vadd.f32 %v599, %v856
    %v858 = vtanh.pop %v857
    %v859 = vsub.f32 %v594, %v858
    %v860 = vmul.f32 %v854, %v859
    %v861 = vadd.f32 %v858, %v860
    %v862 = vpack.c.bf16 %v861, %v861
    %863 = vst [vmem:[#allocation3 + $0x4] sm:$0xf] %v862
    %v864 = vld [vmem:[#allocation2 + $0x30] sm:$0xff]
    %v865 = vld [vmem:[#allocation2 + $0x38] sm:$0xff]
    %v866 = vld [vmem:[#allocation2 + $0x40] sm:$0xff]
    %v867 = vld [vmem:[#allocation4] sm:$0xff]
    %v868 = vld [vmem:[#allocation4 + $0x8] sm:$0xf]
    %v869 = vld [vmem:[#allocation4 + $0xc] sm:$0xff]
    %v870 = vld [vmem:[#allocation4 + $0x14] sm:$0xf]
    %v871 = vld [vmem:[#allocation4 + $0x18] sm:$0xff]
    %v872 = vld [vmem:[#allocation4 + $0x20] sm:$0xf]
    %v873 = vld [vmem:[#allocation4 + $0x24] sm:$0xff]
    %v874 = vld [vmem:[#allocation4 + $0x2c] sm:$0xf]
    %v875 = vld [vmem:[#allocation4 + $0x30] sm:$0xff]
    %v876 = vld [vmem:[#allocation4 + $0x38] sm:$0xf]
    %v877 = vld [vmem:[#allocation4 + $0x3c] sm:$0xff]
    %v878 = vld [vmem:[#allocation4 + $0x44] sm:$0xf]
    %v879 = vld [vmem:[#allocation4 + $0x48] sm:$0xff]
    %v880 = vld [vmem:[#allocation4 + $0x50] sm:$0xf]
    %v881 = vld [vmem:[#allocation4 + $0x54] sm:$0xff]
    %v882 = vld [vmem:[#allocation4 + $0x5c] sm:$0xf]
    %v883 = vld [vmem:[#allocation4 + $0x60] sm:$0xff]
    %v884 = vld [vmem:[#allocation4 + $0x68] sm:$0xf]
    %v885 = vld [vmem:[#allocation4 + $0x6c] sm:$0xff]
    %v886 = vld [vmem:[#allocation4 + $0x74] sm:$0xf]
    %v887 = vld [vmem:[#allocation4 + $0x78] sm:$0xff]
    %v888 = vld [vmem:[#allocation4 + $0x80] sm:$0xf]
    %v889 = vld [vmem:[#allocation4 + $0x84] sm:$0xff]
    %v890 = vld [vmem:[#allocation4 + $0x8c] sm:$0xf]
    %v891 = vld [vmem:[#allocation4 + $0x90] sm:$0xff]
    %v892 = vld [vmem:[#allocation4 + $0x98] sm:$0xf]
    %v893 = vld [vmem:[#allocation4 + $0x9c] sm:$0xff]
    %v894 = vld [vmem:[#allocation4 + $0xa4] sm:$0xf]
    %v895 = vld [vmem:[#allocation4 + $0xa8] sm:$0xff]
    %v896 = vld [vmem:[#allocation4 + $0xb0] sm:$0xf]
    %v897 = vld [vmem:[#allocation4 + $0xb4] sm:$0xff]
    %v898 = vld [vmem:[#allocation4 + $0xbc] sm:$0xf]
    %v931 = vunpack.c.l.b16 %v867
    %v932 = vunpack.c.h.b16 %v867
    %v933 = vunpack.c.l.b16 %v868
    %v934 = vunpack.c.l.b16 %v869
    %v935 = vunpack.c.h.b16 %v869
    %v936 = vunpack.c.l.b16 %v870
    %v937 = vunpack.c.l.b16 %v871
    %v938 = vunpack.c.h.b16 %v871
    %v939 = vunpack.c.l.b16 %v872
    %v940 = vunpack.c.l.b16 %v873
    %v941 = vunpack.c.h.b16 %v873
    %v942 = vunpack.c.l.b16 %v874
    %v943 = vunpack.c.l.b16 %v875
    %v944 = vunpack.c.h.b16 %v875
    %v945 = vunpack.c.l.b16 %v876
    %v946 = vunpack.c.l.b16 %v877
    %v947 = vunpack.c.h.b16 %v877
    %v948 = vunpack.c.l.b16 %v878
    %v949 = vunpack.c.l.b16 %v879
    %v950 = vunpack.c.h.b16 %v879
    %v951 = vunpack.c.l.b16 %v880
    %v952 = vunpack.c.l.b16 %v881
    %v953 = vunpack.c.h.b16 %v881
    %v954 = vunpack.c.l.b16 %v882
    %v955 = vunpack.c.l.b16 %v883
    %v956 = vunpack.c.h.b16 %v883
    %v957 = vunpack.c.l.b16 %v884
    %v958 = vunpack.c.l.b16 %v885
    %v959 = vunpack.c.h.b16 %v885
    %v960 = vunpack.c.l.b16 %v886
    %v961 = vunpack.c.l.b16 %v887
    %v962 = vunpack.c.h.b16 %v887
    %v963 = vunpack.c.l.b16 %v888
    %v964 = vunpack.c.l.b16 %v889
    %v965 = vunpack.c.h.b16 %v889
    %v966 = vunpack.c.l.b16 %v890
    %v967 = vunpack.c.l.b16 %v891
    %v968 = vunpack.c.h.b16 %v891
    %v969 = vunpack.c.l.b16 %v892
    %v970 = vunpack.c.l.b16 %v893
    %v971 = vunpack.c.h.b16 %v893
    %v972 = vunpack.c.l.b16 %v894
    %v973 = vunpack.c.l.b16 %v895
    %v974 = vunpack.c.h.b16 %v895
    %v975 = vunpack.c.l.b16 %v896
    %v976 = vunpack.c.l.b16 %v897
    %v977 = vunpack.c.h.b16 %v897
    %v978 = vunpack.c.l.b16 %v898
    %v979 = vpack.c.b16 %v934, %v931
    %v980 = vpack.c.b16 %v935, %v932
    %v981 = vpack.c.b16 %v936, %v933
    %v982 = vpack.c.b16 %v940, %v937
    %v983 = vpack.c.b16 %v941, %v938
    %v984 = vpack.c.b16 %v942, %v939
    %v985 = vpack.c.b16 %v946, %v943
    %v986 = vpack.c.b16 %v947, %v944
    %v987 = vpack.c.b16 %v948, %v945
    %v988 = vpack.c.b16 %v952, %v949
    %v989 = vpack.c.b16 %v953, %v950
    %v990 = vpack.c.b16 %v954, %v951
    %v991 = vpack.c.b16 %v958, %v955
    %v992 = vpack.c.b16 %v959, %v956
    %v993 = vpack.c.b16 %v960, %v957
    %v994 = vpack.c.b16 %v964, %v961
    %v995 = vpack.c.b16 %v965, %v962
    %v996 = vpack.c.b16 %v966, %v963
    %v997 = vpack.c.b16 %v970, %v967
    %v998 = vpack.c.b16 %v971, %v968
    %v999 = vpack.c.b16 %v972, %v969
    %v1000 = vpack.c.b16 %v976, %v973
    %v1001 = vpack.c.b16 %v977, %v974
    %v1002 = vpack.c.b16 %v978, %v975
    %1027 = vmatprep.subr.bf16.mxu0 %v1001
    %1028 = vmatpush1.bf16.msra.mxu0 %v1000
    %1029 = vmatprep.subr.bf16.mxu0 %v998
    %1030 = vmatpush1.bf16.msra.mxu0 %v997
    %1031 = vmatprep.subr.bf16.mxu0 %v995
    %1032 = vmatpush1.bf16.msra.mxu0 %v994
    %1033 = vmatprep.subr.bf16.mxu0 %v992
    %1034 = vmatpush1.bf16.msra.mxu0 %v991
    %1035 = vmatprep.subr.bf16.mxu0 %v989
    %1036 = vmatpush1.bf16.msra.mxu0 %v988
    %1037 = vmatprep.subr.bf16.mxu0 %v986
    %1038 = vmatpush1.bf16.msra.mxu0 %v985
    %1039 = vmatprep.subr.bf16.mxu0 %v983
    %1040 = vmatpush1.bf16.msra.mxu0 %v982
    %1041 = vmatprep.subr.bf16.mxu0 %v980
    %1042 = vmatpush1.bf16.msra.mxu0 %v979
    %1043 = vmatprep.subr.bf16.mxu0 0
    %1044 = vmatpush2.bf16.msra.mxu0 0
    %1045 = vmatprep.subr.bf16.mxu0 0
    %1046 = vmatpush2.bf16.msra.mxu0 0
    %1047 = vmatprep.subr.bf16.mxu0 0
    %1048 = vmatpush2.bf16.msra.mxu0 0
    %1049 = vmatprep.subr.bf16.mxu0 0
    %1050 = vmatpush2.bf16.msra.mxu0 0
    %1051 = vmatprep.subr.bf16.mxu0 0
    %1052 = vmatpush2.bf16.msra.mxu0 0
    %1053 = vmatprep.subr.bf16.mxu0 0
    %1054 = vmatpush2.bf16.msra.mxu0 0
    %1055 = vmatprep.subr.bf16.mxu0 0
    %1056 = vmatpush2.bf16.msra.mxu0 0
    %1057 = vmatprep.subr.bf16.mxu0 0
    %1058 = vmatpush2.bf16.msra.mxu0 0
    %1059 = vmatprep.mubr.bf16.mxu0 0
    %1060 = vmatmul.mubr.bf16.gmra.mxu0 %v862
    %v1061 = vpop.f32.mrf.mxu0
    %v1062 = vadd.f32 0.0, %v1061
    %v1063 = vpop.f32.mrf.mxu0
    %v1064 = vadd.f32 0.0, %v1063
    %v1065 = vpop.f32.mrf.mxu0
    %v1066 = vpop.f32.mrf.mxu0
    %1067 = vdwg.mxu0
    %1068 = vmatprep.subr.bf16.mxu0 0
    %1069 = vmatpush1.bf16.msra.mxu0 %v1002
    %1070 = vmatprep.subr.bf16.mxu0 0
    %1071 = vmatpush1.bf16.msra.mxu0 %v999
    %1072 = vmatprep.subr.bf16.mxu0 0
    %1073 = vmatpush1.bf16.msra.mxu0 %v996
    %1074 = vmatprep.subr.bf16.mxu0 0
    %1075 = vmatpush1.bf16.msra.mxu0 %v993
    %1076 = vmatprep.subr.bf16.mxu0 0
    %1077 = vmatpush1.bf16.msra.mxu0 %v990
    %1078 = vmatprep.subr.bf16.mxu0 0
    %1079 = vmatpush1.bf16.msra.mxu0 %v987
    %1080 = vmatprep.subr.bf16.mxu0 0
    %1081 = vmatpush1.bf16.msra.mxu0 %v984
    %1082 = vmatprep.subr.bf16.mxu0 0
    %1083 = vmatpush1.bf16.msra.mxu0 %v981
    %1084 = vmatprep.subr.bf16.mxu0 0
    %1085 = vmatpush2.bf16.msra.mxu0 0
    %1086 = vmatprep.subr.bf16.mxu0 0
    %1087 = vmatpush2.bf16.msra.mxu0 0
    %1088 = vmatprep.subr.bf16.mxu0 0
    %1089 = vmatpush2.bf16.msra.mxu0 0
    %1090 = vmatprep.subr.bf16.mxu0 0
    %1091 = vmatpush2.bf16.msra.mxu0 0
    %1092 = vmatprep.subr.bf16.mxu0 0
    %1093 = vmatpush2.bf16.msra.mxu0 0
    %1094 = vmatprep.subr.bf16.mxu0 0
    %1095 = vmatpush2.bf16.msra.mxu0 0
    %1096 = vmatprep.subr.bf16.mxu0 0
    %1097 = vmatpush2.bf16.msra.mxu0 0
    %1098 = vmatprep.subr.bf16.mxu0 0
    %1099 = vmatpush2.bf16.msra.mxu0 0
    %1100 = vmatprep.mubr.bf16.mxu0 0
    %1101 = vmatmul.mubr.bf16.gmra.mxu0 %v862
    %v1102 = vpop.f32.mrf.mxu0
    %v1103 = vadd.f32 0.0, %v1102
    %v1104 = vpop.f32.mrf.mxu0
    %v1105 = vpop.f32.mrf.mxu0
    %v1106 = vpop.f32.mrf.mxu0
    %1107 = vdwg.mxu0
    %v1108 = vadd.f32 %v864, %v1062
    %v1109 = vxor.u32 %v1108, 2147483648
    %v1110 = vmul.f32 %v1109, 1.442695
    %v1111 = vpow.pop %v1110
    %v1112 = vadd.f32 %v1111, 1.0
    %v1113 = vrcp.pop %v1112
    %v1114 = vmul.f32 1.0, %v1113
    %v1115 = vadd.f32 %v865, %v1064
    %v1116 = vxor.u32 %v1115, 2147483648
    %v1117 = vmul.f32 %v1116, 1.442695
    %v1118 = vpow.pop %v1117
    %v1119 = vadd.f32 %v1118, 1.0
    %v1120 = vrcp.pop %v1119
    %v1121 = vmul.f32 1.0, %v1120
    %v1122 = vadd.f32 %v1103, %v326
    %v1123 = vmul.f32 %v1114, %v1122
    %v1124 = vadd.f32 %v866, %v1123
    %v1125 = vtanh.pop %v1124
    %v1126 = vsub.f32 %v861, %v1125
    %v1127 = vmul.f32 %v1121, %v1126
    %v1128 = vadd.f32 %v1125, %v1127
    %v1129 = vpack.c.bf16 %v1128, %v1128
    %1130 = vst [vmem:[#allocation3 + $0x8] sm:$0xf] %v1129
    %v1131 = vld [vmem:[#allocation2 + $0x48] sm:$0xff]
    %v1132 = vld [vmem:[#allocation2 + $0x50] sm:$0xff]
    %v1133 = vld [vmem:[#allocation2 + $0x58] sm:$0xff]
    %v1134 = vld [vmem:[#allocation4] sm:$0xff]
    %v1135 = vld [vmem:[#allocation4 + $0x8] sm:$0xf]
    %v1136 = vld [vmem:[#allocation4 + $0xc] sm:$0xff]
    %v1137 = vld [vmem:[#allocation4 + $0x14] sm:$0xf]
    %v1138 = vld [vmem:[#allocation4 + $0x18] sm:$0xff]
    %v1139 = vld [vmem:[#allocation4 + $0x20] sm:$0xf]
    %v1140 = vld [vmem:[#allocation4 + $0x24] sm:$0xff]
    %v1141 = vld [vmem:[#allocation4 + $0x2c] sm:$0xf]
    %v1142 = vld [vmem:[#allocation4 + $0x30] sm:$0xff]
    %v1143 = vld [vmem:[#allocation4 + $0x38] sm:$0xf]
    %v1144 = vld [vmem:[#allocation4 + $0x3c] sm:$0xff]
    %v1145 = vld [vmem:[#allocation4 + $0x44] sm:$0xf]
    %v1146 = vld [vmem:[#allocation4 + $0x48] sm:$0xff]
    %v1147 = vld [vmem:[#allocation4 + $0x50] sm:$0xf]
    %v1148 = vld [vmem:[#allocation4 + $0x54] sm:$0xff]
    %v1149 = vld [vmem:[#allocation4 + $0x5c] sm:$0xf]
    %v1150 = vld [vmem:[#allocation4 + $0x60] sm:$0xff]
    %v1151 = vld [vmem:[#allocation4 + $0x68] sm:$0xf]
    %v1152 = vld [vmem:[#allocation4 + $0x6c] sm:$0xff]
    %v1153 = vld [vmem:[#allocation4 + $0x74] sm:$0xf]
    %v1154 = vld [vmem:[#allocation4 + $0x78] sm:$0xff]
    %v1155 = vld [vmem:[#allocation4 + $0x80] sm:$0xf]
    %v1156 = vld [vmem:[#allocation4 + $0x84] sm:$0xff]
    %v1157 = vld [vmem:[#allocation4 + $0x8c] sm:$0xf]
    %v1158 = vld [vmem:[#allocation4 + $0x90] sm:$0xff]
    %v1159 = vld [vmem:[#allocation4 + $0x98] sm:$0xf]
    %v1160 = vld [vmem:[#allocation4 + $0x9c] sm:$0xff]
    %v1161 = vld [vmem:[#allocation4 + $0xa4] sm:$0xf]
    %v1162 = vld [vmem:[#allocation4 + $0xa8] sm:$0xff]
    %v1163 = vld [vmem:[#allocation4 + $0xb0] sm:$0xf]
    %v1164 = vld [vmem:[#allocation4 + $0xb4] sm:$0xff]
    %v1165 = vld [vmem:[#allocation4 + $0xbc] sm:$0xf]
    %v1198 = vunpack.c.l.b16 %v1134
    %v1199 = vunpack.c.h.b16 %v1134
    %v1200 = vunpack.c.l.b16 %v1135
    %v1201 = vunpack.c.l.b16 %v1136
    %v1202 = vunpack.c.h.b16 %v1136
    %v1203 = vunpack.c.l.b16 %v1137
    %v1204 = vunpack.c.l.b16 %v1138
    %v1205 = vunpack.c.h.b16 %v1138
    %v1206 = vunpack.c.l.b16 %v1139
    %v1207 = vunpack.c.l.b16 %v1140
    %v1208 = vunpack.c.h.b16 %v1140
    %v1209 = vunpack.c.l.b16 %v1141
    %v1210 = vunpack.c.l.b16 %v1142
    %v1211 = vunpack.c.h.b16 %v1142
    %v1212 = vunpack.c.l.b16 %v1143
    %v1213 = vunpack.c.l.b16 %v1144
    %v1214 = vunpack.c.h.b16 %v1144
    %v1215 = vunpack.c.l.b16 %v1145
    %v1216 = vunpack.c.l.b16 %v1146
    %v1217 = vunpack.c.h.b16 %v1146
    %v1218 = vunpack.c.l.b16 %v1147
    %v1219 = vunpack.c.l.b16 %v1148
    %v1220 = vunpack.c.h.b16 %v1148
    %v1221 = vunpack.c.l.b16 %v1149
    %v1222 = vunpack.c.l.b16 %v1150
    %v1223 = vunpack.c.h.b16 %v1150
    %v1224 = vunpack.c.l.b16 %v1151
    %v1225 = vunpack.c.l.b16 %v1152
    %v1226 = vunpack.c.h.b16 %v1152
    %v1227 = vunpack.c.l.b16 %v1153
    %v1228 = vunpack.c.l.b16 %v1154
    %v1229 = vunpack.c.h.b16 %v1154
    %v1230 = vunpack.c.l.b16 %v1155
    %v1231 = vunpack.c.l.b16 %v1156
    %v1232 = vunpack.c.h.b16 %v1156
    %v1233 = vunpack.c.l.b16 %v1157
    %v1234 = vunpack.c.l.b16 %v1158
    %v1235 = vunpack.c.h.b16 %v1158
    %v1236 = vunpack.c.l.b16 %v1159
    %v1237 = vunpack.c.l.b16 %v1160
    %v1238 = vunpack.c.h.b16 %v1160
    %v1239 = vunpack.c.l.b16 %v1161
    %v1240 = vunpack.c.l.b16 %v1162
    %v1241 = vunpack.c.h.b16 %v1162
    %v1242 = vunpack.c.l.b16 %v1163
    %v1243 = vunpack.c.l.b16 %v1164
    %v1244 = vunpack.c.h.b16 %v1164
    %v1245 = vunpack.c.l.b16 %v1165
    %v1246 = vpack.c.b16 %v1201, %v1198
    %v1247 = vpack.c.b16 %v1202, %v1199
    %v1248 = vpack.c.b16 %v1203, %v1200
    %v1249 = vpack.c.b16 %v1207, %v1204
    %v1250 = vpack.c.b16 %v1208, %v1205
    %v1251 = vpack.c.b16 %v1209, %v1206
    %v1252 = vpack.c.b16 %v1213, %v1210
    %v1253 = vpack.c.b16 %v1214, %v1211
    %v1254 = vpack.c.b16 %v1215, %v1212
    %v1255 = vpack.c.b16 %v1219, %v1216
    %v1256 = vpack.c.b16 %v1220, %v1217
    %v1257 = vpack.c.b16 %v1221, %v1218
    %v1258 = vpack.c.b16 %v1225, %v1222
    %v1259 = vpack.c.b16 %v1226, %v1223
    %v1260 = vpack.c.b16 %v1227, %v1224
    %v1261 = vpack.c.b16 %v1231, %v1228
    %v1262 = vpack.c.b16 %v1232, %v1229
    %v1263 = vpack.c.b16 %v1233, %v1230
    %v1264 = vpack.c.b16 %v1237, %v1234
    %v1265 = vpack.c.b16 %v1238, %v1235
    %v1266 = vpack.c.b16 %v1239, %v1236
    %v1267 = vpack.c.b16 %v1243, %v1240
    %v1268 = vpack.c.b16 %v1244, %v1241
    %v1269 = vpack.c.b16 %v1245, %v1242
    %1294 = vmatprep.subr.bf16.mxu0 %v1268
    %1295 = vmatpush1.bf16.msra.mxu0 %v1267
    %1296 = vmatprep.subr.bf16.mxu0 %v1265
    %1297 = vmatpush1.bf16.msra.mxu0 %v1264
    %1298 = vmatprep.subr.bf16.mxu0 %v1262
    %1299 = vmatpush1.bf16.msra.mxu0 %v1261
    %1300 = vmatprep.subr.bf16.mxu0 %v1259
    %1301 = vmatpush1.bf16.msra.mxu0 %v1258
    %1302 = vmatprep.subr.bf16.mxu0 %v1256
    %1303 = vmatpush1.bf16.msra.mxu0 %v1255
    %1304 = vmatprep.subr.bf16.mxu0 %v1253
    %1305 = vmatpush1.bf16.msra.mxu0 %v1252
    %1306 = vmatprep.subr.bf16.mxu0 %v1250
    %1307 = vmatpush1.bf16.msra.mxu0 %v1249
    %1308 = vmatprep.subr.bf16.mxu0 %v1247
    %1309 = vmatpush1.bf16.msra.mxu0 %v1246
    %1310 = vmatprep.subr.bf16.mxu0 0
    %1311 = vmatpush2.bf16.msra.mxu0 0
    %1312 = vmatprep.subr.bf16.mxu0 0
    %1313 = vmatpush2.bf16.msra.mxu0 0
    %1314 = vmatprep.subr.bf16.mxu0 0
    %1315 = vmatpush2.bf16.msra.mxu0 0
    %1316 = vmatprep.subr.bf16.mxu0 0
    %1317 = vmatpush2.bf16.msra.mxu0 0
    %1318 = vmatprep.subr.bf16.mxu0 0
    %1319 = vmatpush2.bf16.msra.mxu0 0
    %1320 = vmatprep.subr.bf16.mxu0 0
    %1321 = vmatpush2.bf16.msra.mxu0 0
    %1322 = vmatprep.subr.bf16.mxu0 0
    %1323 = vmatpush2.bf16.msra.mxu0 0
    %1324 = vmatprep.subr.bf16.mxu0 0
    %1325 = vmatpush2.bf16.msra.mxu0 0
    %1326 = vmatprep.mubr.bf16.mxu0 0
    %1327 = vmatmul.mubr.bf16.gmra.mxu0 %v1129
    %v1328 = vpop.f32.mrf.mxu0
    %v1329 = vadd.f32 0.0, %v1328
    %v1330 = vpop.f32.mrf.mxu0
    %v1331 = vadd.f32 0.0, %v1330
    %v1332 = vpop.f32.mrf.mxu0
    %v1333 = vpop.f32.mrf.mxu0
    %1334 = vdwg.mxu0
    %1335 = vmatprep.subr.bf16.mxu0 0
    %1336 = vmatpush1.bf16.msra.mxu0 %v1269
    %1337 = vmatprep.subr.bf16.mxu0 0
    %1338 = vmatpush1.bf16.msra.mxu0 %v1266
    %1339 = vmatprep.subr.bf16.mxu0 0
    %1340 = vmatpush1.bf16.msra.mxu0 %v1263
    %1341 = vmatprep.subr.bf16.mxu0 0
    %1342 = vmatpush1.bf16.msra.mxu0 %v1260
    %1343 = vmatprep.subr.bf16.mxu0 0
    %1344 = vmatpush1.bf16.msra.mxu0 %v1257
    %1345 = vmatprep.subr.bf16.mxu0 0
    %1346 = vmatpush1.bf16.msra.mxu0 %v1254
    %1347 = vmatprep.subr.bf16.mxu0 0
    %1348 = vmatpush1.bf16.msra.mxu0 %v1251
    %1349 = vmatprep.subr.bf16.mxu0 0
    %1350 = vmatpush1.bf16.msra.mxu0 %v1248
    %1351 = vmatprep.subr.bf16.mxu0 0
    %1352 = vmatpush2.bf16.msra.mxu0 0
    %1353 = vmatprep.subr.bf16.mxu0 0
    %1354 = vmatpush2.bf16.msra.mxu0 0
    %1355 = vmatprep.subr.bf16.mxu0 0
    %1356 = vmatpush2.bf16.msra.mxu0 0
    %1357 = vmatprep.subr.bf16.mxu0 0
    %1358 = vmatpush2.bf16.msra.mxu0 0
    %1359 = vmatprep.subr.bf16.mxu0 0
    %1360 = vmatpush2.bf16.msra.mxu0 0
    %1361 = vmatprep.subr.bf16.mxu0 0
    %1362 = vmatpush2.bf16.msra.mxu0 0
    %1363 = vmatprep.subr.bf16.mxu0 0
    %1364 = vmatpush2.bf16.msra.mxu0 0
    %1365 = vmatprep.subr.bf16.mxu0 0
    %1366 = vmatpush2.bf16.msra.mxu0 0
    %1367 = vmatprep.mubr.bf16.mxu0 0
    %1368 = vmatmul.mubr.bf16.gmra.mxu0 %v1129
    %v1369 = vpop.f32.mrf.mxu0
    %v1370 = vadd.f32 0.0, %v1369
    %v1371 = vpop.f32.mrf.mxu0
    %v1372 = vpop.f32.mrf.mxu0
    %v1373 = vpop.f32.mrf.mxu0
    %1374 = vdwg.mxu0
    %v1375 = vadd.f32 %v1131, %v1329
    %v1376 = vxor.u32 %v1375, 2147483648
    %v1377 = vmul.f32 %v1376, 1.442695
    %v1378 = vpow.pop %v1377
    %v1379 = vadd.f32 %v1378, 1.0
    %v1380 = vrcp.pop %v1379
    %v1381 = vmul.f32 1.0, %v1380
    %v1382 = vadd.f32 %v1132, %v1331
    %v1383 = vxor.u32 %v1382, 2147483648
    %v1384 = vmul.f32 %v1383, 1.442695
    %v1385 = vpow.pop %v1384
    %v1386 = vadd.f32 %v1385, 1.0
    %v1387 = vrcp.pop %v1386
    %v1388 = vmul.f32 1.0, %v1387
    %v1389 = vadd.f32 %v1370, %v326
    %v1390 = vmul.f32 %v1381, %v1389
    %v1391 = vadd.f32 %v1133, %v1390
    %v1392 = vtanh.pop %v1391
    %v1393 = vsub.f32 %v1128, %v1392
    %v1394 = vmul.f32 %v1388, %v1393
    %v1395 = vadd.f32 %v1392, %v1394
    %v1396 = vpack.c.bf16 %v1395, %v1395
    %1397 = vst [vmem:[#allocation3 + $0xc] sm:$0xf] %v1396
    %v1398 = vld [vmem:[#allocation2 + $0x60] sm:$0xff]
    %v1399 = vld [vmem:[#allocation2 + $0x68] sm:$0xff]
    %v1400 = vld [vmem:[#allocation2 + $0x70] sm:$0xff]
    %v1401 = vld [vmem:[#allocation4] sm:$0xff]
    %v1402 = vld [vmem:[#allocation4 + $0x8] sm:$0xf]
    %v1403 = vld [vmem:[#allocation4 + $0xc] sm:$0xff]
    %v1404 = vld [vmem:[#allocation4 + $0x14] sm:$0xf]
    %v1405 = vld [vmem:[#allocation4 + $0x18] sm:$0xff]
    %v1406 = vld [vmem:[#allocation4 + $0x20] sm:$0xf]
    %v1407 = vld [vmem:[#allocation4 + $0x24] sm:$0xff]
    %v1408 = vld [vmem:[#allocation4 + $0x2c] sm:$0xf]
    %v1409 = vld [vmem:[#allocation4 + $0x30] sm:$0xff]
    %v1410 = vld [vmem:[#allocation4 + $0x38] sm:$0xf]
    %v1411 = vld [vmem:[#allocation4 + $0x3c] sm:$0xff]
    %v1412 = vld [vmem:[#allocation4 + $0x44] sm:$0xf]
    %v1413 = vld [vmem:[#allocation4 + $0x48] sm:$0xff]
    %v1414 = vld [vmem:[#allocation4 + $0x50] sm:$0xf]
    %v1415 = vld [vmem:[#allocation4 + $0x54] sm:$0xff]
    %v1416 = vld [vmem:[#allocation4 + $0x5c] sm:$0xf]
    %v1417 = vld [vmem:[#allocation4 + $0x60] sm:$0xff]
    %v1418 = vld [vmem:[#allocation4 + $0x68] sm:$0xf]
    %v1419 = vld [vmem:[#allocation4 + $0x6c] sm:$0xff]
    %v1420 = vld [vmem:[#allocation4 + $0x74] sm:$0xf]
    %v1421 = vld [vmem:[#allocation4 + $0x78] sm:$0xff]
    %v1422 = vld [vmem:[#allocation4 + $0x80] sm:$0xf]
    %v1423 = vld [vmem:[#allocation4 + $0x84] sm:$0xff]
    %v1424 = vld [vmem:[#allocation4 + $0x8c] sm:$0xf]
    %v1425 = vld [vmem:[#allocation4 + $0x90] sm:$0xff]
    %v1426 = vld [vmem:[#allocation4 + $0x98] sm:$0xf]
    %v1427 = vld [vmem:[#allocation4 + $0x9c] sm:$0xff]
    %v1428 = vld [vmem:[#allocation4 + $0xa4] sm:$0xf]
    %v1429 = vld [vmem:[#allocation4 + $0xa8] sm:$0xff]
    %v1430 = vld [vmem:[#allocation4 + $0xb0] sm:$0xf]
    %v1431 = vld [vmem:[#allocation4 + $0xb4] sm:$0xff]
    %v1432 = vld [vmem:[#allocation4 + $0xbc] sm:$0xf]
    %v1465 = vunpack.c.l.b16 %v1401
    %v1466 = vunpack.c.h.b16 %v1401
    %v1467 = vunpack.c.l.b16 %v1402
    %v1468 = vunpack.c.l.b16 %v1403
    %v1469 = vunpack.c.h.b16 %v1403
    %v1470 = vunpack.c.l.b16 %v1404
    %v1471 = vunpack.c.l.b16 %v1405
    %v1472 = vunpack.c.h.b16 %v1405
    %v1473 = vunpack.c.l.b16 %v1406
    %v1474 = vunpack.c.l.b16 %v1407
    %v1475 = vunpack.c.h.b16 %v1407
    %v1476 = vunpack.c.l.b16 %v1408
    %v1477 = vunpack.c.l.b16 %v1409
    %v1478 = vunpack.c.h.b16 %v1409
    %v1479 = vunpack.c.l.b16 %v1410
    %v1480 = vunpack.c.l.b16 %v1411
    %v1481 = vunpack.c.h.b16 %v1411
    %v1482 = vunpack.c.l.b16 %v1412
    %v1483 = vunpack.c.l.b16 %v1413
    %v1484 = vunpack.c.h.b16 %v1413
    %v1485 = vunpack.c.l.b16 %v1414
    %v1486 = vunpack.c.l.b16 %v1415
    %v1487 = vunpack.c.h.b16 %v1415
    %v1488 = vunpack.c.l.b16 %v1416
    %v1489 = vunpack.c.l.b16 %v1417
    %v1490 = vunpack.c.h.b16 %v1417
    %v1491 = vunpack.c.l.b16 %v1418
    %v1492 = vunpack.c.l.b16 %v1419
    %v1493 = vunpack.c.h.b16 %v1419
    %v1494 = vunpack.c.l.b16 %v1420
    %v1495 = vunpack.c.l.b16 %v1421
    %v1496 = vunpack.c.h.b16 %v1421
    %v1497 = vunpack.c.l.b16 %v1422
    %v1498 = vunpack.c.l.b16 %v1423
    %v1499 = vunpack.c.h.b16 %v1423
    %v1500 = vunpack.c.l.b16 %v1424
    %v1501 = vunpack.c.l.b16 %v1425
    %v1502 = vunpack.c.h.b16 %v1425
    %v1503 = vunpack.c.l.b16 %v1426
    %v1504 = vunpack.c.l.b16 %v1427
    %v1505 = vunpack.c.h.b16 %v1427
    %v1506 = vunpack.c.l.b16 %v1428
    %v1507 = vunpack.c.l.b16 %v1429
    %v1508 = vunpack.c.h.b16 %v1429
    %v1509 = vunpack.c.l.b16 %v1430
    %v1510 = vunpack.c.l.b16 %v1431
    %v1511 = vunpack.c.h.b16 %v1431
    %v1512 = vunpack.c.l.b16 %v1432
    %v1513 = vpack.c.b16 %v1468, %v1465
    %v1514 = vpack.c.b16 %v1469, %v1466
    %v1515 = vpack.c.b16 %v1470, %v1467
    %v1516 = vpack.c.b16 %v1474, %v1471
    %v1517 = vpack.c.b16 %v1475, %v1472
    %v1518 = vpack.c.b16 %v1476, %v1473
    %v1519 = vpack.c.b16 %v1480, %v1477
    %v1520 = vpack.c.b16 %v1481, %v1478
    %v1521 = vpack.c.b16 %v1482, %v1479
    %v1522 = vpack.c.b16 %v1486, %v1483
    %v1523 = vpack.c.b16 %v1487, %v1484
    %v1524 = vpack.c.b16 %v1488, %v1485
    %v1525 = vpack.c.b16 %v1492, %v1489
    %v1526 = vpack.c.b16 %v1493, %v1490
    %v1527 = vpack.c.b16 %v1494, %v1491
    %v1528 = vpack.c.b16 %v1498, %v1495
    %v1529 = vpack.c.b16 %v1499, %v1496
    %v1530 = vpack.c.b16 %v1500, %v1497
    %v1531 = vpack.c.b16 %v1504, %v1501
    %v1532 = vpack.c.b16 %v1505, %v1502
    %v1533 = vpack.c.b16 %v1506, %v1503
    %v1534 = vpack.c.b16 %v1510, %v1507
    %v1535 = vpack.c.b16 %v1511, %v1508
    %v1536 = vpack.c.b16 %v1512, %v1509
    %1561 = vmatprep.subr.bf16.mxu0 %v1535
    %1562 = vmatpush1.bf16.msra.mxu0 %v1534
    %1563 = vmatprep.subr.bf16.mxu0 %v1532
    %1564 = vmatpush1.bf16.msra.mxu0 %v1531
    %1565 = vmatprep.subr.bf16.mxu0 %v1529
    %1566 = vmatpush1.bf16.msra.mxu0 %v1528
    %1567 = vmatprep.subr.bf16.mxu0 %v1526
    %1568 = vmatpush1.bf16.msra.mxu0 %v1525
    %1569 = vmatprep.subr.bf16.mxu0 %v1523
    %1570 = vmatpush1.bf16.msra.mxu0 %v1522
    %1571 = vmatprep.subr.bf16.mxu0 %v1520
    %1572 = vmatpush1.bf16.msra.mxu0 %v1519
    %1573 = vmatprep.subr.bf16.mxu0 %v1517
    %1574 = vmatpush1.bf16.msra.mxu0 %v1516
    %1575 = vmatprep.subr.bf16.mxu0 %v1514
    %1576 = vmatpush1.bf16.msra.mxu0 %v1513
    %1577 = vmatprep.subr.bf16.mxu0 0
    %1578 = vmatpush2.bf16.msra.mxu0 0
    %1579 = vmatprep.subr.bf16.mxu0 0
    %1580 = vmatpush2.bf16.msra.mxu0 0
    %1581 = vmatprep.subr.bf16.mxu0 0
    %1582 = vmatpush2.bf16.msra.mxu0 0
    %1583 = vmatprep.subr.bf16.mxu0 0
    %1584 = vmatpush2.bf16.msra.mxu0 0
    %1585 = vmatprep.subr.bf16.mxu0 0
    %1586 = vmatpush2.bf16.msra.mxu0 0
    %1587 = vmatprep.subr.bf16.mxu0 0
    %1588 = vmatpush2.bf16.msra.mxu0 0
    %1589 = vmatprep.subr.bf16.mxu0 0
    %1590 = vmatpush2.bf16.msra.mxu0 0
    %1591 = vmatprep.subr.bf16.mxu0 0
    %1592 = vmatpush2.bf16.msra.mxu0 0
    %1593 = vmatprep.mubr.bf16.mxu0 0
    %1594 = vmatmul.mubr.bf16.gmra.mxu0 %v1396
    %v1595 = vpop.f32.mrf.mxu0
    %v1596 = vadd.f32 0.0, %v1595
    %v1597 = vpop.f32.mrf.mxu0
    %v1598 = vadd.f32 0.0, %v1597
    %v1599 = vpop.f32.mrf.mxu0
    %v1600 = vpop.f32.mrf.mxu0
    %1601 = vdwg.mxu0
    %1602 = vmatprep.subr.bf16.mxu0 0
    %1603 = vmatpush1.bf16.msra.mxu0 %v1536
    %1604 = vmatprep.subr.bf16.mxu0 0
    %1605 = vmatpush1.bf16.msra.mxu0 %v1533
    %1606 = vmatprep.subr.bf16.mxu0 0
    %1607 = vmatpush1.bf16.msra.mxu0 %v1530
    %1608 = vmatprep.subr.bf16.mxu0 0
    %1609 = vmatpush1.bf16.msra.mxu0 %v1527
    %1610 = vmatprep.subr.bf16.mxu0 0
    %1611 = vmatpush1.bf16.msra.mxu0 %v1524
    %1612 = vmatprep.subr.bf16.mxu0 0
    %1613 = vmatpush1.bf16.msra.mxu0 %v1521
    %1614 = vmatprep.subr.bf16.mxu0 0
    %1615 = vmatpush1.bf16.msra.mxu0 %v1518
    %1616 = vmatprep.subr.bf16.mxu0 0
    %1617 = vmatpush1.bf16.msra.mxu0 %v1515
    %1618 = vmatprep.subr.bf16.mxu0 0
    %1619 = vmatpush2.bf16.msra.mxu0 0
    %1620 = vmatprep.subr.bf16.mxu0 0
    %1621 = vmatpush2.bf16.msra.mxu0 0
    %1622 = vmatprep.subr.bf16.mxu0 0
    %1623 = vmatpush2.bf16.msra.mxu0 0
    %1624 = vmatprep.subr.bf16.mxu0 0
    %1625 = vmatpush2.bf16.msra.mxu0 0
    %1626 = vmatprep.subr.bf16.mxu0 0
    %1627 = vmatpush2.bf16.msra.mxu0 0
    %1628 = vmatprep.subr.bf16.mxu0 0
    %1629 = vmatpush2.bf16.msra.mxu0 0
    %1630 = vmatprep.subr.bf16.mxu0 0
    %1631 = vmatpush2.bf16.msra.mxu0 0
    %1632 = vmatprep.subr.bf16.mxu0 0
    %1633 = vmatpush2.bf16.msra.mxu0 0
    %1634 = vmatprep.mubr.bf16.mxu0 0
    %1635 = vmatmul.mubr.bf16.gmra.mxu0 %v1396
    %v1636 = vpop.f32.mrf.mxu0
    %v1637 = vadd.f32 0.0, %v1636
    %v1638 = vpop.f32.mrf.mxu0
    %v1639 = vpop.f32.mrf.mxu0
    %v1640 = vpop.f32.mrf.mxu0
    %1641 = vdwg.mxu0
    %v1642 = vadd.f32 %v1398, %v1596
    %v1643 = vxor.u32 %v1642, 2147483648
    %v1644 = vmul.f32 %v1643, 1.442695
    %v1645 = vpow.pop %v1644
    %v1646 = vadd.f32 %v1645, 1.0
    %v1647 = vrcp.pop %v1646
    %v1648 = vmul.f32 1.0, %v1647
    %v1649 = vadd.f32 %v1399, %v1598
    %v1650 = vxor.u32 %v1649, 2147483648
    %v1651 = vmul.f32 %v1650, 1.442695
    %v1652 = vpow.pop %v1651
    %v1653 = vadd.f32 %v1652, 1.0
    %v1654 = vrcp.pop %v1653
    %v1655 = vmul.f32 1.0, %v1654
    %v1656 = vadd.f32 %v1637, %v326
    %v1657 = vmul.f32 %v1648, %v1656
    %v1658 = vadd.f32 %v1400, %v1657
    %v1659 = vtanh.pop %v1658
    %v1660 = vsub.f32 %v1395, %v1659
    %v1661 = vmul.f32 %v1655, %v1660
    %v1662 = vadd.f32 %v1659, %v1661
    %v1663 = vpack.c.bf16 %v1662, %v1662
    %1664 = vst [vmem:[#allocation3 + $0x10] sm:$0xf] %v1663
    %v1665 = vld [vmem:[#allocation2 + $0x78] sm:$0xff]
    %v1666 = vld [vmem:[#allocation2 + $0x80] sm:$0xff]
    %v1667 = vld [vmem:[#allocation2 + $0x88] sm:$0xff]
    %v1668 = vld [vmem:[#allocation4] sm:$0xff]
    %v1669 = vld [vmem:[#allocation4 + $0x8] sm:$0xf]
    %v1670 = vld [vmem:[#allocation4 + $0xc] sm:$0xff]
    %v1671 = vld [vmem:[#allocation4 + $0x14] sm:$0xf]
    %v1672 = vld [vmem:[#allocation4 + $0x18] sm:$0xff]
    %v1673 = vld [vmem:[#allocation4 + $0x20] sm:$0xf]
    %v1674 = vld [vmem:[#allocation4 + $0x24] sm:$0xff]
    %v1675 = vld [vmem:[#allocation4 + $0x2c] sm:$0xf]
    %v1676 = vld [vmem:[#allocation4 + $0x30] sm:$0xff]
    %v1677 = vld [vmem:[#allocation4 + $0x38] sm:$0xf]
    %v1678 = vld [vmem:[#allocation4 + $0x3c] sm:$0xff]
    %v1679 = vld [vmem:[#allocation4 + $0x44] sm:$0xf]
    %v1680 = vld [vmem:[#allocation4 + $0x48] sm:$0xff]
    %v1681 = vld [vmem:[#allocation4 + $0x50] sm:$0xf]
    %v1682 = vld [vmem:[#allocation4 + $0x54] sm:$0xff]
    %v1683 = vld [vmem:[#allocation4 + $0x5c] sm:$0xf]
    %v1684 = vld [vmem:[#allocation4 + $0x60] sm:$0xff]
    %v1685 = vld [vmem:[#allocation4 + $0x68] sm:$0xf]
    %v1686 = vld [vmem:[#allocation4 + $0x6c] sm:$0xff]
    %v1687 = vld [vmem:[#allocation4 + $0x74] sm:$0xf]
    %v1688 = vld [vmem:[#allocation4 + $0x78] sm:$0xff]
    %v1689 = vld [vmem:[#allocation4 + $0x80] sm:$0xf]
    %v1690 = vld [vmem:[#allocation4 + $0x84] sm:$0xff]
    %v1691 = vld [vmem:[#allocation4 + $0x8c] sm:$0xf]
    %v1692 = vld [vmem:[#allocation4 + $0x90] sm:$0xff]
    %v1693 = vld [vmem:[#allocation4 + $0x98] sm:$0xf]
    %v1694 = vld [vmem:[#allocation4 + $0x9c] sm:$0xff]
    %v1695 = vld [vmem:[#allocation4 + $0xa4] sm:$0xf]
    %v1696 = vld [vmem:[#allocation4 + $0xa8] sm:$0xff]
    %v1697 = vld [vmem:[#allocation4 + $0xb0] sm:$0xf]
    %v1698 = vld [vmem:[#allocation4 + $0xb4] sm:$0xff]
    %v1699 = vld [vmem:[#allocation4 + $0xbc] sm:$0xf]
    %v1732 = vunpack.c.l.b16 %v1668
    %v1733 = vunpack.c.h.b16 %v1668
    %v1734 = vunpack.c.l.b16 %v1669
    %v1735 = vunpack.c.l.b16 %v1670
    %v1736 = vunpack.c.h.b16 %v1670
    %v1737 = vunpack.c.l.b16 %v1671
    %v1738 = vunpack.c.l.b16 %v1672
    %v1739 = vunpack.c.h.b16 %v1672
    %v1740 = vunpack.c.l.b16 %v1673
    %v1741 = vunpack.c.l.b16 %v1674
    %v1742 = vunpack.c.h.b16 %v1674
    %v1743 = vunpack.c.l.b16 %v1675
    %v1744 = vunpack.c.l.b16 %v1676
    %v1745 = vunpack.c.h.b16 %v1676
    %v1746 = vunpack.c.l.b16 %v1677
    %v1747 = vunpack.c.l.b16 %v1678
    %v1748 = vunpack.c.h.b16 %v1678
    %v1749 = vunpack.c.l.b16 %v1679
    %v1750 = vunpack.c.l.b16 %v1680
    %v1751 = vunpack.c.h.b16 %v1680
    %v1752 = vunpack.c.l.b16 %v1681
    %v1753 = vunpack.c.l.b16 %v1682
    %v1754 = vunpack.c.h.b16 %v1682
    %v1755 = vunpack.c.l.b16 %v1683
    %v1756 = vunpack.c.l.b16 %v1684
    %v1757 = vunpack.c.h.b16 %v1684
    %v1758 = vunpack.c.l.b16 %v1685
    %v1759 = vunpack.c.l.b16 %v1686
    %v1760 = vunpack.c.h.b16 %v1686
    %v1761 = vunpack.c.l.b16 %v1687
    %v1762 = vunpack.c.l.b16 %v1688
    %v1763 = vunpack.c.h.b16 %v1688
    %v1764 = vunpack.c.l.b16 %v1689
    %v1765 = vunpack.c.l.b16 %v1690
    %v1766 = vunpack.c.h.b16 %v1690
    %v1767 = vunpack.c.l.b16 %v1691
    %v1768 = vunpack.c.l.b16 %v1692
    %v1769 = vunpack.c.h.b16 %v1692
    %v1770 = vunpack.c.l.b16 %v1693
    %v1771 = vunpack.c.l.b16 %v1694
    %v1772 = vunpack.c.h.b16 %v1694
    %v1773 = vunpack.c.l.b16 %v1695
    %v1774 = vunpack.c.l.b16 %v1696
    %v1775 = vunpack.c.h.b16 %v1696
    %v1776 = vunpack.c.l.b16 %v1697
    %v1777 = vunpack.c.l.b16 %v1698
    %v1778 = vunpack.c.h.b16 %v1698
    %v1779 = vunpack.c.l.b16 %v1699
    %v1780 = vpack.c.b16 %v1735, %v1732
    %v1781 = vpack.c.b16 %v1736, %v1733
    %v1782 = vpack.c.b16 %v1737, %v1734
    %v1783 = vpack.c.b16 %v1741, %v1738
    %v1784 = vpack.c.b16 %v1742, %v1739
    %v1785 = vpack.c.b16 %v1743, %v1740
    %v1786 = vpack.c.b16 %v1747, %v1744
    %v1787 = vpack.c.b16 %v1748, %v1745
    %v1788 = vpack.c.b16 %v1749, %v1746
    %v1789 = vpack.c.b16 %v1753, %v1750
    %v1790 = vpack.c.b16 %v1754, %v1751
    %v1791 = vpack.c.b16 %v1755, %v1752
    %v1792 = vpack.c.b16 %v1759, %v1756
    %v1793 = vpack.c.b16 %v1760, %v1757
    %v1794 = vpack.c.b16 %v1761, %v1758
    %v1795 = vpack.c.b16 %v1765, %v1762
    %v1796 = vpack.c.b16 %v1766, %v1763
    %v1797 = vpack.c.b16 %v1767, %v1764
    %v1798 = vpack.c.b16 %v1771, %v1768
    %v1799 = vpack.c.b16 %v1772, %v1769
    %v1800 = vpack.c.b16 %v1773, %v1770
    %v1801 = vpack.c.b16 %v1777, %v1774
    %v1802 = vpack.c.b16 %v1778, %v1775
    %v1803 = vpack.c.b16 %v1779, %v1776
    %1828 = vmatprep.subr.bf16.mxu0 %v1802
    %1829 = vmatpush1.bf16.msra.mxu0 %v1801
    %1830 = vmatprep.subr.bf16.mxu0 %v1799
    %1831 = vmatpush1.bf16.msra.mxu0 %v1798
    %1832 = vmatprep.subr.bf16.mxu0 %v1796
    %1833 = vmatpush1.bf16.msra.mxu0 %v1795
    %1834 = vmatprep.subr.bf16.mxu0 %v1793
    %1835 = vmatpush1.bf16.msra.mxu0 %v1792
    %1836 = vmatprep.subr.bf16.mxu0 %v1790
    %1837 = vmatpush1.bf16.msra.mxu0 %v1789
    %1838 = vmatprep.subr.bf16.mxu0 %v1787
    %1839 = vmatpush1.bf16.msra.mxu0 %v1786
    %1840 = vmatprep.subr.bf16.mxu0 %v1784
    %1841 = vmatpush1.bf16.msra.mxu0 %v1783
    %1842 = vmatprep.subr.bf16.mxu0 %v1781
    %1843 = vmatpush1.bf16.msra.mxu0 %v1780
    %1844 = vmatprep.subr.bf16.mxu0 0
    %1845 = vmatpush2.bf16.msra.mxu0 0
    %1846 = vmatprep.subr.bf16.mxu0 0
    %1847 = vmatpush2.bf16.msra.mxu0 0
    %1848 = vmatprep.subr.bf16.mxu0 0
    %1849 = vmatpush2.bf16.msra.mxu0 0
    %1850 = vmatprep.subr.bf16.mxu0 0
    %1851 = vmatpush2.bf16.msra.mxu0 0
    %1852 = vmatprep.subr.bf16.mxu0 0
    %1853 = vmatpush2.bf16.msra.mxu0 0
    %1854 = vmatprep.subr.bf16.mxu0 0
    %1855 = vmatpush2.bf16.msra.mxu0 0
    %1856 = vmatprep.subr.bf16.mxu0 0
    %1857 = vmatpush2.bf16.msra.mxu0 0
    %1858 = vmatprep.subr.bf16.mxu0 0
    %1859 = vmatpush2.bf16.msra.mxu0 0
    %1860 = vmatprep.mubr.bf16.mxu0 0
    %1861 = vmatmul.mubr.bf16.gmra.mxu0 %v1663
    %v1862 = vpop.f32.mrf.mxu0
    %v1863 = vadd.f32 0.0, %v1862
    %v1864 = vpop.f32.mrf.mxu0
    %v1865 = vadd.f32 0.0, %v1864
    %v1866 = vpop.f32.mrf.mxu0
    %v1867 = vpop.f32.mrf.mxu0
    %1868 = vdwg.mxu0
    %1869 = vmatprep.subr.bf16.mxu0 0
    %1870 = vmatpush1.bf16.msra.mxu0 %v1803
    %1871 = vmatprep.subr.bf16.mxu0 0
    %1872 = vmatpush1.bf16.msra.mxu0 %v1800
    %1873 = vmatprep.subr.bf16.mxu0 0
    %1874 = vmatpush1.bf16.msra.mxu0 %v1797
    %1875 = vmatprep.subr.bf16.mxu0 0
    %1876 = vmatpush1.bf16.msra.mxu0 %v1794
    %1877 = vmatprep.subr.bf16.mxu0 0
    %1878 = vmatpush1.bf16.msra.mxu0 %v1791
    %1879 = vmatprep.subr.bf16.mxu0 0
    %1880 = vmatpush1.bf16.msra.mxu0 %v1788
    %1881 = vmatprep.subr.bf16.mxu0 0
    %1882 = vmatpush1.bf16.msra.mxu0 %v1785
    %1883 = vmatprep.subr.bf16.mxu0 0
    %1884 = vmatpush1.bf16.msra.mxu0 %v1782
    %1885 = vmatprep.subr.bf16.mxu0 0
    %1886 = vmatpush2.bf16.msra.mxu0 0
    %1887 = vmatprep.subr.bf16.mxu0 0
    %1888 = vmatpush2.bf16.msra.mxu0 0
    %1889 = vmatprep.subr.bf16.mxu0 0
    %1890 = vmatpush2.bf16.msra.mxu0 0
    %1891 = vmatprep.subr.bf16.mxu0 0
    %1892 = vmatpush2.bf16.msra.mxu0 0
    %1893 = vmatprep.subr.bf16.mxu0 0
    %1894 = vmatpush2.bf16.msra.mxu0 0
    %1895 = vmatprep.subr.bf16.mxu0 0
    %1896 = vmatpush2.bf16.msra.mxu0 0
    %1897 = vmatprep.subr.bf16.mxu0 0
    %1898 = vmatpush2.bf16.msra.mxu0 0
    %1899 = vmatprep.subr.bf16.mxu0 0
    %1900 = vmatpush2.bf16.msra.mxu0 0
    %1901 = vmatprep.mubr.bf16.mxu0 0
    %1902 = vmatmul.mubr.bf16.gmra.mxu0 %v1663
    %v1903 = vpop.f32.mrf.mxu0
    %v1904 = vadd.f32 0.0, %v1903
    %v1905 = vpop.f32.mrf.mxu0
    %v1906 = vpop.f32.mrf.mxu0
    %v1907 = vpop.f32.mrf.mxu0
    %1908 = vdwg.mxu0
    %v1909 = vadd.f32 %v1665, %v1863
    %v1910 = vxor.u32 %v1909, 2147483648
    %v1911 = vmul.f32 %v1910, 1.442695
    %v1912 = vpow.pop %v1911
    %v1913 = vadd.f32 %v1912, 1.0
    %v1914 = vrcp.pop %v1913
    %v1915 = vmul.f32 1.0, %v1914
    %v1916 = vadd.f32 %v1666, %v1865
    %v1917 = vxor.u32 %v1916, 2147483648
    %v1918 = vmul.f32 %v1917, 1.442695
    %v1919 = vpow.pop %v1918
    %v1920 = vadd.f32 %v1919, 1.0
    %v1921 = vrcp.pop %v1920
    %v1922 = vmul.f32 1.0, %v1921
    %v1923 = vadd.f32 %v1904, %v326
    %v1924 = vmul.f32 %v1915, %v1923
    %v1925 = vadd.f32 %v1667, %v1924
    %v1926 = vtanh.pop %v1925
    %v1927 = vsub.f32 %v1662, %v1926
    %v1928 = vmul.f32 %v1922, %v1927
    %v1929 = vadd.f32 %v1926, %v1928
    %v1930 = vpack.c.bf16 %v1929, %v1929
    %1931 = vst [vmem:[#allocation3 + $0x14] sm:$0xf] %v1930
    %v1932 = vld [vmem:[#allocation2 + $0x90] sm:$0xff]
    %v1933 = vld [vmem:[#allocation2 + $0x98] sm:$0xff]
    %v1934 = vld [vmem:[#allocation2 + $0xa0] sm:$0xff]
    %v1935 = vld [vmem:[#allocation4] sm:$0xff]
    %v1936 = vld [vmem:[#allocation4 + $0x8] sm:$0xf]
    %v1937 = vld [vmem:[#allocation4 + $0xc] sm:$0xff]
    %v1938 = vld [vmem:[#allocation4 + $0x14] sm:$0xf]
    %v1939 = vld [vmem:[#allocation4 + $0x18] sm:$0xff]
    %v1940 = vld [vmem:[#allocation4 + $0x20] sm:$0xf]
    %v1941 = vld [vmem:[#allocation4 + $0x24] sm:$0xff]
    %v1942 = vld [vmem:[#allocation4 + $0x2c] sm:$0xf]
    %v1943 = vld [vmem:[#allocation4 + $0x30] sm:$0xff]
    %v1944 = vld [vmem:[#allocation4 + $0x38] sm:$0xf]
    %v1945 = vld [vmem:[#allocation4 + $0x3c] sm:$0xff]
    %v1946 = vld [vmem:[#allocation4 + $0x44] sm:$0xf]
    %v1947 = vld [vmem:[#allocation4 + $0x48] sm:$0xff]
    %v1948 = vld [vmem:[#allocation4 + $0x50] sm:$0xf]
    %v1949 = vld [vmem:[#allocation4 + $0x54] sm:$0xff]
    %v1950 = vld [vmem:[#allocation4 + $0x5c] sm:$0xf]
    %v1951 = vld [vmem:[#allocation4 + $0x60] sm:$0xff]
    %v1952 = vld [vmem:[#allocation4 + $0x68] sm:$0xf]
    %v1953 = vld [vmem:[#allocation4 + $0x6c] sm:$0xff]
    %v1954 = vld [vmem:[#allocation4 + $0x74] sm:$0xf]
    %v1955 = vld [vmem:[#allocation4 + $0x78] sm:$0xff]
    %v1956 = vld [vmem:[#allocation4 + $0x80] sm:$0xf]
    %v1957 = vld [vmem:[#allocation4 + $0x84] sm:$0xff]
    %v1958 = vld [vmem:[#allocation4 + $0x8c] sm:$0xf]
    %v1959 = vld [vmem:[#allocation4 + $0x90] sm:$0xff]
    %v1960 = vld [vmem:[#allocation4 + $0x98] sm:$0xf]
    %v1961 = vld [vmem:[#allocation4 + $0x9c] sm:$0xff]
    %v1962 = vld [vmem:[#allocation4 + $0xa4] sm:$0xf]
    %v1963 = vld [vmem:[#allocation4 + $0xa8] sm:$0xff]
    %v1964 = vld [vmem:[#allocation4 + $0xb0] sm:$0xf]
    %v1965 = vld [vmem:[#allocation4 + $0xb4] sm:$0xff]
    %v1966 = vld [vmem:[#allocation4 + $0xbc] sm:$0xf]
    %v1999 = vunpack.c.l.b16 %v1935
    %v2000 = vunpack.c.h.b16 %v1935
    %v2001 = vunpack.c.l.b16 %v1936
    %v2002 = vunpack.c.l.b16 %v1937
    %v2003 = vunpack.c.h.b16 %v1937
    %v2004 = vunpack.c.l.b16 %v1938
    %v2005 = vunpack.c.l.b16 %v1939
    %v2006 = vunpack.c.h.b16 %v1939
    %v2007 = vunpack.c.l.b16 %v1940
    %v2008 = vunpack.c.l.b16 %v1941
    %v2009 = vunpack.c.h.b16 %v1941
    %v2010 = vunpack.c.l.b16 %v1942
    %v2011 = vunpack.c.l.b16 %v1943
    %v2012 = vunpack.c.h.b16 %v1943
    %v2013 = vunpack.c.l.b16 %v1944
    %v2014 = vunpack.c.l.b16 %v1945
    %v2015 = vunpack.c.h.b16 %v1945
    %v2016 = vunpack.c.l.b16 %v1946
    %v2017 = vunpack.c.l.b16 %v1947
    %v2018 = vunpack.c.h.b16 %v1947
    %v2019 = vunpack.c.l.b16 %v1948
    %v2020 = vunpack.c.l.b16 %v1949
    %v2021 = vunpack.c.h.b16 %v1949
    %v2022 = vunpack.c.l.b16 %v1950
    %v2023 = vunpack.c.l.b16 %v1951
    %v2024 = vunpack.c.h.b16 %v1951
    %v2025 = vunpack.c.l.b16 %v1952
    %v2026 = vunpack.c.l.b16 %v1953
    %v2027 = vunpack.c.h.b16 %v1953
    %v2028 = vunpack.c.l.b16 %v1954
    %v2029 = vunpack.c.l.b16 %v1955
    %v2030 = vunpack.c.h.b16 %v1955
    %v2031 = vunpack.c.l.b16 %v1956
    %v2032 = vunpack.c.l.b16 %v1957
    %v2033 = vunpack.c.h.b16 %v1957
    %v2034 = vunpack.c.l.b16 %v1958
    %v2035 = vunpack.c.l.b16 %v1959
    %v2036 = vunpack.c.h.b16 %v1959
    %v2037 = vunpack.c.l.b16 %v1960
    %v2038 = vunpack.c.l.b16 %v1961
    %v2039 = vunpack.c.h.b16 %v1961
    %v2040 = vunpack.c.l.b16 %v1962
    %v2041 = vunpack.c.l.b16 %v1963
    %v2042 = vunpack.c.h.b16 %v1963
    %v2043 = vunpack.c.l.b16 %v1964
    %v2044 = vunpack.c.l.b16 %v1965
    %v2045 = vunpack.c.h.b16 %v1965
    %v2046 = vunpack.c.l.b16 %v1966
    %v2047 = vpack.c.b16 %v2002, %v1999
    %v2048 = vpack.c.b16 %v2003, %v2000
    %v2049 = vpack.c.b16 %v2004, %v2001
    %v2050 = vpack.c.b16 %v2008, %v2005
    %v2051 = vpack.c.b16 %v2009, %v2006
    %v2052 = vpack.c.b16 %v2010, %v2007
    %v2053 = vpack.c.b16 %v2014, %v2011
    %v2054 = vpack.c.b16 %v2015, %v2012
    %v2055 = vpack.c.b16 %v2016, %v2013
    %v2056 = vpack.c.b16 %v2020, %v2017
    %v2057 = vpack.c.b16 %v2021, %v2018
    %v2058 = vpack.c.b16 %v2022, %v2019
    %v2059 = vpack.c.b16 %v2026, %v2023
    %v2060 = vpack.c.b16 %v2027, %v2024
    %v2061 = vpack.c.b16 %v2028, %v2025
    %v2062 = vpack.c.b16 %v2032, %v2029
    %v2063 = vpack.c.b16 %v2033, %v2030
    %v2064 = vpack.c.b16 %v2034, %v2031
    %v2065 = vpack.c.b16 %v2038, %v2035
    %v2066 = vpack.c.b16 %v2039, %v2036
    %v2067 = vpack.c.b16 %v2040, %v2037
    %v2068 = vpack.c.b16 %v2044, %v2041
    %v2069 = vpack.c.b16 %v2045, %v2042
    %v2070 = vpack.c.b16 %v2046, %v2043
    %2095 = vmatprep.subr.bf16.mxu0 %v2069
    %2096 = vmatpush1.bf16.msra.mxu0 %v2068
    %2097 = vmatprep.subr.bf16.mxu0 %v2066
    %2098 = vmatpush1.bf16.msra.mxu0 %v2065
    %2099 = vmatprep.subr.bf16.mxu0 %v2063
    %2100 = vmatpush1.bf16.msra.mxu0 %v2062
    %2101 = vmatprep.subr.bf16.mxu0 %v2060
    %2102 = vmatpush1.bf16.msra.mxu0 %v2059
    %2103 = vmatprep.subr.bf16.mxu0 %v2057
    %2104 = vmatpush1.bf16.msra.mxu0 %v2056
    %2105 = vmatprep.subr.bf16.mxu0 %v2054
    %2106 = vmatpush1.bf16.msra.mxu0 %v2053
    %2107 = vmatprep.subr.bf16.mxu0 %v2051
    %2108 = vmatpush1.bf16.msra.mxu0 %v2050
    %2109 = vmatprep.subr.bf16.mxu0 %v2048
    %2110 = vmatpush1.bf16.msra.mxu0 %v2047
    %2111 = vmatprep.subr.bf16.mxu0 0
    %2112 = vmatpush2.bf16.msra.mxu0 0
    %2113 = vmatprep.subr.bf16.mxu0 0
    %2114 = vmatpush2.bf16.msra.mxu0 0
    %2115 = vmatprep.subr.bf16.mxu0 0
    %2116 = vmatpush2.bf16.msra.mxu0 0
    %2117 = vmatprep.subr.bf16.mxu0 0
    %2118 = vmatpush2.bf16.msra.mxu0 0
    %2119 = vmatprep.subr.bf16.mxu0 0
    %2120 = vmatpush2.bf16.msra.mxu0 0
    %2121 = vmatprep.subr.bf16.mxu0 0
    %2122 = vmatpush2.bf16.msra.mxu0 0
    %2123 = vmatprep.subr.bf16.mxu0 0
    %2124 = vmatpush2.bf16.msra.mxu0 0
    %2125 = vmatprep.subr.bf16.mxu0 0
    %2126 = vmatpush2.bf16.msra.mxu0 0
    %2127 = vmatprep.mubr.bf16.mxu0 0
    %2128 = vmatmul.mubr.bf16.gmra.mxu0 %v1930
    %v2129 = vpop.f32.mrf.mxu0
    %v2130 = vadd.f32 0.0, %v2129
    %v2131 = vpop.f32.mrf.mxu0
    %v2132 = vadd.f32 0.0, %v2131
    %v2133 = vpop.f32.mrf.mxu0
    %v2134 = vpop.f32.mrf.mxu0
    %2135 = vdwg.mxu0
    %2136 = vmatprep.subr.bf16.mxu0 0
    %2137 = vmatpush1.bf16.msra.mxu0 %v2070
    %2138 = vmatprep.subr.bf16.mxu0 0
    %2139 = vmatpush1.bf16.msra.mxu0 %v2067
    %2140 = vmatprep.subr.bf16.mxu0 0
    %2141 = vmatpush1.bf16.msra.mxu0 %v2064
    %2142 = vmatprep.subr.bf16.mxu0 0
    %2143 = vmatpush1.bf16.msra.mxu0 %v2061
    %2144 = vmatprep.subr.bf16.mxu0 0
    %2145 = vmatpush1.bf16.msra.mxu0 %v2058
    %2146 = vmatprep.subr.bf16.mxu0 0
    %2147 = vmatpush1.bf16.msra.mxu0 %v2055
    %2148 = vmatprep.subr.bf16.mxu0 0
    %2149 = vmatpush1.bf16.msra.mxu0 %v2052
    %2150 = vmatprep.subr.bf16.mxu0 0
    %2151 = vmatpush1.bf16.msra.mxu0 %v2049
    %2152 = vmatprep.subr.bf16.mxu0 0
    %2153 = vmatpush2.bf16.msra.mxu0 0
    %2154 = vmatprep.subr.bf16.mxu0 0
    %2155 = vmatpush2.bf16.msra.mxu0 0
    %2156 = vmatprep.subr.bf16.mxu0 0
    %2157 = vmatpush2.bf16.msra.mxu0 0
    %2158 = vmatprep.subr.bf16.mxu0 0
    %2159 = vmatpush2.bf16.msra.mxu0 0
    %2160 = vmatprep.subr.bf16.mxu0 0
    %2161 = vmatpush2.bf16.msra.mxu0 0
    %2162 = vmatprep.subr.bf16.mxu0 0
    %2163 = vmatpush2.bf16.msra.mxu0 0
    %2164 = vmatprep.subr.bf16.mxu0 0
    %2165 = vmatpush2.bf16.msra.mxu0 0
    %2166 = vmatprep.subr.bf16.mxu0 0
    %2167 = vmatpush2.bf16.msra.mxu0 0
    %2168 = vmatprep.mubr.bf16.mxu0 0
    %2169 = vmatmul.mubr.bf16.gmra.mxu0 %v1930
    %v2170 = vpop.f32.mrf.mxu0
    %v2171 = vadd.f32 0.0, %v2170
    %v2172 = vpop.f32.mrf.mxu0
    %v2173 = vpop.f32.mrf.mxu0
    %v2174 = vpop.f32.mrf.mxu0
    %2175 = vdwg.mxu0
    %v2176 = vadd.f32 %v1932, %v2130
    %v2177 = vxor.u32 %v2176, 2147483648
    %v2178 = vmul.f32 %v2177, 1.442695
    %v2179 = vpow.pop %v2178
    %v2180 = vadd.f32 %v2179, 1.0
    %v2181 = vrcp.pop %v2180
    %v2182 = vmul.f32 1.0, %v2181
    %v2183 = vadd.f32 %v1933, %v2132
    %v2184 = vxor.u32 %v2183, 2147483648
    %v2185 = vmul.f32 %v2184, 1.442695
    %v2186 = vpow.pop %v2185
    %v2187 = vadd.f32 %v2186, 1.0
    %v2188 = vrcp.pop %v2187
    %v2189 = vmul.f32 1.0, %v2188
    %v2190 = vadd.f32 %v2171, %v326
    %v2191 = vmul.f32 %v2182, %v2190
    %v2192 = vadd.f32 %v1934, %v2191
    %v2193 = vtanh.pop %v2192
    %v2194 = vsub.f32 %v1929, %v2193
    %v2195 = vmul.f32 %v2189, %v2194
    %v2196 = vadd.f32 %v2193, %v2195
    %v2197 = vpack.c.bf16 %v2196, %v2196
    %2198 = vst [vmem:[#allocation3 + $0x18] sm:$0xf] %v2197
    %v2199 = vld [vmem:[#allocation2 + $0xa8] sm:$0xff]
    %v2200 = vld [vmem:[#allocation2 + $0xb0] sm:$0xff]
    %v2201 = vld [vmem:[#allocation2 + $0xb8] sm:$0xff]
    %v2202 = vld [vmem:[#allocation4] sm:$0xff]
    %v2203 = vld [vmem:[#allocation4 + $0x8] sm:$0xf]
    %v2204 = vld [vmem:[#allocation4 + $0xc] sm:$0xff]
    %v2205 = vld [vmem:[#allocation4 + $0x14] sm:$0xf]
    %v2206 = vld [vmem:[#allocation4 + $0x18] sm:$0xff]
    %v2207 = vld [vmem:[#allocation4 + $0x20] sm:$0xf]
    %v2208 = vld [vmem:[#allocation4 + $0x24] sm:$0xff]
    %v2209 = vld [vmem:[#allocation4 + $0x2c] sm:$0xf]
    %v2210 = vld [vmem:[#allocation4 + $0x30] sm:$0xff]
    %v2211 = vld [vmem:[#allocation4 + $0x38] sm:$0xf]
    %v2212 = vld [vmem:[#allocation4 + $0x3c] sm:$0xff]
    %v2213 = vld [vmem:[#allocation4 + $0x44] sm:$0xf]
    %v2214 = vld [vmem:[#allocation4 + $0x48] sm:$0xff]
    %v2215 = vld [vmem:[#allocation4 + $0x50] sm:$0xf]
    %v2216 = vld [vmem:[#allocation4 + $0x54] sm:$0xff]
    %v2217 = vld [vmem:[#allocation4 + $0x5c] sm:$0xf]
    %v2218 = vld [vmem:[#allocation4 + $0x60] sm:$0xff]
    %v2219 = vld [vmem:[#allocation4 + $0x68] sm:$0xf]
    %v2220 = vld [vmem:[#allocation4 + $0x6c] sm:$0xff]
    %v2221 = vld [vmem:[#allocation4 + $0x74] sm:$0xf]
    %v2222 = vld [vmem:[#allocation4 + $0x78] sm:$0xff]
    %v2223 = vld [vmem:[#allocation4 + $0x80] sm:$0xf]
    %v2224 = vld [vmem:[#allocation4 + $0x84] sm:$0xff]
    %v2225 = vld [vmem:[#allocation4 + $0x8c] sm:$0xf]
    %v2226 = vld [vmem:[#allocation4 + $0x90] sm:$0xff]
    %v2227 = vld [vmem:[#allocation4 + $0x98] sm:$0xf]
    %v2228 = vld [vmem:[#allocation4 + $0x9c] sm:$0xff]
    %v2229 = vld [vmem:[#allocation4 + $0xa4] sm:$0xf]
    %v2230 = vld [vmem:[#allocation4 + $0xa8] sm:$0xff]
    %v2231 = vld [vmem:[#allocation4 + $0xb0] sm:$0xf]
    %v2232 = vld [vmem:[#allocation4 + $0xb4] sm:$0xff]
    %v2233 = vld [vmem:[#allocation4 + $0xbc] sm:$0xf]
    %v2266 = vunpack.c.l.b16 %v2202
    %v2267 = vunpack.c.h.b16 %v2202
    %v2268 = vunpack.c.l.b16 %v2203
    %v2269 = vunpack.c.l.b16 %v2204
    %v2270 = vunpack.c.h.b16 %v2204
    %v2271 = vunpack.c.l.b16 %v2205
    %v2272 = vunpack.c.l.b16 %v2206
    %v2273 = vunpack.c.h.b16 %v2206
    %v2274 = vunpack.c.l.b16 %v2207
    %v2275 = vunpack.c.l.b16 %v2208
    %v2276 = vunpack.c.h.b16 %v2208
    %v2277 = vunpack.c.l.b16 %v2209
    %v2278 = vunpack.c.l.b16 %v2210
    %v2279 = vunpack.c.h.b16 %v2210
    %v2280 = vunpack.c.l.b16 %v2211
    %v2281 = vunpack.c.l.b16 %v2212
    %v2282 = vunpack.c.h.b16 %v2212
    %v2283 = vunpack.c.l.b16 %v2213
    %v2284 = vunpack.c.l.b16 %v2214
    %v2285 = vunpack.c.h.b16 %v2214
    %v2286 = vunpack.c.l.b16 %v2215
    %v2287 = vunpack.c.l.b16 %v2216
    %v2288 = vunpack.c.h.b16 %v2216
    %v2289 = vunpack.c.l.b16 %v2217
    %v2290 = vunpack.c.l.b16 %v2218
    %v2291 = vunpack.c.h.b16 %v2218
    %v2292 = vunpack.c.l.b16 %v2219
    %v2293 = vunpack.c.l.b16 %v2220
    %v2294 = vunpack.c.h.b16 %v2220
    %v2295 = vunpack.c.l.b16 %v2221
    %v2296 = vunpack.c.l.b16 %v2222
    %v2297 = vunpack.c.h.b16 %v2222
    %v2298 = vunpack.c.l.b16 %v2223
    %v2299 = vunpack.c.l.b16 %v2224
    %v2300 = vunpack.c.h.b16 %v2224
    %v2301 = vunpack.c.l.b16 %v2225
    %v2302 = vunpack.c.l.b16 %v2226
    %v2303 = vunpack.c.h.b16 %v2226
    %v2304 = vunpack.c.l.b16 %v2227
    %v2305 = vunpack.c.l.b16 %v2228
    %v2306 = vunpack.c.h.b16 %v2228
    %v2307 = vunpack.c.l.b16 %v2229
    %v2308 = vunpack.c.l.b16 %v2230
    %v2309 = vunpack.c.h.b16 %v2230
    %v2310 = vunpack.c.l.b16 %v2231
    %v2311 = vunpack.c.l.b16 %v2232
    %v2312 = vunpack.c.h.b16 %v2232
    %v2313 = vunpack.c.l.b16 %v2233
    %v2314 = vpack.c.b16 %v2269, %v2266
    %v2315 = vpack.c.b16 %v2270, %v2267
    %v2316 = vpack.c.b16 %v2271, %v2268
    %v2317 = vpack.c.b16 %v2275, %v2272
    %v2318 = vpack.c.b16 %v2276, %v2273
    %v2319 = vpack.c.b16 %v2277, %v2274
    %v2320 = vpack.c.b16 %v2281, %v2278
    %v2321 = vpack.c.b16 %v2282, %v2279
    %v2322 = vpack.c.b16 %v2283, %v2280
    %v2323 = vpack.c.b16 %v2287, %v2284
    %v2324 = vpack.c.b16 %v2288, %v2285
    %v2325 = vpack.c.b16 %v2289, %v2286
    %v2326 = vpack.c.b16 %v2293, %v2290
    %v2327 = vpack.c.b16 %v2294, %v2291
    %v2328 = vpack.c.b16 %v2295, %v2292
    %v2329 = vpack.c.b16 %v2299, %v2296
    %v2330 = vpack.c.b16 %v2300, %v2297
    %v2331 = vpack.c.b16 %v2301, %v2298
    %v2332 = vpack.c.b16 %v2305, %v2302
    %v2333 = vpack.c.b16 %v2306, %v2303
    %v2334 = vpack.c.b16 %v2307, %v2304
    %v2335 = vpack.c.b16 %v2311, %v2308
    %v2336 = vpack.c.b16 %v2312, %v2309
    %v2337 = vpack.c.b16 %v2313, %v2310
    %2362 = vmatprep.subr.bf16.mxu0 %v2336
    %2363 = vmatpush1.bf16.msra.mxu0 %v2335
    %2364 = vmatprep.subr.bf16.mxu0 %v2333
    %2365 = vmatpush1.bf16.msra.mxu0 %v2332
    %2366 = vmatprep.subr.bf16.mxu0 %v2330
    %2367 = vmatpush1.bf16.msra.mxu0 %v2329
    %2368 = vmatprep.subr.bf16.mxu0 %v2327
    %2369 = vmatpush1.bf16.msra.mxu0 %v2326
    %2370 = vmatprep.subr.bf16.mxu0 %v2324
    %2371 = vmatpush1.bf16.msra.mxu0 %v2323
    %2372 = vmatprep.subr.bf16.mxu0 %v2321
    %2373 = vmatpush1.bf16.msra.mxu0 %v2320
    %2374 = vmatprep.subr.bf16.mxu0 %v2318
    %2375 = vmatpush1.bf16.msra.mxu0 %v2317
    %2376 = vmatprep.subr.bf16.mxu0 %v2315
    %2377 = vmatpush1.bf16.msra.mxu0 %v2314
    %2378 = vmatprep.subr.bf16.mxu0 0
    %2379 = vmatpush2.bf16.msra.mxu0 0
    %2380 = vmatprep.subr.bf16.mxu0 0
    %2381 = vmatpush2.bf16.msra.mxu0 0
    %2382 = vmatprep.subr.bf16.mxu0 0
    %2383 = vmatpush2.bf16.msra.mxu0 0
    %2384 = vmatprep.subr.bf16.mxu0 0
    %2385 = vmatpush2.bf16.msra.mxu0 0
    %2386 = vmatprep.subr.bf16.mxu0 0
    %2387 = vmatpush2.bf16.msra.mxu0 0
    %2388 = vmatprep.subr.bf16.mxu0 0
    %2389 = vmatpush2.bf16.msra.mxu0 0
    %2390 = vmatprep.subr.bf16.mxu0 0
    %2391 = vmatpush2.bf16.msra.mxu0 0
    %2392 = vmatprep.subr.bf16.mxu0 0
    %2393 = vmatpush2.bf16.msra.mxu0 0
    %2394 = vmatprep.mubr.bf16.mxu0 0
    %2395 = vmatmul.mubr.bf16.gmra.mxu0 %v2197
    %v2396 = vpop.f32.mrf.mxu0
    %v2397 = vadd.f32 0.0, %v2396
    %v2398 = vpop.f32.mrf.mxu0
    %v2399 = vadd.f32 0.0, %v2398
    %v2400 = vpop.f32.mrf.mxu0
    %v2401 = vpop.f32.mrf.mxu0
    %2402 = vdwg.mxu0
    %2403 = vmatprep.subr.bf16.mxu0 0
    %2404 = vmatpush1.bf16.msra.mxu0 %v2337
    %2405 = vmatprep.subr.bf16.mxu0 0
    %2406 = vmatpush1.bf16.msra.mxu0 %v2334
    %2407 = vmatprep.subr.bf16.mxu0 0
    %2408 = vmatpush1.bf16.msra.mxu0 %v2331
    %2409 = vmatprep.subr.bf16.mxu0 0
    %2410 = vmatpush1.bf16.msra.mxu0 %v2328
    %2411 = vmatprep.subr.bf16.mxu0 0
    %2412 = vmatpush1.bf16.msra.mxu0 %v2325
    %2413 = vmatprep.subr.bf16.mxu0 0
    %2414 = vmatpush1.bf16.msra.mxu0 %v2322
    %2415 = vmatprep.subr.bf16.mxu0 0
    %2416 = vmatpush1.bf16.msra.mxu0 %v2319
    %2417 = vmatprep.subr.bf16.mxu0 0
    %2418 = vmatpush1.bf16.msra.mxu0 %v2316
    %2419 = vmatprep.subr.bf16.mxu0 0
    %2420 = vmatpush2.bf16.msra.mxu0 0
    %2421 = vmatprep.subr.bf16.mxu0 0
    %2422 = vmatpush2.bf16.msra.mxu0 0
    %2423 = vmatprep.subr.bf16.mxu0 0
    %2424 = vmatpush2.bf16.msra.mxu0 0
    %2425 = vmatprep.subr.bf16.mxu0 0
    %2426 = vmatpush2.bf16.msra.mxu0 0
    %2427 = vmatprep.subr.bf16.mxu0 0
    %2428 = vmatpush2.bf16.msra.mxu0 0
    %2429 = vmatprep.subr.bf16.mxu0 0
    %2430 = vmatpush2.bf16.msra.mxu0 0
    %2431 = vmatprep.subr.bf16.mxu0 0
    %2432 = vmatpush2.bf16.msra.mxu0 0
    %2433 = vmatprep.subr.bf16.mxu0 0
    %2434 = vmatpush2.bf16.msra.mxu0 0
    %2435 = vmatprep.mubr.bf16.mxu0 0
    %2436 = vmatmul.mubr.bf16.gmra.mxu0 %v2197
    %v2437 = vpop.f32.mrf.mxu0
    %v2438 = vadd.f32 0.0, %v2437
    %v2439 = vpop.f32.mrf.mxu0
    %v2440 = vpop.f32.mrf.mxu0
    %v2441 = vpop.f32.mrf.mxu0
    %2442 = vdwg.mxu0
    %v2443 = vadd.f32 %v2199, %v2397
    %v2444 = vxor.u32 %v2443, 2147483648
    %v2445 = vmul.f32 %v2444, 1.442695
    %v2446 = vpow.pop %v2445
    %v2447 = vadd.f32 %v2446, 1.0
    %v2448 = vrcp.pop %v2447
    %v2449 = vmul.f32 1.0, %v2448
    %v2450 = vadd.f32 %v2200, %v2399
    %v2451 = vxor.u32 %v2450, 2147483648
    %v2452 = vmul.f32 %v2451, 1.442695
    %v2453 = vpow.pop %v2452
    %v2454 = vadd.f32 %v2453, 1.0
    %v2455 = vrcp.pop %v2454
    %v2456 = vmul.f32 1.0, %v2455
    %v2457 = vadd.f32 %v2438, %v326
    %v2458 = vmul.f32 %v2449, %v2457
    %v2459 = vadd.f32 %v2201, %v2458
    %v2460 = vtanh.pop %v2459
    %v2461 = vsub.f32 %v2196, %v2460
    %v2462 = vmul.f32 %v2456, %v2461
    %v2463 = vadd.f32 %v2460, %v2462
    %v2464 = vpack.c.bf16 %v2463, %v2463
    %2465 = vst [vmem:[#allocation3 + $0x1c] sm:$0xf] %v2464
    %2466 = vst [vmem:[#allocation11] sm:$0xff] %v2463
    %v2467 = vld [vmem:[#allocation3] sm:$0xf]
    %v2468 = vld [vmem:[#allocation3 + $0x4] sm:$0xf]
    %v2469 = vld [vmem:[#allocation3 + $0x8] sm:$0xf]
    %v2470 = vld [vmem:[#allocation3 + $0xc] sm:$0xf]
    %v2471 = vld [vmem:[#allocation3 + $0x10] sm:$0xf]
    %v2472 = vld [vmem:[#allocation3 + $0x14] sm:$0xf]
    %v2473 = vld [vmem:[#allocation3 + $0x18] sm:$0xf]
    %v2474 = vld [vmem:[#allocation3 + $0x1c] sm:$0xf]
    %v2475 = vld [vmem:[#allocation7] sm:$0xff]
    %v2476 = vld [vmem:[#allocation7 + $0x8] sm:$0xf]
    %v2477 = vld [vmem:[#allocation7 + $0xc] sm:$0xff]
    %v2478 = vld [vmem:[#allocation7 + $0x14] sm:$0xf]
    %v2479 = vld [vmem:[#allocation7 + $0x18] sm:$0xff]
    %v2480 = vld [vmem:[#allocation7 + $0x20] sm:$0xf]
    %v2481 = vld [vmem:[#allocation7 + $0x24] sm:$0xff]
    %v2482 = vld [vmem:[#allocation7 + $0x2c] sm:$0xf]
    %v2483 = vld [vmem:[#allocation7 + $0x30] sm:$0xff]
    %v2484 = vld [vmem:[#allocation7 + $0x38] sm:$0xf]
    %v2485 = vld [vmem:[#allocation7 + $0x3c] sm:$0xff]
    %v2486 = vld [vmem:[#allocation7 + $0x44] sm:$0xf]
    %v2487 = vld [vmem:[#allocation7 + $0x48] sm:$0xff]
    %v2488 = vld [vmem:[#allocation7 + $0x50] sm:$0xf]
    %v2489 = vld [vmem:[#allocation7 + $0x54] sm:$0xff]
    %v2490 = vld [vmem:[#allocation7 + $0x5c] sm:$0xf]
    %v2491 = vld [vmem:[#allocation7 + $0x60] sm:$0xff]
    %v2492 = vld [vmem:[#allocation7 + $0x68] sm:$0xf]
    %v2493 = vld [vmem:[#allocation7 + $0x6c] sm:$0xff]
    %v2494 = vld [vmem:[#allocation7 + $0x74] sm:$0xf]
    %v2495 = vld [vmem:[#allocation7 + $0x78] sm:$0xff]
    %v2496 = vld [vmem:[#allocation7 + $0x80] sm:$0xf]
    %v2497 = vld [vmem:[#allocation7 + $0x84] sm:$0xff]
    %v2498 = vld [vmem:[#allocation7 + $0x8c] sm:$0xf]
    %v2499 = vld [vmem:[#allocation7 + $0x90] sm:$0xff]
    %v2500 = vld [vmem:[#allocation7 + $0x98] sm:$0xf]
    %v2501 = vld [vmem:[#allocation7 + $0x9c] sm:$0xff]
    %v2502 = vld [vmem:[#allocation7 + $0xa4] sm:$0xf]
    %v2503 = vld [vmem:[#allocation7 + $0xa8] sm:$0xff]
    %v2504 = vld [vmem:[#allocation7 + $0xb0] sm:$0xf]
    %v2505 = vld [vmem:[#allocation7 + $0xb4] sm:$0xff]
    %v2506 = vld [vmem:[#allocation7 + $0xbc] sm:$0xf]
    %v2507 = vld [vmem:[%s7] sm:$0x7]
    %v2509 = vlaneseq
    %v2510 = vshrl.u32 %v2509, 7
    %v2511 = vsub.s32 0, %v2510
    %v2512 = vrot.slane %v2507, %v2511
    %v2513 = vlaneseq
    %v2514 = vshrl.u32 %v2513, 7
    %v2515 = vsub.s32 1, %v2514
    %v2516 = vrot.slane %v2507, %v2515
    %v2517 = vlaneseq
    %v2518 = vshrl.u32 %v2517, 7
    %v2519 = vsub.s32 2, %v2518
    %v2520 = vrot.slane %v2507, %v2519
    %v2532 = vunpack.c.l.b16 %v2467
    %v2533 = vunpack.c.l.b16 %v2468
    %v2534 = vunpack.c.l.b16 %v2469
    %v2535 = vunpack.c.l.b16 %v2470
    %v2536 = vunpack.c.l.b16 %v2471
    %v2537 = vunpack.c.l.b16 %v2472
    %v2538 = vunpack.c.l.b16 %v2473
    %v2539 = vunpack.c.l.b16 %v2474
    %v2540 = vpack.c.b16 %v2533, %v2532
    %v2541 = vpack.c.b16 %v2535, %v2534
    %v2542 = vpack.c.b16 %v2537, %v2536
    %v2543 = vpack.c.b16 %v2539, %v2538
    %v2580 = vunpack.c.l.b16 %v2475
    %v2581 = vunpack.c.h.b16 %v2475
    %v2582 = vunpack.c.l.b16 %v2476
    %v2583 = vunpack.c.l.b16 %v2477
    %v2584 = vunpack.c.h.b16 %v2477
    %v2585 = vunpack.c.l.b16 %v2478
    %v2586 = vunpack.c.l.b16 %v2479
    %v2587 = vunpack.c.h.b16 %v2479
    %v2588 = vunpack.c.l.b16 %v2480
    %v2589 = vunpack.c.l.b16 %v2481
    %v2590 = vunpack.c.h.b16 %v2481
    %v2591 = vunpack.c.l.b16 %v2482
    %v2592 = vunpack.c.l.b16 %v2483
    %v2593 = vunpack.c.h.b16 %v2483
    %v2594 = vunpack.c.l.b16 %v2484
    %v2595 = vunpack.c.l.b16 %v2485
    %v2596 = vunpack.c.h.b16 %v2485
    %v2597 = vunpack.c.l.b16 %v2486
    %v2598 = vunpack.c.l.b16 %v2487
    %v2599 = vunpack.c.h.b16 %v2487
    %v2600 = vunpack.c.l.b16 %v2488
    %v2601 = vunpack.c.l.b16 %v2489
    %v2602 = vunpack.c.h.b16 %v2489
    %v2603 = vunpack.c.l.b16 %v2490
    %v2604 = vunpack.c.l.b16 %v2491
    %v2605 = vunpack.c.h.b16 %v2491
    %v2606 = vunpack.c.l.b16 %v2492
    %v2607 = vunpack.c.l.b16 %v2493
    %v2608 = vunpack.c.h.b16 %v2493
    %v2609 = vunpack.c.l.b16 %v2494
    %v2610 = vunpack.c.l.b16 %v2495
    %v2611 = vunpack.c.h.b16 %v2495
    %v2612 = vunpack.c.l.b16 %v2496
    %v2613 = vunpack.c.l.b16 %v2497
    %v2614 = vunpack.c.h.b16 %v2497
    %v2615 = vunpack.c.l.b16 %v2498
    %v2616 = vunpack.c.l.b16 %v2499
    %v2617 = vunpack.c.h.b16 %v2499
    %v2618 = vunpack.c.l.b16 %v2500
    %v2619 = vunpack.c.l.b16 %v2501
    %v2620 = vunpack.c.h.b16 %v2501
    %v2621 = vunpack.c.l.b16 %v2502
    %v2622 = vunpack.c.l.b16 %v2503
    %v2623 = vunpack.c.h.b16 %v2503
    %v2624 = vunpack.c.l.b16 %v2504
    %v2625 = vunpack.c.l.b16 %v2505
    %v2626 = vunpack.c.h.b16 %v2505
    %v2627 = vunpack.c.l.b16 %v2506
    %v2628 = vpack.c.b16 %v2583, %v2580
    %v2629 = vpack.c.b16 %v2584, %v2581
    %v2630 = vpack.c.b16 %v2585, %v2582
    %v2631 = vpack.c.b16 %v2589, %v2586
    %v2632 = vpack.c.b16 %v2590, %v2587
    %v2633 = vpack.c.b16 %v2591, %v2588
    %v2634 = vpack.c.b16 %v2595, %v2592
    %v2635 = vpack.c.b16 %v2596, %v2593
    %v2636 = vpack.c.b16 %v2597, %v2594
    %v2637 = vpack.c.b16 %v2601, %v2598
    %v2638 = vpack.c.b16 %v2602, %v2599
    %v2639 = vpack.c.b16 %v2603, %v2600
    %v2640 = vpack.c.b16 %v2607, %v2604
    %v2641 = vpack.c.b16 %v2608, %v2605
    %v2642 = vpack.c.b16 %v2609, %v2606
    %v2643 = vpack.c.b16 %v2613, %v2610
    %v2644 = vpack.c.b16 %v2614, %v2611
    %v2645 = vpack.c.b16 %v2615, %v2612
    %v2646 = vpack.c.b16 %v2619, %v2616
    %v2647 = vpack.c.b16 %v2620, %v2617
    %v2648 = vpack.c.b16 %v2621, %v2618
    %v2649 = vpack.c.b16 %v2625, %v2622
    %v2650 = vpack.c.b16 %v2626, %v2623
    %v2651 = vpack.c.b16 %v2627, %v2624
    %2676 = vmatprep.subr.bf16.mxu0 %v2650
    %2677 = vmatpush1.bf16.msra.mxu0 %v2649
    %2678 = vmatprep.subr.bf16.mxu0 %v2647
    %2679 = vmatpush1.bf16.msra.mxu0 %v2646
    %2680 = vmatprep.subr.bf16.mxu0 %v2644
    %2681 = vmatpush1.bf16.msra.mxu0 %v2643
    %2682 = vmatprep.subr.bf16.mxu0 %v2641
    %2683 = vmatpush1.bf16.msra.mxu0 %v2640
    %2684 = vmatprep.subr.bf16.mxu0 %v2638
    %2685 = vmatpush1.bf16.msra.mxu0 %v2637
    %2686 = vmatprep.subr.bf16.mxu0 %v2635
    %2687 = vmatpush1.bf16.msra.mxu0 %v2634
    %2688 = vmatprep.subr.bf16.mxu0 %v2632
    %2689 = vmatpush1.bf16.msra.mxu0 %v2631
    %2690 = vmatprep.subr.bf16.mxu0 %v2629
    %2691 = vmatpush1.bf16.msra.mxu0 %v2628
    %2692 = vmatprep.subr.bf16.mxu0 0
    %2693 = vmatpush2.bf16.msra.mxu0 0
    %2694 = vmatprep.subr.bf16.mxu0 0
    %2695 = vmatpush2.bf16.msra.mxu0 0
    %2696 = vmatprep.subr.bf16.mxu0 0
    %2697 = vmatpush2.bf16.msra.mxu0 0
    %2698 = vmatprep.subr.bf16.mxu0 0
    %2699 = vmatpush2.bf16.msra.mxu0 0
    %2700 = vmatprep.subr.bf16.mxu0 0
    %2701 = vmatpush2.bf16.msra.mxu0 0
    %2702 = vmatprep.subr.bf16.mxu0 0
    %2703 = vmatpush2.bf16.msra.mxu0 0
    %2704 = vmatprep.subr.bf16.mxu0 0
    %2705 = vmatpush2.bf16.msra.mxu0 0
    %2706 = vmatprep.subr.bf16.mxu0 0
    %2707 = vmatpush2.bf16.msra.mxu0 0
    %2708 = vmatprep.mubr.bf16.mxu0 0
    %2709 = vmatmul.mubr.bf16.gmra.mxu0 %v2540
    %v2710 = vpop.f32.mrf.mxu0
    %v2711 = vadd.f32 %v2512, %v2710
    %v2712 = vpop.f32.mrf.mxu0
    %v2713 = vadd.f32 %v2516, %v2712
    %v2714 = vpop.f32.mrf.mxu0
    %v2715 = vadd.f32 %v2512, %v2714
    %v2716 = vpop.f32.mrf.mxu0
    %v2717 = vadd.f32 %v2516, %v2716
    %2718 = vmatprep.mubr.bf16.mxu0 0
    %2719 = vmatmul.mubr.bf16.gmra.mxu0 %v2541
    %v2720 = vpop.f32.mrf.mxu0
    %v2721 = vadd.f32 %v2512, %v2720
    %v2722 = vpop.f32.mrf.mxu0
    %v2723 = vadd.f32 %v2516, %v2722
    %v2724 = vpop.f32.mrf.mxu0
    %v2725 = vadd.f32 %v2512, %v2724
    %v2726 = vpop.f32.mrf.mxu0
    %v2727 = vadd.f32 %v2516, %v2726
    %2728 = vmatprep.mubr.bf16.mxu0 0
    %2729 = vmatmul.mubr.bf16.gmra.mxu0 %v2542
    %v2730 = vpop.f32.mrf.mxu0
    %v2731 = vadd.f32 %v2512, %v2730
    %v2732 = vpop.f32.mrf.mxu0
    %v2733 = vadd.f32 %v2516, %v2732
    %v2734 = vpop.f32.mrf.mxu0
    %v2735 = vadd.f32 %v2512, %v2734
    %v2736 = vpop.f32.mrf.mxu0
    %v2737 = vadd.f32 %v2516, %v2736
    %2738 = vmatprep.mubr.bf16.mxu0 0
    %2739 = vmatmul.mubr.bf16.gmra.mxu0 %v2543
    %v2740 = vpop.f32.mrf.mxu0
    %v2741 = vadd.f32 %v2512, %v2740
    %v2742 = vpop.f32.mrf.mxu0
    %v2743 = vadd.f32 %v2516, %v2742
    %v2744 = vpop.f32.mrf.mxu0
    %v2745 = vadd.f32 %v2512, %v2744
    %v2746 = vpop.f32.mrf.mxu0
    %v2747 = vadd.f32 %v2516, %v2746
    %2748 = vdwg.mxu0
    %2749 = vmatprep.subr.bf16.mxu0 0
    %2750 = vmatpush1.bf16.msra.mxu0 %v2651
    %2751 = vmatprep.subr.bf16.mxu0 0
    %2752 = vmatpush1.bf16.msra.mxu0 %v2648
    %2753 = vmatprep.subr.bf16.mxu0 0
    %2754 = vmatpush1.bf16.msra.mxu0 %v2645
    %2755 = vmatprep.subr.bf16.mxu0 0
    %2756 = vmatpush1.bf16.msra.mxu0 %v2642
    %2757 = vmatprep.subr.bf16.mxu0 0
    %2758 = vmatpush1.bf16.msra.mxu0 %v2639
    %2759 = vmatprep.subr.bf16.mxu0 0
    %2760 = vmatpush1.bf16.msra.mxu0 %v2636
    %2761 = vmatprep.subr.bf16.mxu0 0
    %2762 = vmatpush1.bf16.msra.mxu0 %v2633
    %2763 = vmatprep.subr.bf16.mxu0 0
    %2764 = vmatpush1.bf16.msra.mxu0 %v2630
    %2765 = vmatprep.subr.bf16.mxu0 0
    %2766 = vmatpush2.bf16.msra.mxu0 0
    %2767 = vmatprep.subr.bf16.mxu0 0
    %2768 = vmatpush2.bf16.msra.mxu0 0
    %2769 = vmatprep.subr.bf16.mxu0 0
    %2770 = vmatpush2.bf16.msra.mxu0 0
    %2771 = vmatprep.subr.bf16.mxu0 0
    %2772 = vmatpush2.bf16.msra.mxu0 0
    %2773 = vmatprep.subr.bf16.mxu0 0
    %2774 = vmatpush2.bf16.msra.mxu0 0
    %2775 = vmatprep.subr.bf16.mxu0 0
    %2776 = vmatpush2.bf16.msra.mxu0 0
    %2777 = vmatprep.subr.bf16.mxu0 0
    %2778 = vmatpush2.bf16.msra.mxu0 0
    %2779 = vmatprep.subr.bf16.mxu0 0
    %2780 = vmatpush2.bf16.msra.mxu0 0
    %2781 = vmatprep.mubr.bf16.mxu0 0
    %2782 = vmatmul.mubr.bf16.gmra.mxu0 %v2540
    %v2783 = vpop.f32.mrf.mxu0
    %v2784 = vadd.f32 %v2520, %v2783
    %v2785 = vpop.f32.mrf.mxu0
    %v2786 = vpop.f32.mrf.mxu0
    %v2787 = vadd.f32 %v2520, %v2786
    %v2788 = vpop.f32.mrf.mxu0
    %2789 = vmatprep.mubr.bf16.mxu0 0
    %2790 = vmatmul.mubr.bf16.gmra.mxu0 %v2541
    %v2791 = vpop.f32.mrf.mxu0
    %v2792 = vadd.f32 %v2520, %v2791
    %v2793 = vpop.f32.mrf.mxu0
    %v2794 = vpop.f32.mrf.mxu0
    %v2795 = vadd.f32 %v2520, %v2794
    %v2796 = vpop.f32.mrf.mxu0
    %2797 = vmatprep.mubr.bf16.mxu0 0
    %2798 = vmatmul.mubr.bf16.gmra.mxu0 %v2542
    %v2799 = vpop.f32.mrf.mxu0
    %v2800 = vadd.f32 %v2520, %v2799
    %v2801 = vpop.f32.mrf.mxu0
    %v2802 = vpop.f32.mrf.mxu0
    %v2803 = vadd.f32 %v2520, %v2802
    %v2804 = vpop.f32.mrf.mxu0
    %2805 = vmatprep.mubr.bf16.mxu0 0
    %2806 = vmatmul.mubr.bf16.gmra.mxu0 %v2543
    %v2807 = vpop.f32.mrf.mxu0
    %v2808 = vadd.f32 %v2520, %v2807
    %v2809 = vpop.f32.mrf.mxu0
    %v2810 = vpop.f32.mrf.mxu0
    %v2811 = vadd.f32 %v2520, %v2810
    %v2812 = vpop.f32.mrf.mxu0
    %2813 = vdwg.mxu0
    %2814 = vst [vmem:[#allocation2] sm:$0xff] %v2711
    %2815 = vst [vmem:[#allocation2 + $0x8] sm:$0xff] %v2713
    %2816 = vst [vmem:[#allocation2 + $0x10] sm:$0xff] %v2784
    %2817 = vst [vmem:[#allocation2 + $0x18] sm:$0xff] %v2715
    %2818 = vst [vmem:[#allocation2 + $0x20] sm:$0xff] %v2717
    %2819 = vst [vmem:[#allocation2 + $0x28] sm:$0xff] %v2787
    %2820 = vst [vmem:[#allocation2 + $0x30] sm:$0xff] %v2721
    %2821 = vst [vmem:[#allocation2 + $0x38] sm:$0xff] %v2723
    %2822 = vst [vmem:[#allocation2 + $0x40] sm:$0xff] %v2792
    %2823 = vst [vmem:[#allocation2 + $0x48] sm:$0xff] %v2725
    %2824 = vst [vmem:[#allocation2 + $0x50] sm:$0xff] %v2727
    %2825 = vst [vmem:[#allocation2 + $0x58] sm:$0xff] %v2795
    %2826 = vst [vmem:[#allocation2 + $0x60] sm:$0xff] %v2731
    %2827 = vst [vmem:[#allocation2 + $0x68] sm:$0xff] %v2733
    %2828 = vst [vmem:[#allocation2 + $0x70] sm:$0xff] %v2800
    %2829 = vst [vmem:[#allocation2 + $0x78] sm:$0xff] %v2735
    %2830 = vst [vmem:[#allocation2 + $0x80] sm:$0xff] %v2737
    %2831 = vst [vmem:[#allocation2 + $0x88] sm:$0xff] %v2803
    %2832 = vst [vmem:[#allocation2 + $0x90] sm:$0xff] %v2741
    %2833 = vst [vmem:[#allocation2 + $0x98] sm:$0xff] %v2743
    %2834 = vst [vmem:[#allocation2 + $0xa0] sm:$0xff] %v2808
    %2835 = vst [vmem:[#allocation2 + $0xa8] sm:$0xff] %v2745
    %2836 = vst [vmem:[#allocation2 + $0xb0] sm:$0xff] %v2747
    %2837 = vst [vmem:[#allocation2 + $0xb8] sm:$0xff] %v2811
    %v2838 = vld [vmem:[%s9] sm:$0x1]
    %v2840 = vlaneseq
    %v2841 = vshrl.u32 %v2840, 7
    %v2842 = vsub.s32 0, %v2841
    %v2843 = vrot.slane %v2838, %v2842
    %s2845 = scalar_lea.vmem %s1, 8
    %v2846 = vld [vmem:[%s2845] sm:$0xff]
    %v2847 = vld [vmem:[#allocation2] sm:$0xff]
    %v2848 = vld [vmem:[#allocation2 + $0x8] sm:$0xff]
    %v2849 = vld [vmem:[#allocation2 + $0x10] sm:$0xff]
    %v2850 = vpack.c.bf16 %v2846, %v2846
    %v2851 = vld [vmem:[#allocation9] sm:$0xff]
    %v2852 = vld [vmem:[#allocation9 + $0x8] sm:$0xf]
    %v2853 = vld [vmem:[#allocation9 + $0xc] sm:$0xff]
    %v2854 = vld [vmem:[#allocation9 + $0x14] sm:$0xf]
    %v2855 = vld [vmem:[#allocation9 + $0x18] sm:$0xff]
    %v2856 = vld [vmem:[#allocation9 + $0x20] sm:$0xf]
    %v2857 = vld [vmem:[#allocation9 + $0x24] sm:$0xff]
    %v2858 = vld [vmem:[#allocation9 + $0x2c] sm:$0xf]
    %v2859 = vld [vmem:[#allocation9 + $0x30] sm:$0xff]
    %v2860 = vld [vmem:[#allocation9 + $0x38] sm:$0xf]
    %v2861 = vld [vmem:[#allocation9 + $0x3c] sm:$0xff]
    %v2862 = vld [vmem:[#allocation9 + $0x44] sm:$0xf]
    %v2863 = vld [vmem:[#allocation9 + $0x48] sm:$0xff]
    %v2864 = vld [vmem:[#allocation9 + $0x50] sm:$0xf]
    %v2865 = vld [vmem:[#allocation9 + $0x54] sm:$0xff]
    %v2866 = vld [vmem:[#allocation9 + $0x5c] sm:$0xf]
    %v2867 = vld [vmem:[#allocation9 + $0x60] sm:$0xff]
    %v2868 = vld [vmem:[#allocation9 + $0x68] sm:$0xf]
    %v2869 = vld [vmem:[#allocation9 + $0x6c] sm:$0xff]
    %v2870 = vld [vmem:[#allocation9 + $0x74] sm:$0xf]
    %v2871 = vld [vmem:[#allocation9 + $0x78] sm:$0xff]
    %v2872 = vld [vmem:[#allocation9 + $0x80] sm:$0xf]
    %v2873 = vld [vmem:[#allocation9 + $0x84] sm:$0xff]
    %v2874 = vld [vmem:[#allocation9 + $0x8c] sm:$0xf]
    %v2875 = vld [vmem:[#allocation9 + $0x90] sm:$0xff]
    %v2876 = vld [vmem:[#allocation9 + $0x98] sm:$0xf]
    %v2877 = vld [vmem:[#allocation9 + $0x9c] sm:$0xff]
    %v2878 = vld [vmem:[#allocation9 + $0xa4] sm:$0xf]
    %v2879 = vld [vmem:[#allocation9 + $0xa8] sm:$0xff]
    %v2880 = vld [vmem:[#allocation9 + $0xb0] sm:$0xf]
    %v2881 = vld [vmem:[#allocation9 + $0xb4] sm:$0xff]
    %v2882 = vld [vmem:[#allocation9 + $0xbc] sm:$0xf]
    %v2915 = vunpack.c.l.b16 %v2851
    %v2916 = vunpack.c.h.b16 %v2851
    %v2917 = vunpack.c.l.b16 %v2852
    %v2918 = vunpack.c.l.b16 %v2853
    %v2919 = vunpack.c.h.b16 %v2853
    %v2920 = vunpack.c.l.b16 %v2854
    %v2921 = vunpack.c.l.b16 %v2855
    %v2922 = vunpack.c.h.b16 %v2855
    %v2923 = vunpack.c.l.b16 %v2856
    %v2924 = vunpack.c.l.b16 %v2857
    %v2925 = vunpack.c.h.b16 %v2857
    %v2926 = vunpack.c.l.b16 %v2858
    %v2927 = vunpack.c.l.b16 %v2859
    %v2928 = vunpack.c.h.b16 %v2859
    %v2929 = vunpack.c.l.b16 %v2860
    %v2930 = vunpack.c.l.b16 %v2861
    %v2931 = vunpack.c.h.b16 %v2861
    %v2932 = vunpack.c.l.b16 %v2862
    %v2933 = vunpack.c.l.b16 %v2863
    %v2934 = vunpack.c.h.b16 %v2863
    %v2935 = vunpack.c.l.b16 %v2864
    %v2936 = vunpack.c.l.b16 %v2865
    %v2937 = vunpack.c.h.b16 %v2865
    %v2938 = vunpack.c.l.b16 %v2866
    %v2939 = vunpack.c.l.b16 %v2867
    %v2940 = vunpack.c.h.b16 %v2867
    %v2941 = vunpack.c.l.b16 %v2868
    %v2942 = vunpack.c.l.b16 %v2869
    %v2943 = vunpack.c.h.b16 %v2869
    %v2944 = vunpack.c.l.b16 %v2870
    %v2945 = vunpack.c.l.b16 %v2871
    %v2946 = vunpack.c.h.b16 %v2871
    %v2947 = vunpack.c.l.b16 %v2872
    %v2948 = vunpack.c.l.b16 %v2873
    %v2949 = vunpack.c.h.b16 %v2873
    %v2950 = vunpack.c.l.b16 %v2874
    %v2951 = vunpack.c.l.b16 %v2875
    %v2952 = vunpack.c.h.b16 %v2875
    %v2953 = vunpack.c.l.b16 %v2876
    %v2954 = vunpack.c.l.b16 %v2877
    %v2955 = vunpack.c.h.b16 %v2877
    %v2956 = vunpack.c.l.b16 %v2878
    %v2957 = vunpack.c.l.b16 %v2879
    %v2958 = vunpack.c.h.b16 %v2879
    %v2959 = vunpack.c.l.b16 %v2880
    %v2960 = vunpack.c.l.b16 %v2881
    %v2961 = vunpack.c.h.b16 %v2881
    %v2962 = vunpack.c.l.b16 %v2882
    %v2963 = vpack.c.b16 %v2918, %v2915
    %v2964 = vpack.c.b16 %v2919, %v2916
    %v2965 = vpack.c.b16 %v2920, %v2917
    %v2966 = vpack.c.b16 %v2924, %v2921
    %v2967 = vpack.c.b16 %v2925, %v2922
    %v2968 = vpack.c.b16 %v2926, %v2923
    %v2969 = vpack.c.b16 %v2930, %v2927
    %v2970 = vpack.c.b16 %v2931, %v2928
    %v2971 = vpack.c.b16 %v2932, %v2929
    %v2972 = vpack.c.b16 %v2936, %v2933
    %v2973 = vpack.c.b16 %v2937, %v2934
    %v2974 = vpack.c.b16 %v2938, %v2935
    %v2975 = vpack.c.b16 %v2942, %v2939
    %v2976 = vpack.c.b16 %v2943, %v2940
    %v2977 = vpack.c.b16 %v2944, %v2941
    %v2978 = vpack.c.b16 %v2948, %v2945
    %v2979 = vpack.c.b16 %v2949, %v2946
    %v2980 = vpack.c.b16 %v2950, %v2947
    %v2981 = vpack.c.b16 %v2954, %v2951
    %v2982 = vpack.c.b16 %v2955, %v2952
    %v2983 = vpack.c.b16 %v2956, %v2953
    %v2984 = vpack.c.b16 %v2960, %v2957
    %v2985 = vpack.c.b16 %v2961, %v2958
    %v2986 = vpack.c.b16 %v2962, %v2959
    %3011 = vmatprep.subr.bf16.mxu0 %v2985
    %3012 = vmatpush1.bf16.msra.mxu0 %v2984
    %3013 = vmatprep.subr.bf16.mxu0 %v2982
    %3014 = vmatpush1.bf16.msra.mxu0 %v2981
    %3015 = vmatprep.subr.bf16.mxu0 %v2979
    %3016 = vmatpush1.bf16.msra.mxu0 %v2978
    %3017 = vmatprep.subr.bf16.mxu0 %v2976
    %3018 = vmatpush1.bf16.msra.mxu0 %v2975
    %3019 = vmatprep.subr.bf16.mxu0 %v2973
    %3020 = vmatpush1.bf16.msra.mxu0 %v2972
    %3021 = vmatprep.subr.bf16.mxu0 %v2970
    %3022 = vmatpush1.bf16.msra.mxu0 %v2969
    %3023 = vmatprep.subr.bf16.mxu0 %v2967
    %3024 = vmatpush1.bf16.msra.mxu0 %v2966
    %3025 = vmatprep.subr.bf16.mxu0 %v2964
    %3026 = vmatpush1.bf16.msra.mxu0 %v2963
    %3027 = vmatprep.subr.bf16.mxu0 0
    %3028 = vmatpush2.bf16.msra.mxu0 0
    %3029 = vmatprep.subr.bf16.mxu0 0
    %3030 = vmatpush2.bf16.msra.mxu0 0
    %3031 = vmatprep.subr.bf16.mxu0 0
    %3032 = vmatpush2.bf16.msra.mxu0 0
    %3033 = vmatprep.subr.bf16.mxu0 0
    %3034 = vmatpush2.bf16.msra.mxu0 0
    %3035 = vmatprep.subr.bf16.mxu0 0
    %3036 = vmatpush2.bf16.msra.mxu0 0
    %3037 = vmatprep.subr.bf16.mxu0 0
    %3038 = vmatpush2.bf16.msra.mxu0 0
    %3039 = vmatprep.subr.bf16.mxu0 0
    %3040 = vmatpush2.bf16.msra.mxu0 0
    %3041 = vmatprep.subr.bf16.mxu0 0
    %3042 = vmatpush2.bf16.msra.mxu0 0
    %3043 = vmatprep.mubr.bf16.mxu0 0
    %3044 = vmatmul.mubr.bf16.gmra.mxu0 %v2850
    %v3045 = vpop.f32.mrf.mxu0
    %v3046 = vadd.f32 0.0, %v3045
    %v3047 = vpop.f32.mrf.mxu0
    %v3048 = vadd.f32 0.0, %v3047
    %v3049 = vpop.f32.mrf.mxu0
    %v3050 = vpop.f32.mrf.mxu0
    %3051 = vdwg.mxu0
    %3052 = vmatprep.subr.bf16.mxu0 0
    %3053 = vmatpush1.bf16.msra.mxu0 %v2986
    %3054 = vmatprep.subr.bf16.mxu0 0
    %3055 = vmatpush1.bf16.msra.mxu0 %v2983
    %3056 = vmatprep.subr.bf16.mxu0 0
    %3057 = vmatpush1.bf16.msra.mxu0 %v2980
    %3058 = vmatprep.subr.bf16.mxu0 0
    %3059 = vmatpush1.bf16.msra.mxu0 %v2977
    %3060 = vmatprep.subr.bf16.mxu0 0
    %3061 = vmatpush1.bf16.msra.mxu0 %v2974
    %3062 = vmatprep.subr.bf16.mxu0 0
    %3063 = vmatpush1.bf16.msra.mxu0 %v2971
    %3064 = vmatprep.subr.bf16.mxu0 0
    %3065 = vmatpush1.bf16.msra.mxu0 %v2968
    %3066 = vmatprep.subr.bf16.mxu0 0
    %3067 = vmatpush1.bf16.msra.mxu0 %v2965
    %3068 = vmatprep.subr.bf16.mxu0 0
    %3069 = vmatpush2.bf16.msra.mxu0 0
    %3070 = vmatprep.subr.bf16.mxu0 0
    %3071 = vmatpush2.bf16.msra.mxu0 0
    %3072 = vmatprep.subr.bf16.mxu0 0
    %3073 = vmatpush2.bf16.msra.mxu0 0
    %3074 = vmatprep.subr.bf16.mxu0 0
    %3075 = vmatpush2.bf16.msra.mxu0 0
    %3076 = vmatprep.subr.bf16.mxu0 0
    %3077 = vmatpush2.bf16.msra.mxu0 0
    %3078 = vmatprep.subr.bf16.mxu0 0
    %3079 = vmatpush2.bf16.msra.mxu0 0
    %3080 = vmatprep.subr.bf16.mxu0 0
    %3081 = vmatpush2.bf16.msra.mxu0 0
    %3082 = vmatprep.subr.bf16.mxu0 0
    %3083 = vmatpush2.bf16.msra.mxu0 0
    %3084 = vmatprep.mubr.bf16.mxu0 0
    %3085 = vmatmul.mubr.bf16.gmra.mxu0 %v2850
    %v3086 = vpop.f32.mrf.mxu0
    %v3087 = vadd.f32 0.0, %v3086
    %v3088 = vpop.f32.mrf.mxu0
    %v3089 = vpop.f32.mrf.mxu0
    %v3090 = vpop.f32.mrf.mxu0
    %3091 = vdwg.mxu0
    %v3092 = vadd.f32 %v2847, %v3046
    %v3093 = vxor.u32 %v3092, 2147483648
    %v3094 = vmul.f32 %v3093, 1.442695
    %v3095 = vpow.pop %v3094
    %v3096 = vadd.f32 %v3095, 1.0
    %v3097 = vrcp.pop %v3096
    %v3098 = vmul.f32 1.0, %v3097
    %v3099 = vadd.f32 %v2848, %v3048
    %v3100 = vxor.u32 %v3099, 2147483648
    %v3101 = vmul.f32 %v3100, 1.442695
    %v3102 = vpow.pop %v3101
    %v3103 = vadd.f32 %v3102, 1.0
    %v3104 = vrcp.pop %v3103
    %v3105 = vmul.f32 1.0, %v3104
    %v3106 = vadd.f32 %v3087, %v2843
    %v3107 = vmul.f32 %v3098, %v3106
    %v3108 = vadd.f32 %v2849, %v3107
    %v3109 = vtanh.pop %v3108
    %v3110 = vsub.f32 %v2846, %v3109
    %v3111 = vmul.f32 %v3105, %v3110
    %v3112 = vadd.f32 %v3109, %v3111
    %3113 = vst [vmem:[#allocation10] sm:$0xff] %v3112
    %v3114 = vld [vmem:[#allocation2 + $0x18] sm:$0xff]
    %v3115 = vld [vmem:[#allocation2 + $0x20] sm:$0xff]
    %v3116 = vld [vmem:[#allocation2 + $0x28] sm:$0xff]
    %v3117 = vpack.c.bf16 %v3112, %v3112
    %v3118 = vld [vmem:[#allocation9] sm:$0xff]
    %v3119 = vld [vmem:[#allocation9 + $0x8] sm:$0xf]
    %v3120 = vld [vmem:[#allocation9 + $0xc] sm:$0xff]
    %v3121 = vld [vmem:[#allocation9 + $0x14] sm:$0xf]
    %v3122 = vld [vmem:[#allocation9 + $0x18] sm:$0xff]
    %v3123 = vld [vmem:[#allocation9 + $0x20] sm:$0xf]
    %v3124 = vld [vmem:[#allocation9 + $0x24] sm:$0xff]
    %v3125 = vld [vmem:[#allocation9 + $0x2c] sm:$0xf]
    %v3126 = vld [vmem:[#allocation9 + $0x30] sm:$0xff]
    %v3127 = vld [vmem:[#allocation9 + $0x38] sm:$0xf]
    %v3128 = vld [vmem:[#allocation9 + $0x3c] sm:$0xff]
    %v3129 = vld [vmem:[#allocation9 + $0x44] sm:$0xf]
    %v3130 = vld [vmem:[#allocation9 + $0x48] sm:$0xff]
    %v3131 = vld [vmem:[#allocation9 + $0x50] sm:$0xf]
    %v3132 = vld [vmem:[#allocation9 + $0x54] sm:$0xff]
    %v3133 = vld [vmem:[#allocation9 + $0x5c] sm:$0xf]
    %v3134 = vld [vmem:[#allocation9 + $0x60] sm:$0xff]
    %v3135 = vld [vmem:[#allocation9 + $0x68] sm:$0xf]
    %v3136 = vld [vmem:[#allocation9 + $0x6c] sm:$0xff]
    %v3137 = vld [vmem:[#allocation9 + $0x74] sm:$0xf]
    %v3138 = vld [vmem:[#allocation9 + $0x78] sm:$0xff]
    %v3139 = vld [vmem:[#allocation9 + $0x80] sm:$0xf]
    %v3140 = vld [vmem:[#allocation9 + $0x84] sm:$0xff]
    %v3141 = vld [vmem:[#allocation9 + $0x8c] sm:$0xf]
    %v3142 = vld [vmem:[#allocation9 + $0x90] sm:$0xff]
    %v3143 = vld [vmem:[#allocation9 + $0x98] sm:$0xf]
    %v3144 = vld [vmem:[#allocation9 + $0x9c] sm:$0xff]
    %v3145 = vld [vmem:[#allocation9 + $0xa4] sm:$0xf]
    %v3146 = vld [vmem:[#allocation9 + $0xa8] sm:$0xff]
    %v3147 = vld [vmem:[#allocation9 + $0xb0] sm:$0xf]
    %v3148 = vld [vmem:[#allocation9 + $0xb4] sm:$0xff]
    %v3149 = vld [vmem:[#allocation9 + $0xbc] sm:$0xf]
    %v3182 = vunpack.c.l.b16 %v3118
    %v3183 = vunpack.c.h.b16 %v3118
    %v3184 = vunpack.c.l.b16 %v3119
    %v3185 = vunpack.c.l.b16 %v3120
    %v3186 = vunpack.c.h.b16 %v3120
    %v3187 = vunpack.c.l.b16 %v3121
    %v3188 = vunpack.c.l.b16 %v3122
    %v3189 = vunpack.c.h.b16 %v3122
    %v3190 = vunpack.c.l.b16 %v3123
    %v3191 = vunpack.c.l.b16 %v3124
    %v3192 = vunpack.c.h.b16 %v3124
    %v3193 = vunpack.c.l.b16 %v3125
    %v3194 = vunpack.c.l.b16 %v3126
    %v3195 = vunpack.c.h.b16 %v3126
    %v3196 = vunpack.c.l.b16 %v3127
    %v3197 = vunpack.c.l.b16 %v3128
    %v3198 = vunpack.c.h.b16 %v3128
    %v3199 = vunpack.c.l.b16 %v3129
    %v3200 = vunpack.c.l.b16 %v3130
    %v3201 = vunpack.c.h.b16 %v3130
    %v3202 = vunpack.c.l.b16 %v3131
    %v3203 = vunpack.c.l.b16 %v3132
    %v3204 = vunpack.c.h.b16 %v3132
    %v3205 = vunpack.c.l.b16 %v3133
    %v3206 = vunpack.c.l.b16 %v3134
    %v3207 = vunpack.c.h.b16 %v3134
    %v3208 = vunpack.c.l.b16 %v3135
    %v3209 = vunpack.c.l.b16 %v3136
    %v3210 = vunpack.c.h.b16 %v3136
    %v3211 = vunpack.c.l.b16 %v3137
    %v3212 = vunpack.c.l.b16 %v3138
    %v3213 = vunpack.c.h.b16 %v3138
    %v3214 = vunpack.c.l.b16 %v3139
    %v3215 = vunpack.c.l.b16 %v3140
    %v3216 = vunpack.c.h.b16 %v3140
    %v3217 = vunpack.c.l.b16 %v3141
    %v3218 = vunpack.c.l.b16 %v3142
    %v3219 = vunpack.c.h.b16 %v3142
    %v3220 = vunpack.c.l.b16 %v3143
    %v3221 = vunpack.c.l.b16 %v3144
    %v3222 = vunpack.c.h.b16 %v3144
    %v3223 = vunpack.c.l.b16 %v3145
    %v3224 = vunpack.c.l.b16 %v3146
    %v3225 = vunpack.c.h.b16 %v3146
    %v3226 = vunpack.c.l.b16 %v3147
    %v3227 = vunpack.c.l.b16 %v3148
    %v3228 = vunpack.c.h.b16 %v3148
    %v3229 = vunpack.c.l.b16 %v3149
    %v3230 = vpack.c.b16 %v3185, %v3182
    %v3231 = vpack.c.b16 %v3186, %v3183
    %v3232 = vpack.c.b16 %v3187, %v3184
    %v3233 = vpack.c.b16 %v3191, %v3188
    %v3234 = vpack.c.b16 %v3192, %v3189
    %v3235 = vpack.c.b16 %v3193, %v3190
    %v3236 = vpack.c.b16 %v3197, %v3194
    %v3237 = vpack.c.b16 %v3198, %v3195
    %v3238 = vpack.c.b16 %v3199, %v3196
    %v3239 = vpack.c.b16 %v3203, %v3200
    %v3240 = vpack.c.b16 %v3204, %v3201
    %v3241 = vpack.c.b16 %v3205, %v3202
    %v3242 = vpack.c.b16 %v3209, %v3206
    %v3243 = vpack.c.b16 %v3210, %v3207
    %v3244 = vpack.c.b16 %v3211, %v3208
    %v3245 = vpack.c.b16 %v3215, %v3212
    %v3246 = vpack.c.b16 %v3216, %v3213
    %v3247 = vpack.c.b16 %v3217, %v3214
    %v3248 = vpack.c.b16 %v3221, %v3218
    %v3249 = vpack.c.b16 %v3222, %v3219
    %v3250 = vpack.c.b16 %v3223, %v3220
    %v3251 = vpack.c.b16 %v3227, %v3224
    %v3252 = vpack.c.b16 %v3228, %v3225
    %v3253 = vpack.c.b16 %v3229, %v3226
    %3278 = vmatprep.subr.bf16.mxu0 %v3252
    %3279 = vmatpush1.bf16.msra.mxu0 %v3251
    %3280 = vmatprep.subr.bf16.mxu0 %v3249
    %3281 = vmatpush1.bf16.msra.mxu0 %v3248
    %3282 = vmatprep.subr.bf16.mxu0 %v3246
    %3283 = vmatpush1.bf16.msra.mxu0 %v3245
    %3284 = vmatprep.subr.bf16.mxu0 %v3243
    %3285 = vmatpush1.bf16.msra.mxu0 %v3242
    %3286 = vmatprep.subr.bf16.mxu0 %v3240
    %3287 = vmatpush1.bf16.msra.mxu0 %v3239
    %3288 = vmatprep.subr.bf16.mxu0 %v3237
    %3289 = vmatpush1.bf16.msra.mxu0 %v3236
    %3290 = vmatprep.subr.bf16.mxu0 %v3234
    %3291 = vmatpush1.bf16.msra.mxu0 %v3233
    %3292 = vmatprep.subr.bf16.mxu0 %v3231
    %3293 = vmatpush1.bf16.msra.mxu0 %v3230
    %3294 = vmatprep.subr.bf16.mxu0 0
    %3295 = vmatpush2.bf16.msra.mxu0 0
    %3296 = vmatprep.subr.bf16.mxu0 0
    %3297 = vmatpush2.bf16.msra.mxu0 0
    %3298 = vmatprep.subr.bf16.mxu0 0
    %3299 = vmatpush2.bf16.msra.mxu0 0
    %3300 = vmatprep.subr.bf16.mxu0 0
    %3301 = vmatpush2.bf16.msra.mxu0 0
    %3302 = vmatprep.subr.bf16.mxu0 0
    %3303 = vmatpush2.bf16.msra.mxu0 0
    %3304 = vmatprep.subr.bf16.mxu0 0
    %3305 = vmatpush2.bf16.msra.mxu0 0
    %3306 = vmatprep.subr.bf16.mxu0 0
    %3307 = vmatpush2.bf16.msra.mxu0 0
    %3308 = vmatprep.subr.bf16.mxu0 0
    %3309 = vmatpush2.bf16.msra.mxu0 0
    %3310 = vmatprep.mubr.bf16.mxu0 0
    %3311 = vmatmul.mubr.bf16.gmra.mxu0 %v3117
    %v3312 = vpop.f32.mrf.mxu0
    %v3313 = vadd.f32 0.0, %v3312
    %v3314 = vpop.f32.mrf.mxu0
    %v3315 = vadd.f32 0.0, %v3314
    %v3316 = vpop.f32.mrf.mxu0
    %v3317 = vpop.f32.mrf.mxu0
    %3318 = vdwg.mxu0
    %3319 = vmatprep.subr.bf16.mxu0 0
    %3320 = vmatpush1.bf16.msra.mxu0 %v3253
    %3321 = vmatprep.subr.bf16.mxu0 0
    %3322 = vmatpush1.bf16.msra.mxu0 %v3250
    %3323 = vmatprep.subr.bf16.mxu0 0
    %3324 = vmatpush1.bf16.msra.mxu0 %v3247
    %3325 = vmatprep.subr.bf16.mxu0 0
    %3326 = vmatpush1.bf16.msra.mxu0 %v3244
    %3327 = vmatprep.subr.bf16.mxu0 0
    %3328 = vmatpush1.bf16.msra.mxu0 %v3241
    %3329 = vmatprep.subr.bf16.mxu0 0
    %3330 = vmatpush1.bf16.msra.mxu0 %v3238
    %3331 = vmatprep.subr.bf16.mxu0 0
    %3332 = vmatpush1.bf16.msra.mxu0 %v3235
    %3333 = vmatprep.subr.bf16.mxu0 0
    %3334 = vmatpush1.bf16.msra.mxu0 %v3232
    %3335 = vmatprep.subr.bf16.mxu0 0
    %3336 = vmatpush2.bf16.msra.mxu0 0
    %3337 = vmatprep.subr.bf16.mxu0 0
    %3338 = vmatpush2.bf16.msra.mxu0 0
    %3339 = vmatprep.subr.bf16.mxu0 0
    %3340 = vmatpush2.bf16.msra.mxu0 0
    %3341 = vmatprep.subr.bf16.mxu0 0
    %3342 = vmatpush2.bf16.msra.mxu0 0
    %3343 = vmatprep.subr.bf16.mxu0 0
    %3344 = vmatpush2.bf16.msra.mxu0 0
    %3345 = vmatprep.subr.bf16.mxu0 0
    %3346 = vmatpush2.bf16.msra.mxu0 0
    %3347 = vmatprep.subr.bf16.mxu0 0
    %3348 = vmatpush2.bf16.msra.mxu0 0
    %3349 = vmatprep.subr.bf16.mxu0 0
    %3350 = vmatpush2.bf16.msra.mxu0 0
    %3351 = vmatprep.mubr.bf16.mxu0 0
    %3352 = vmatmul.mubr.bf16.gmra.mxu0 %v3117
    %v3353 = vpop.f32.mrf.mxu0
    %v3354 = vadd.f32 0.0, %v3353
    %v3355 = vpop.f32.mrf.mxu0
    %v3356 = vpop.f32.mrf.mxu0
    %v3357 = vpop.f32.mrf.mxu0
    %3358 = vdwg.mxu0
    %v3359 = vadd.f32 %v3114, %v3313
    %v3360 = vxor.u32 %v3359, 2147483648
    %v3361 = vmul.f32 %v3360, 1.442695
    %v3362 = vpow.pop %v3361
    %v3363 = vadd.f32 %v3362, 1.0
    %v3364 = vrcp.pop %v3363
    %v3365 = vmul.f32 1.0, %v3364
    %v3366 = vadd.f32 %v3115, %v3315
    %v3367 = vxor.u32 %v3366, 2147483648
    %v3368 = vmul.f32 %v3367, 1.442695
    %v3369 = vpow.pop %v3368
    %v3370 = vadd.f32 %v3369, 1.0
    %v3371 = vrcp.pop %v3370
    %v3372 = vmul.f32 1.0, %v3371
    %v3373 = vadd.f32 %v3354, %v2843
    %v3374 = vmul.f32 %v3365, %v3373
    %v3375 = vadd.f32 %v3116, %v3374
    %v3376 = vtanh.pop %v3375
    %v3377 = vsub.f32 %v3112, %v3376
    %v3378 = vmul.f32 %v3372, %v3377
    %v3379 = vadd.f32 %v3376, %v3378
    %3380 = vst [vmem:[#allocation10 + $0x8] sm:$0xff] %v3379
    %v3381 = vld [vmem:[#allocation2 + $0x30] sm:$0xff]
    %v3382 = vld [vmem:[#allocation2 + $0x38] sm:$0xff]
    %v3383 = vld [vmem:[#allocation2 + $0x40] sm:$0xff]
    %v3384 = vpack.c.bf16 %v3379, %v3379
    %v3385 = vld [vmem:[#allocation9] sm:$0xff]
    %v3386 = vld [vmem:[#allocation9 + $0x8] sm:$0xf]
    %v3387 = vld [vmem:[#allocation9 + $0xc] sm:$0xff]
    %v3388 = vld [vmem:[#allocation9 + $0x14] sm:$0xf]
    %v3389 = vld [vmem:[#allocation9 + $0x18] sm:$0xff]
    %v3390 = vld [vmem:[#allocation9 + $0x20] sm:$0xf]
    %v3391 = vld [vmem:[#allocation9 + $0x24] sm:$0xff]
    %v3392 = vld [vmem:[#allocation9 + $0x2c] sm:$0xf]
    %v3393 = vld [vmem:[#allocation9 + $0x30] sm:$0xff]
    %v3394 = vld [vmem:[#allocation9 + $0x38] sm:$0xf]
    %v3395 = vld [vmem:[#allocation9 + $0x3c] sm:$0xff]
    %v3396 = vld [vmem:[#allocation9 + $0x44] sm:$0xf]
    %v3397 = vld [vmem:[#allocation9 + $0x48] sm:$0xff]
    %v3398 = vld [vmem:[#allocation9 + $0x50] sm:$0xf]
    %v3399 = vld [vmem:[#allocation9 + $0x54] sm:$0xff]
    %v3400 = vld [vmem:[#allocation9 + $0x5c] sm:$0xf]
    %v3401 = vld [vmem:[#allocation9 + $0x60] sm:$0xff]
    %v3402 = vld [vmem:[#allocation9 + $0x68] sm:$0xf]
    %v3403 = vld [vmem:[#allocation9 + $0x6c] sm:$0xff]
    %v3404 = vld [vmem:[#allocation9 + $0x74] sm:$0xf]
    %v3405 = vld [vmem:[#allocation9 + $0x78] sm:$0xff]
    %v3406 = vld [vmem:[#allocation9 + $0x80] sm:$0xf]
    %v3407 = vld [vmem:[#allocation9 + $0x84] sm:$0xff]
    %v3408 = vld [vmem:[#allocation9 + $0x8c] sm:$0xf]
    %v3409 = vld [vmem:[#allocation9 + $0x90] sm:$0xff]
    %v3410 = vld [vmem:[#allocation9 + $0x98] sm:$0xf]
    %v3411 = vld [vmem:[#allocation9 + $0x9c] sm:$0xff]
    %v3412 = vld [vmem:[#allocation9 + $0xa4] sm:$0xf]
    %v3413 = vld [vmem:[#allocation9 + $0xa8] sm:$0xff]
    %v3414 = vld [vmem:[#allocation9 + $0xb0] sm:$0xf]
    %v3415 = vld [vmem:[#allocation9 + $0xb4] sm:$0xff]
    %v3416 = vld [vmem:[#allocation9 + $0xbc] sm:$0xf]
    %v3449 = vunpack.c.l.b16 %v3385
    %v3450 = vunpack.c.h.b16 %v3385
    %v3451 = vunpack.c.l.b16 %v3386
    %v3452 = vunpack.c.l.b16 %v3387
    %v3453 = vunpack.c.h.b16 %v3387
    %v3454 = vunpack.c.l.b16 %v3388
    %v3455 = vunpack.c.l.b16 %v3389
    %v3456 = vunpack.c.h.b16 %v3389
    %v3457 = vunpack.c.l.b16 %v3390
    %v3458 = vunpack.c.l.b16 %v3391
    %v3459 = vunpack.c.h.b16 %v3391
    %v3460 = vunpack.c.l.b16 %v3392
    %v3461 = vunpack.c.l.b16 %v3393
    %v3462 = vunpack.c.h.b16 %v3393
    %v3463 = vunpack.c.l.b16 %v3394
    %v3464 = vunpack.c.l.b16 %v3395
    %v3465 = vunpack.c.h.b16 %v3395
    %v3466 = vunpack.c.l.b16 %v3396
    %v3467 = vunpack.c.l.b16 %v3397
    %v3468 = vunpack.c.h.b16 %v3397
    %v3469 = vunpack.c.l.b16 %v3398
    %v3470 = vunpack.c.l.b16 %v3399
    %v3471 = vunpack.c.h.b16 %v3399
    %v3472 = vunpack.c.l.b16 %v3400
    %v3473 = vunpack.c.l.b16 %v3401
    %v3474 = vunpack.c.h.b16 %v3401
    %v3475 = vunpack.c.l.b16 %v3402
    %v3476 = vunpack.c.l.b16 %v3403
    %v3477 = vunpack.c.h.b16 %v3403
    %v3478 = vunpack.c.l.b16 %v3404
    %v3479 = vunpack.c.l.b16 %v3405
    %v3480 = vunpack.c.h.b16 %v3405
    %v3481 = vunpack.c.l.b16 %v3406
    %v3482 = vunpack.c.l.b16 %v3407
    %v3483 = vunpack.c.h.b16 %v3407
    %v3484 = vunpack.c.l.b16 %v3408
    %v3485 = vunpack.c.l.b16 %v3409
    %v3486 = vunpack.c.h.b16 %v3409
    %v3487 = vunpack.c.l.b16 %v3410
    %v3488 = vunpack.c.l.b16 %v3411
    %v3489 = vunpack.c.h.b16 %v3411
    %v3490 = vunpack.c.l.b16 %v3412
    %v3491 = vunpack.c.l.b16 %v3413
    %v3492 = vunpack.c.h.b16 %v3413
    %v3493 = vunpack.c.l.b16 %v3414
    %v3494 = vunpack.c.l.b16 %v3415
    %v3495 = vunpack.c.h.b16 %v3415
    %v3496 = vunpack.c.l.b16 %v3416
    %v3497 = vpack.c.b16 %v3452, %v3449
    %v3498 = vpack.c.b16 %v3453, %v3450
    %v3499 = vpack.c.b16 %v3454, %v3451
    %v3500 = vpack.c.b16 %v3458, %v3455
    %v3501 = vpack.c.b16 %v3459, %v3456
    %v3502 = vpack.c.b16 %v3460, %v3457
    %v3503 = vpack.c.b16 %v3464, %v3461
    %v3504 = vpack.c.b16 %v3465, %v3462
    %v3505 = vpack.c.b16 %v3466, %v3463
    %v3506 = vpack.c.b16 %v3470, %v3467
    %v3507 = vpack.c.b16 %v3471, %v3468
    %v3508 = vpack.c.b16 %v3472, %v3469
    %v3509 = vpack.c.b16 %v3476, %v3473
    %v3510 = vpack.c.b16 %v3477, %v3474
    %v3511 = vpack.c.b16 %v3478, %v3475
    %v3512 = vpack.c.b16 %v3482, %v3479
    %v3513 = vpack.c.b16 %v3483, %v3480
    %v3514 = vpack.c.b16 %v3484, %v3481
    %v3515 = vpack.c.b16 %v3488, %v3485
    %v3516 = vpack.c.b16 %v3489, %v3486
    %v3517 = vpack.c.b16 %v3490, %v3487
    %v3518 = vpack.c.b16 %v3494, %v3491
    %v3519 = vpack.c.b16 %v3495, %v3492
    %v3520 = vpack.c.b16 %v3496, %v3493
    %3545 = vmatprep.subr.bf16.mxu0 %v3519
    %3546 = vmatpush1.bf16.msra.mxu0 %v3518
    %3547 = vmatprep.subr.bf16.mxu0 %v3516
    %3548 = vmatpush1.bf16.msra.mxu0 %v3515
    %3549 = vmatprep.subr.bf16.mxu0 %v3513
    %3550 = vmatpush1.bf16.msra.mxu0 %v3512
    %3551 = vmatprep.subr.bf16.mxu0 %v3510
    %3552 = vmatpush1.bf16.msra.mxu0 %v3509
    %3553 = vmatprep.subr.bf16.mxu0 %v3507
    %3554 = vmatpush1.bf16.msra.mxu0 %v3506
    %3555 = vmatprep.subr.bf16.mxu0 %v3504
    %3556 = vmatpush1.bf16.msra.mxu0 %v3503
    %3557 = vmatprep.subr.bf16.mxu0 %v3501
    %3558 = vmatpush1.bf16.msra.mxu0 %v3500
    %3559 = vmatprep.subr.bf16.mxu0 %v3498
    %3560 = vmatpush1.bf16.msra.mxu0 %v3497
    %3561 = vmatprep.subr.bf16.mxu0 0
    %3562 = vmatpush2.bf16.msra.mxu0 0
    %3563 = vmatprep.subr.bf16.mxu0 0
    %3564 = vmatpush2.bf16.msra.mxu0 0
    %3565 = vmatprep.subr.bf16.mxu0 0
    %3566 = vmatpush2.bf16.msra.mxu0 0
    %3567 = vmatprep.subr.bf16.mxu0 0
    %3568 = vmatpush2.bf16.msra.mxu0 0
    %3569 = vmatprep.subr.bf16.mxu0 0
    %3570 = vmatpush2.bf16.msra.mxu0 0
    %3571 = vmatprep.subr.bf16.mxu0 0
    %3572 = vmatpush2.bf16.msra.mxu0 0
    %3573 = vmatprep.subr.bf16.mxu0 0
    %3574 = vmatpush2.bf16.msra.mxu0 0
    %3575 = vmatprep.subr.bf16.mxu0 0
    %3576 = vmatpush2.bf16.msra.mxu0 0
    %3577 = vmatprep.mubr.bf16.mxu0 0
    %3578 = vmatmul.mubr.bf16.gmra.mxu0 %v3384
    %v3579 = vpop.f32.mrf.mxu0
    %v3580 = vadd.f32 0.0, %v3579
    %v3581 = vpop.f32.mrf.mxu0
    %v3582 = vadd.f32 0.0, %v3581
    %v3583 = vpop.f32.mrf.mxu0
    %v3584 = vpop.f32.mrf.mxu0
    %3585 = vdwg.mxu0
    %3586 = vmatprep.subr.bf16.mxu0 0
    %3587 = vmatpush1.bf16.msra.mxu0 %v3520
    %3588 = vmatprep.subr.bf16.mxu0 0
    %3589 = vmatpush1.bf16.msra.mxu0 %v3517
    %3590 = vmatprep.subr.bf16.mxu0 0
    %3591 = vmatpush1.bf16.msra.mxu0 %v3514
    %3592 = vmatprep.subr.bf16.mxu0 0
    %3593 = vmatpush1.bf16.msra.mxu0 %v3511
    %3594 = vmatprep.subr.bf16.mxu0 0
    %3595 = vmatpush1.bf16.msra.mxu0 %v3508
    %3596 = vmatprep.subr.bf16.mxu0 0
    %3597 = vmatpush1.bf16.msra.mxu0 %v3505
    %3598 = vmatprep.subr.bf16.mxu0 0
    %3599 = vmatpush1.bf16.msra.mxu0 %v3502
    %3600 = vmatprep.subr.bf16.mxu0 0
    %3601 = vmatpush1.bf16.msra.mxu0 %v3499
    %3602 = vmatprep.subr.bf16.mxu0 0
    %3603 = vmatpush2.bf16.msra.mxu0 0
    %3604 = vmatprep.subr.bf16.mxu0 0
    %3605 = vmatpush2.bf16.msra.mxu0 0
    %3606 = vmatprep.subr.bf16.mxu0 0
    %3607 = vmatpush2.bf16.msra.mxu0 0
    %3608 = vmatprep.subr.bf16.mxu0 0
    %3609 = vmatpush2.bf16.msra.mxu0 0
    %3610 = vmatprep.subr.bf16.mxu0 0
    %3611 = vmatpush2.bf16.msra.mxu0 0
    %3612 = vmatprep.subr.bf16.mxu0 0
    %3613 = vmatpush2.bf16.msra.mxu0 0
    %3614 = vmatprep.subr.bf16.mxu0 0
    %3615 = vmatpush2.bf16.msra.mxu0 0
    %3616 = vmatprep.subr.bf16.mxu0 0
    %3617 = vmatpush2.bf16.msra.mxu0 0
    %3618 = vmatprep.mubr.bf16.mxu0 0
    %3619 = vmatmul.mubr.bf16.gmra.mxu0 %v3384
    %v3620 = vpop.f32.mrf.mxu0
    %v3621 = vadd.f32 0.0, %v3620
    %v3622 = vpop.f32.mrf.mxu0
    %v3623 = vpop.f32.mrf.mxu0
    %v3624 = vpop.f32.mrf.mxu0
    %3625 = vdwg.mxu0
    %v3626 = vadd.f32 %v3381, %v3580
    %v3627 = vxor.u32 %v3626, 2147483648
    %v3628 = vmul.f32 %v3627, 1.442695
    %v3629 = vpow.pop %v3628
    %v3630 = vadd.f32 %v3629, 1.0
    %v3631 = vrcp.pop %v3630
    %v3632 = vmul.f32 1.0, %v3631
    %v3633 = vadd.f32 %v3382, %v3582
    %v3634 = vxor.u32 %v3633, 2147483648
    %v3635 = vmul.f32 %v3634, 1.442695
    %v3636 = vpow.pop %v3635
    %v3637 = vadd.f32 %v3636, 1.0
    %v3638 = vrcp.pop %v3637
    %v3639 = vmul.f32 1.0, %v3638
    %v3640 = vadd.f32 %v3621, %v2843
    %v3641 = vmul.f32 %v3632, %v3640
    %v3642 = vadd.f32 %v3383, %v3641
    %v3643 = vtanh.pop %v3642
    %v3644 = vsub.f32 %v3379, %v3643
    %v3645 = vmul.f32 %v3639, %v3644
    %v3646 = vadd.f32 %v3643, %v3645
    %3647 = vst [vmem:[#allocation10 + $0x10] sm:$0xff] %v3646
    %v3648 = vld [vmem:[#allocation2 + $0x48] sm:$0xff]
    %v3649 = vld [vmem:[#allocation2 + $0x50] sm:$0xff]
    %v3650 = vld [vmem:[#allocation2 + $0x58] sm:$0xff]
    %v3651 = vpack.c.bf16 %v3646, %v3646
    %v3652 = vld [vmem:[#allocation9] sm:$0xff]
    %v3653 = vld [vmem:[#allocation9 + $0x8] sm:$0xf]
    %v3654 = vld [vmem:[#allocation9 + $0xc] sm:$0xff]
    %v3655 = vld [vmem:[#allocation9 + $0x14] sm:$0xf]
    %v3656 = vld [vmem:[#allocation9 + $0x18] sm:$0xff]
    %v3657 = vld [vmem:[#allocation9 + $0x20] sm:$0xf]
    %v3658 = vld [vmem:[#allocation9 + $0x24] sm:$0xff]
    %v3659 = vld [vmem:[#allocation9 + $0x2c] sm:$0xf]
    %v3660 = vld [vmem:[#allocation9 + $0x30] sm:$0xff]
    %v3661 = vld [vmem:[#allocation9 + $0x38] sm:$0xf]
    %v3662 = vld [vmem:[#allocation9 + $0x3c] sm:$0xff]
    %v3663 = vld [vmem:[#allocation9 + $0x44] sm:$0xf]
    %v3664 = vld [vmem:[#allocation9 + $0x48] sm:$0xff]
    %v3665 = vld [vmem:[#allocation9 + $0x50] sm:$0xf]
    %v3666 = vld [vmem:[#allocation9 + $0x54] sm:$0xff]
    %v3667 = vld [vmem:[#allocation9 + $0x5c] sm:$0xf]
    %v3668 = vld [vmem:[#allocation9 + $0x60] sm:$0xff]
    %v3669 = vld [vmem:[#allocation9 + $0x68] sm:$0xf]
    %v3670 = vld [vmem:[#allocation9 + $0x6c] sm:$0xff]
    %v3671 = vld [vmem:[#allocation9 + $0x74] sm:$0xf]
    %v3672 = vld [vmem:[#allocation9 + $0x78] sm:$0xff]
    %v3673 = vld [vmem:[#allocation9 + $0x80] sm:$0xf]
    %v3674 = vld [vmem:[#allocation9 + $0x84] sm:$0xff]
    %v3675 = vld [vmem:[#allocation9 + $0x8c] sm:$0xf]
    %v3676 = vld [vmem:[#allocation9 + $0x90] sm:$0xff]
    %v3677 = vld [vmem:[#allocation9 + $0x98] sm:$0xf]
    %v3678 = vld [vmem:[#allocation9 + $0x9c] sm:$0xff]
    %v3679 = vld [vmem:[#allocation9 + $0xa4] sm:$0xf]
    %v3680 = vld [vmem:[#allocation9 + $0xa8] sm:$0xff]
    %v3681 = vld [vmem:[#allocation9 + $0xb0] sm:$0xf]
    %v3682 = vld [vmem:[#allocation9 + $0xb4] sm:$0xff]
    %v3683 = vld [vmem:[#allocation9 + $0xbc] sm:$0xf]
    %v3716 = vunpack.c.l.b16 %v3652
    %v3717 = vunpack.c.h.b16 %v3652
    %v3718 = vunpack.c.l.b16 %v3653
    %v3719 = vunpack.c.l.b16 %v3654
    %v3720 = vunpack.c.h.b16 %v3654
    %v3721 = vunpack.c.l.b16 %v3655
    %v3722 = vunpack.c.l.b16 %v3656
    %v3723 = vunpack.c.h.b16 %v3656
    %v3724 = vunpack.c.l.b16 %v3657
    %v3725 = vunpack.c.l.b16 %v3658
    %v3726 = vunpack.c.h.b16 %v3658
    %v3727 = vunpack.c.l.b16 %v3659
    %v3728 = vunpack.c.l.b16 %v3660
    %v3729 = vunpack.c.h.b16 %v3660
    %v3730 = vunpack.c.l.b16 %v3661
    %v3731 = vunpack.c.l.b16 %v3662
    %v3732 = vunpack.c.h.b16 %v3662
    %v3733 = vunpack.c.l.b16 %v3663
    %v3734 = vunpack.c.l.b16 %v3664
    %v3735 = vunpack.c.h.b16 %v3664
    %v3736 = vunpack.c.l.b16 %v3665
    %v3737 = vunpack.c.l.b16 %v3666
    %v3738 = vunpack.c.h.b16 %v3666
    %v3739 = vunpack.c.l.b16 %v3667
    %v3740 = vunpack.c.l.b16 %v3668
    %v3741 = vunpack.c.h.b16 %v3668
    %v3742 = vunpack.c.l.b16 %v3669
    %v3743 = vunpack.c.l.b16 %v3670
    %v3744 = vunpack.c.h.b16 %v3670
    %v3745 = vunpack.c.l.b16 %v3671
    %v3746 = vunpack.c.l.b16 %v3672
    %v3747 = vunpack.c.h.b16 %v3672
    %v3748 = vunpack.c.l.b16 %v3673
    %v3749 = vunpack.c.l.b16 %v3674
    %v3750 = vunpack.c.h.b16 %v3674
    %v3751 = vunpack.c.l.b16 %v3675
    %v3752 = vunpack.c.l.b16 %v3676
    %v3753 = vunpack.c.h.b16 %v3676
    %v3754 = vunpack.c.l.b16 %v3677
    %v3755 = vunpack.c.l.b16 %v3678
    %v3756 = vunpack.c.h.b16 %v3678
    %v3757 = vunpack.c.l.b16 %v3679
    %v3758 = vunpack.c.l.b16 %v3680
    %v3759 = vunpack.c.h.b16 %v3680
    %v3760 = vunpack.c.l.b16 %v3681
    %v3761 = vunpack.c.l.b16 %v3682
    %v3762 = vunpack.c.h.b16 %v3682
    %v3763 = vunpack.c.l.b16 %v3683
    %v3764 = vpack.c.b16 %v3719, %v3716
    %v3765 = vpack.c.b16 %v3720, %v3717
    %v3766 = vpack.c.b16 %v3721, %v3718
    %v3767 = vpack.c.b16 %v3725, %v3722
    %v3768 = vpack.c.b16 %v3726, %v3723
    %v3769 = vpack.c.b16 %v3727, %v3724
    %v3770 = vpack.c.b16 %v3731, %v3728
    %v3771 = vpack.c.b16 %v3732, %v3729
    %v3772 = vpack.c.b16 %v3733, %v3730
    %v3773 = vpack.c.b16 %v3737, %v3734
    %v3774 = vpack.c.b16 %v3738, %v3735
    %v3775 = vpack.c.b16 %v3739, %v3736
    %v3776 = vpack.c.b16 %v3743, %v3740
    %v3777 = vpack.c.b16 %v3744, %v3741
    %v3778 = vpack.c.b16 %v3745, %v3742
    %v3779 = vpack.c.b16 %v3749, %v3746
    %v3780 = vpack.c.b16 %v3750, %v3747
    %v3781 = vpack.c.b16 %v3751, %v3748
    %v3782 = vpack.c.b16 %v3755, %v3752
    %v3783 = vpack.c.b16 %v3756, %v3753
    %v3784 = vpack.c.b16 %v3757, %v3754
    %v3785 = vpack.c.b16 %v3761, %v3758
    %v3786 = vpack.c.b16 %v3762, %v3759
    %v3787 = vpack.c.b16 %v3763, %v3760
    %3812 = vmatprep.subr.bf16.mxu0 %v3786
    %3813 = vmatpush1.bf16.msra.mxu0 %v3785
    %3814 = vmatprep.subr.bf16.mxu0 %v3783
    %3815 = vmatpush1.bf16.msra.mxu0 %v3782
    %3816 = vmatprep.subr.bf16.mxu0 %v3780
    %3817 = vmatpush1.bf16.msra.mxu0 %v3779
    %3818 = vmatprep.subr.bf16.mxu0 %v3777
    %3819 = vmatpush1.bf16.msra.mxu0 %v3776
    %3820 = vmatprep.subr.bf16.mxu0 %v3774
    %3821 = vmatpush1.bf16.msra.mxu0 %v3773
    %3822 = vmatprep.subr.bf16.mxu0 %v3771
    %3823 = vmatpush1.bf16.msra.mxu0 %v3770
    %3824 = vmatprep.subr.bf16.mxu0 %v3768
    %3825 = vmatpush1.bf16.msra.mxu0 %v3767
    %3826 = vmatprep.subr.bf16.mxu0 %v3765
    %3827 = vmatpush1.bf16.msra.mxu0 %v3764
    %3828 = vmatprep.subr.bf16.mxu0 0
    %3829 = vmatpush2.bf16.msra.mxu0 0
    %3830 = vmatprep.subr.bf16.mxu0 0
    %3831 = vmatpush2.bf16.msra.mxu0 0
    %3832 = vmatprep.subr.bf16.mxu0 0
    %3833 = vmatpush2.bf16.msra.mxu0 0
    %3834 = vmatprep.subr.bf16.mxu0 0
    %3835 = vmatpush2.bf16.msra.mxu0 0
    %3836 = vmatprep.subr.bf16.mxu0 0
    %3837 = vmatpush2.bf16.msra.mxu0 0
    %3838 = vmatprep.subr.bf16.mxu0 0
    %3839 = vmatpush2.bf16.msra.mxu0 0
    %3840 = vmatprep.subr.bf16.mxu0 0
    %3841 = vmatpush2.bf16.msra.mxu0 0
    %3842 = vmatprep.subr.bf16.mxu0 0
    %3843 = vmatpush2.bf16.msra.mxu0 0
    %3844 = vmatprep.mubr.bf16.mxu0 0
    %3845 = vmatmul.mubr.bf16.gmra.mxu0 %v3651
    %v3846 = vpop.f32.mrf.mxu0
    %v3847 = vadd.f32 0.0, %v3846
    %v3848 = vpop.f32.mrf.mxu0
    %v3849 = vadd.f32 0.0, %v3848
    %v3850 = vpop.f32.mrf.mxu0
    %v3851 = vpop.f32.mrf.mxu0
    %3852 = vdwg.mxu0
    %3853 = vmatprep.subr.bf16.mxu0 0
    %3854 = vmatpush1.bf16.msra.mxu0 %v3787
    %3855 = vmatprep.subr.bf16.mxu0 0
    %3856 = vmatpush1.bf16.msra.mxu0 %v3784
    %3857 = vmatprep.subr.bf16.mxu0 0
    %3858 = vmatpush1.bf16.msra.mxu0 %v3781
    %3859 = vmatprep.subr.bf16.mxu0 0
    %3860 = vmatpush1.bf16.msra.mxu0 %v3778
    %3861 = vmatprep.subr.bf16.mxu0 0
    %3862 = vmatpush1.bf16.msra.mxu0 %v3775
    %3863 = vmatprep.subr.bf16.mxu0 0
    %3864 = vmatpush1.bf16.msra.mxu0 %v3772
    %3865 = vmatprep.subr.bf16.mxu0 0
    %3866 = vmatpush1.bf16.msra.mxu0 %v3769
    %3867 = vmatprep.subr.bf16.mxu0 0
    %3868 = vmatpush1.bf16.msra.mxu0 %v3766
    %3869 = vmatprep.subr.bf16.mxu0 0
    %3870 = vmatpush2.bf16.msra.mxu0 0
    %3871 = vmatprep.subr.bf16.mxu0 0
    %3872 = vmatpush2.bf16.msra.mxu0 0
    %3873 = vmatprep.subr.bf16.mxu0 0
    %3874 = vmatpush2.bf16.msra.mxu0 0
    %3875 = vmatprep.subr.bf16.mxu0 0
    %3876 = vmatpush2.bf16.msra.mxu0 0
    %3877 = vmatprep.subr.bf16.mxu0 0
    %3878 = vmatpush2.bf16.msra.mxu0 0
    %3879 = vmatprep.subr.bf16.mxu0 0
    %3880 = vmatpush2.bf16.msra.mxu0 0
    %3881 = vmatprep.subr.bf16.mxu0 0
    %3882 = vmatpush2.bf16.msra.mxu0 0
    %3883 = vmatprep.subr.bf16.mxu0 0
    %3884 = vmatpush2.bf16.msra.mxu0 0
    %3885 = vmatprep.mubr.bf16.mxu0 0
    %3886 = vmatmul.mubr.bf16.gmra.mxu0 %v3651
    %v3887 = vpop.f32.mrf.mxu0
    %v3888 = vadd.f32 0.0, %v3887
    %v3889 = vpop.f32.mrf.mxu0
    %v3890 = vpop.f32.mrf.mxu0
    %v3891 = vpop.f32.mrf.mxu0
    %3892 = vdwg.mxu0
    %v3893 = vadd.f32 %v3648, %v3847
    %v3894 = vxor.u32 %v3893, 2147483648
    %v3895 = vmul.f32 %v3894, 1.442695
    %v3896 = vpow.pop %v3895
    %v3897 = vadd.f32 %v3896, 1.0
    %v3898 = vrcp.pop %v3897
    %v3899 = vmul.f32 1.0, %v3898
    %v3900 = vadd.f32 %v3649, %v3849
    %v3901 = vxor.u32 %v3900, 2147483648
    %v3902 = vmul.f32 %v3901, 1.442695
    %v3903 = vpow.pop %v3902
    %v3904 = vadd.f32 %v3903, 1.0
    %v3905 = vrcp.pop %v3904
    %v3906 = vmul.f32 1.0, %v3905
    %v3907 = vadd.f32 %v3888, %v2843
    %v3908 = vmul.f32 %v3899, %v3907
    %v3909 = vadd.f32 %v3650, %v3908
    %v3910 = vtanh.pop %v3909
    %v3911 = vsub.f32 %v3646, %v3910
    %v3912 = vmul.f32 %v3906, %v3911
    %v3913 = vadd.f32 %v3910, %v3912
    %3914 = vst [vmem:[#allocation10 + $0x18] sm:$0xff] %v3913
    %v3915 = vld [vmem:[#allocation2 + $0x60] sm:$0xff]
    %v3916 = vld [vmem:[#allocation2 + $0x68] sm:$0xff]
    %v3917 = vld [vmem:[#allocation2 + $0x70] sm:$0xff]
    %v3918 = vpack.c.bf16 %v3913, %v3913
    %v3919 = vld [vmem:[#allocation9] sm:$0xff]
    %v3920 = vld [vmem:[#allocation9 + $0x8] sm:$0xf]
    %v3921 = vld [vmem:[#allocation9 + $0xc] sm:$0xff]
    %v3922 = vld [vmem:[#allocation9 + $0x14] sm:$0xf]
    %v3923 = vld [vmem:[#allocation9 + $0x18] sm:$0xff]
    %v3924 = vld [vmem:[#allocation9 + $0x20] sm:$0xf]
    %v3925 = vld [vmem:[#allocation9 + $0x24] sm:$0xff]
    %v3926 = vld [vmem:[#allocation9 + $0x2c] sm:$0xf]
    %v3927 = vld [vmem:[#allocation9 + $0x30] sm:$0xff]
    %v3928 = vld [vmem:[#allocation9 + $0x38] sm:$0xf]
    %v3929 = vld [vmem:[#allocation9 + $0x3c] sm:$0xff]
    %v3930 = vld [vmem:[#allocation9 + $0x44] sm:$0xf]
    %v3931 = vld [vmem:[#allocation9 + $0x48] sm:$0xff]
    %v3932 = vld [vmem:[#allocation9 + $0x50] sm:$0xf]
    %v3933 = vld [vmem:[#allocation9 + $0x54] sm:$0xff]
    %v3934 = vld [vmem:[#allocation9 + $0x5c] sm:$0xf]
    %v3935 = vld [vmem:[#allocation9 + $0x60] sm:$0xff]
    %v3936 = vld [vmem:[#allocation9 + $0x68] sm:$0xf]
    %v3937 = vld [vmem:[#allocation9 + $0x6c] sm:$0xff]
    %v3938 = vld [vmem:[#allocation9 + $0x74] sm:$0xf]
    %v3939 = vld [vmem:[#allocation9 + $0x78] sm:$0xff]
    %v3940 = vld [vmem:[#allocation9 + $0x80] sm:$0xf]
    %v3941 = vld [vmem:[#allocation9 + $0x84] sm:$0xff]
    %v3942 = vld [vmem:[#allocation9 + $0x8c] sm:$0xf]
    %v3943 = vld [vmem:[#allocation9 + $0x90] sm:$0xff]
    %v3944 = vld [vmem:[#allocation9 + $0x98] sm:$0xf]
    %v3945 = vld [vmem:[#allocation9 + $0x9c] sm:$0xff]
    %v3946 = vld [vmem:[#allocation9 + $0xa4] sm:$0xf]
    %v3947 = vld [vmem:[#allocation9 + $0xa8] sm:$0xff]
    %v3948 = vld [vmem:[#allocation9 + $0xb0] sm:$0xf]
    %v3949 = vld [vmem:[#allocation9 + $0xb4] sm:$0xff]
    %v3950 = vld [vmem:[#allocation9 + $0xbc] sm:$0xf]
    %v3983 = vunpack.c.l.b16 %v3919
    %v3984 = vunpack.c.h.b16 %v3919
    %v3985 = vunpack.c.l.b16 %v3920
    %v3986 = vunpack.c.l.b16 %v3921
    %v3987 = vunpack.c.h.b16 %v3921
    %v3988 = vunpack.c.l.b16 %v3922
    %v3989 = vunpack.c.l.b16 %v3923
    %v3990 = vunpack.c.h.b16 %v3923
    %v3991 = vunpack.c.l.b16 %v3924
    %v3992 = vunpack.c.l.b16 %v3925
    %v3993 = vunpack.c.h.b16 %v3925
    %v3994 = vunpack.c.l.b16 %v3926
    %v3995 = vunpack.c.l.b16 %v3927
    %v3996 = vunpack.c.h.b16 %v3927
    %v3997 = vunpack.c.l.b16 %v3928
    %v3998 = vunpack.c.l.b16 %v3929
    %v3999 = vunpack.c.h.b16 %v3929
    %v4000 = vunpack.c.l.b16 %v3930
    %v4001 = vunpack.c.l.b16 %v3931
    %v4002 = vunpack.c.h.b16 %v3931
    %v4003 = vunpack.c.l.b16 %v3932
    %v4004 = vunpack.c.l.b16 %v3933
    %v4005 = vunpack.c.h.b16 %v3933
    %v4006 = vunpack.c.l.b16 %v3934
    %v4007 = vunpack.c.l.b16 %v3935
    %v4008 = vunpack.c.h.b16 %v3935
    %v4009 = vunpack.c.l.b16 %v3936
    %v4010 = vunpack.c.l.b16 %v3937
    %v4011 = vunpack.c.h.b16 %v3937
    %v4012 = vunpack.c.l.b16 %v3938
    %v4013 = vunpack.c.l.b16 %v3939
    %v4014 = vunpack.c.h.b16 %v3939
    %v4015 = vunpack.c.l.b16 %v3940
    %v4016 = vunpack.c.l.b16 %v3941
    %v4017 = vunpack.c.h.b16 %v3941
    %v4018 = vunpack.c.l.b16 %v3942
    %v4019 = vunpack.c.l.b16 %v3943
    %v4020 = vunpack.c.h.b16 %v3943
    %v4021 = vunpack.c.l.b16 %v3944
    %v4022 = vunpack.c.l.b16 %v3945
    %v4023 = vunpack.c.h.b16 %v3945
    %v4024 = vunpack.c.l.b16 %v3946
    %v4025 = vunpack.c.l.b16 %v3947
    %v4026 = vunpack.c.h.b16 %v3947
    %v4027 = vunpack.c.l.b16 %v3948
    %v4028 = vunpack.c.l.b16 %v3949
    %v4029 = vunpack.c.h.b16 %v3949
    %v4030 = vunpack.c.l.b16 %v3950
    %v4031 = vpack.c.b16 %v3986, %v3983
    %v4032 = vpack.c.b16 %v3987, %v3984
    %v4033 = vpack.c.b16 %v3988, %v3985
    %v4034 = vpack.c.b16 %v3992, %v3989
    %v4035 = vpack.c.b16 %v3993, %v3990
    %v4036 = vpack.c.b16 %v3994, %v3991
    %v4037 = vpack.c.b16 %v3998, %v3995
    %v4038 = vpack.c.b16 %v3999, %v3996
    %v4039 = vpack.c.b16 %v4000, %v3997
    %v4040 = vpack.c.b16 %v4004, %v4001
    %v4041 = vpack.c.b16 %v4005, %v4002
    %v4042 = vpack.c.b16 %v4006, %v4003
    %v4043 = vpack.c.b16 %v4010, %v4007
    %v4044 = vpack.c.b16 %v4011, %v4008
    %v4045 = vpack.c.b16 %v4012, %v4009
    %v4046 = vpack.c.b16 %v4016, %v4013
    %v4047 = vpack.c.b16 %v4017, %v4014
    %v4048 = vpack.c.b16 %v4018, %v4015
    %v4049 = vpack.c.b16 %v4022, %v4019
    %v4050 = vpack.c.b16 %v4023, %v4020
    %v4051 = vpack.c.b16 %v4024, %v4021
    %v4052 = vpack.c.b16 %v4028, %v4025
    %v4053 = vpack.c.b16 %v4029, %v4026
    %v4054 = vpack.c.b16 %v4030, %v4027
    %4079 = vmatprep.subr.bf16.mxu0 %v4053
    %4080 = vmatpush1.bf16.msra.mxu0 %v4052
    %4081 = vmatprep.subr.bf16.mxu0 %v4050
    %4082 = vmatpush1.bf16.msra.mxu0 %v4049
    %4083 = vmatprep.subr.bf16.mxu0 %v4047
    %4084 = vmatpush1.bf16.msra.mxu0 %v4046
    %4085 = vmatprep.subr.bf16.mxu0 %v4044
    %4086 = vmatpush1.bf16.msra.mxu0 %v4043
    %4087 = vmatprep.subr.bf16.mxu0 %v4041
    %4088 = vmatpush1.bf16.msra.mxu0 %v4040
    %4089 = vmatprep.subr.bf16.mxu0 %v4038
    %4090 = vmatpush1.bf16.msra.mxu0 %v4037
    %4091 = vmatprep.subr.bf16.mxu0 %v4035
    %4092 = vmatpush1.bf16.msra.mxu0 %v4034
    %4093 = vmatprep.subr.bf16.mxu0 %v4032
    %4094 = vmatpush1.bf16.msra.mxu0 %v4031
    %4095 = vmatprep.subr.bf16.mxu0 0
    %4096 = vmatpush2.bf16.msra.mxu0 0
    %4097 = vmatprep.subr.bf16.mxu0 0
    %4098 = vmatpush2.bf16.msra.mxu0 0
    %4099 = vmatprep.subr.bf16.mxu0 0
    %4100 = vmatpush2.bf16.msra.mxu0 0
    %4101 = vmatprep.subr.bf16.mxu0 0
    %4102 = vmatpush2.bf16.msra.mxu0 0
    %4103 = vmatprep.subr.bf16.mxu0 0
    %4104 = vmatpush2.bf16.msra.mxu0 0
    %4105 = vmatprep.subr.bf16.mxu0 0
    %4106 = vmatpush2.bf16.msra.mxu0 0
    %4107 = vmatprep.subr.bf16.mxu0 0
    %4108 = vmatpush2.bf16.msra.mxu0 0
    %4109 = vmatprep.subr.bf16.mxu0 0
    %4110 = vmatpush2.bf16.msra.mxu0 0
    %4111 = vmatprep.mubr.bf16.mxu0 0
    %4112 = vmatmul.mubr.bf16.gmra.mxu0 %v3918
    %v4113 = vpop.f32.mrf.mxu0
    %v4114 = vadd.f32 0.0, %v4113
    %v4115 = vpop.f32.mrf.mxu0
    %v4116 = vadd.f32 0.0, %v4115
    %v4117 = vpop.f32.mrf.mxu0
    %v4118 = vpop.f32.mrf.mxu0
    %4119 = vdwg.mxu0
    %4120 = vmatprep.subr.bf16.mxu0 0
    %4121 = vmatpush1.bf16.msra.mxu0 %v4054
    %4122 = vmatprep.subr.bf16.mxu0 0
    %4123 = vmatpush1.bf16.msra.mxu0 %v4051
    %4124 = vmatprep.subr.bf16.mxu0 0
    %4125 = vmatpush1.bf16.msra.mxu0 %v4048
    %4126 = vmatprep.subr.bf16.mxu0 0
    %4127 = vmatpush1.bf16.msra.mxu0 %v4045
    %4128 = vmatprep.subr.bf16.mxu0 0
    %4129 = vmatpush1.bf16.msra.mxu0 %v4042
    %4130 = vmatprep.subr.bf16.mxu0 0
    %4131 = vmatpush1.bf16.msra.mxu0 %v4039
    %4132 = vmatprep.subr.bf16.mxu0 0
    %4133 = vmatpush1.bf16.msra.mxu0 %v4036
    %4134 = vmatprep.subr.bf16.mxu0 0
    %4135 = vmatpush1.bf16.msra.mxu0 %v4033
    %4136 = vmatprep.subr.bf16.mxu0 0
    %4137 = vmatpush2.bf16.msra.mxu0 0
    %4138 = vmatprep.subr.bf16.mxu0 0
    %4139 = vmatpush2.bf16.msra.mxu0 0
    %4140 = vmatprep.subr.bf16.mxu0 0
    %4141 = vmatpush2.bf16.msra.mxu0 0
    %4142 = vmatprep.subr.bf16.mxu0 0
    %4143 = vmatpush2.bf16.msra.mxu0 0
    %4144 = vmatprep.subr.bf16.mxu0 0
    %4145 = vmatpush2.bf16.msra.mxu0 0
    %4146 = vmatprep.subr.bf16.mxu0 0
    %4147 = vmatpush2.bf16.msra.mxu0 0
    %4148 = vmatprep.subr.bf16.mxu0 0
    %4149 = vmatpush2.bf16.msra.mxu0 0
    %4150 = vmatprep.subr.bf16.mxu0 0
    %4151 = vmatpush2.bf16.msra.mxu0 0
    %4152 = vmatprep.mubr.bf16.mxu0 0
    %4153 = vmatmul.mubr.bf16.gmra.mxu0 %v3918
    %v4154 = vpop.f32.mrf.mxu0
    %v4155 = vadd.f32 0.0, %v4154
    %v4156 = vpop.f32.mrf.mxu0
    %v4157 = vpop.f32.mrf.mxu0
    %v4158 = vpop.f32.mrf.mxu0
    %4159 = vdwg.mxu0
    %v4160 = vadd.f32 %v3915, %v4114
    %v4161 = vxor.u32 %v4160, 2147483648
    %v4162 = vmul.f32 %v4161, 1.442695
    %v4163 = vpow.pop %v4162
    %v4164 = vadd.f32 %v4163, 1.0
    %v4165 = vrcp.pop %v4164
    %v4166 = vmul.f32 1.0, %v4165
    %v4167 = vadd.f32 %v3916, %v4116
    %v4168 = vxor.u32 %v4167, 2147483648
    %v4169 = vmul.f32 %v4168, 1.442695
    %v4170 = vpow.pop %v4169
    %v4171 = vadd.f32 %v4170, 1.0
    %v4172 = vrcp.pop %v4171
    %v4173 = vmul.f32 1.0, %v4172
    %v4174 = vadd.f32 %v4155, %v2843
    %v4175 = vmul.f32 %v4166, %v4174
    %v4176 = vadd.f32 %v3917, %v4175
    %v4177 = vtanh.pop %v4176
    %v4178 = vsub.f32 %v3913, %v4177
    %v4179 = vmul.f32 %v4173, %v4178
    %v4180 = vadd.f32 %v4177, %v4179
    %4181 = vst [vmem:[#allocation10 + $0x20] sm:$0xff] %v4180
    %v4182 = vld [vmem:[#allocation2 + $0x78] sm:$0xff]
    %v4183 = vld [vmem:[#allocation2 + $0x80] sm:$0xff]
    %v4184 = vld [vmem:[#allocation2 + $0x88] sm:$0xff]
    %v4185 = vpack.c.bf16 %v4180, %v4180
    %v4186 = vld [vmem:[#allocation9] sm:$0xff]
    %v4187 = vld [vmem:[#allocation9 + $0x8] sm:$0xf]
    %v4188 = vld [vmem:[#allocation9 + $0xc] sm:$0xff]
    %v4189 = vld [vmem:[#allocation9 + $0x14] sm:$0xf]
    %v4190 = vld [vmem:[#allocation9 + $0x18] sm:$0xff]
    %v4191 = vld [vmem:[#allocation9 + $0x20] sm:$0xf]
    %v4192 = vld [vmem:[#allocation9 + $0x24] sm:$0xff]
    %v4193 = vld [vmem:[#allocation9 + $0x2c] sm:$0xf]
    %v4194 = vld [vmem:[#allocation9 + $0x30] sm:$0xff]
    %v4195 = vld [vmem:[#allocation9 + $0x38] sm:$0xf]
    %v4196 = vld [vmem:[#allocation9 + $0x3c] sm:$0xff]
    %v4197 = vld [vmem:[#allocation9 + $0x44] sm:$0xf]
    %v4198 = vld [vmem:[#allocation9 + $0x48] sm:$0xff]
    %v4199 = vld [vmem:[#allocation9 + $0x50] sm:$0xf]
    %v4200 = vld [vmem:[#allocation9 + $0x54] sm:$0xff]
    %v4201 = vld [vmem:[#allocation9 + $0x5c] sm:$0xf]
    %v4202 = vld [vmem:[#allocation9 + $0x60] sm:$0xff]
    %v4203 = vld [vmem:[#allocation9 + $0x68] sm:$0xf]
    %v4204 = vld [vmem:[#allocation9 + $0x6c] sm:$0xff]
    %v4205 = vld [vmem:[#allocation9 + $0x74] sm:$0xf]
    %v4206 = vld [vmem:[#allocation9 + $0x78] sm:$0xff]
    %v4207 = vld [vmem:[#allocation9 + $0x80] sm:$0xf]
    %v4208 = vld [vmem:[#allocation9 + $0x84] sm:$0xff]
    %v4209 = vld [vmem:[#allocation9 + $0x8c] sm:$0xf]
    %v4210 = vld [vmem:[#allocation9 + $0x90] sm:$0xff]
    %v4211 = vld [vmem:[#allocation9 + $0x98] sm:$0xf]
    %v4212 = vld [vmem:[#allocation9 + $0x9c] sm:$0xff]
    %v4213 = vld [vmem:[#allocation9 + $0xa4] sm:$0xf]
    %v4214 = vld [vmem:[#allocation9 + $0xa8] sm:$0xff]
    %v4215 = vld [vmem:[#allocation9 + $0xb0] sm:$0xf]
    %v4216 = vld [vmem:[#allocation9 + $0xb4] sm:$0xff]
    %v4217 = vld [vmem:[#allocation9 + $0xbc] sm:$0xf]
    %v4250 = vunpack.c.l.b16 %v4186
    %v4251 = vunpack.c.h.b16 %v4186
    %v4252 = vunpack.c.l.b16 %v4187
    %v4253 = vunpack.c.l.b16 %v4188
    %v4254 = vunpack.c.h.b16 %v4188
    %v4255 = vunpack.c.l.b16 %v4189
    %v4256 = vunpack.c.l.b16 %v4190
    %v4257 = vunpack.c.h.b16 %v4190
    %v4258 = vunpack.c.l.b16 %v4191
    %v4259 = vunpack.c.l.b16 %v4192
    %v4260 = vunpack.c.h.b16 %v4192
    %v4261 = vunpack.c.l.b16 %v4193
    %v4262 = vunpack.c.l.b16 %v4194
    %v4263 = vunpack.c.h.b16 %v4194
    %v4264 = vunpack.c.l.b16 %v4195
    %v4265 = vunpack.c.l.b16 %v4196
    %v4266 = vunpack.c.h.b16 %v4196
    %v4267 = vunpack.c.l.b16 %v4197
    %v4268 = vunpack.c.l.b16 %v4198
    %v4269 = vunpack.c.h.b16 %v4198
    %v4270 = vunpack.c.l.b16 %v4199
    %v4271 = vunpack.c.l.b16 %v4200
    %v4272 = vunpack.c.h.b16 %v4200
    %v4273 = vunpack.c.l.b16 %v4201
    %v4274 = vunpack.c.l.b16 %v4202
    %v4275 = vunpack.c.h.b16 %v4202
    %v4276 = vunpack.c.l.b16 %v4203
    %v4277 = vunpack.c.l.b16 %v4204
    %v4278 = vunpack.c.h.b16 %v4204
    %v4279 = vunpack.c.l.b16 %v4205
    %v4280 = vunpack.c.l.b16 %v4206
    %v4281 = vunpack.c.h.b16 %v4206
    %v4282 = vunpack.c.l.b16 %v4207
    %v4283 = vunpack.c.l.b16 %v4208
    %v4284 = vunpack.c.h.b16 %v4208
    %v4285 = vunpack.c.l.b16 %v4209
    %v4286 = vunpack.c.l.b16 %v4210
    %v4287 = vunpack.c.h.b16 %v4210
    %v4288 = vunpack.c.l.b16 %v4211
    %v4289 = vunpack.c.l.b16 %v4212
    %v4290 = vunpack.c.h.b16 %v4212
    %v4291 = vunpack.c.l.b16 %v4213
    %v4292 = vunpack.c.l.b16 %v4214
    %v4293 = vunpack.c.h.b16 %v4214
    %v4294 = vunpack.c.l.b16 %v4215
    %v4295 = vunpack.c.l.b16 %v4216
    %v4296 = vunpack.c.h.b16 %v4216
    %v4297 = vunpack.c.l.b16 %v4217
    %v4298 = vpack.c.b16 %v4253, %v4250
    %v4299 = vpack.c.b16 %v4254, %v4251
    %v4300 = vpack.c.b16 %v4255, %v4252
    %v4301 = vpack.c.b16 %v4259, %v4256
    %v4302 = vpack.c.b16 %v4260, %v4257
    %v4303 = vpack.c.b16 %v4261, %v4258
    %v4304 = vpack.c.b16 %v4265, %v4262
    %v4305 = vpack.c.b16 %v4266, %v4263
    %v4306 = vpack.c.b16 %v4267, %v4264
    %v4307 = vpack.c.b16 %v4271, %v4268
    %v4308 = vpack.c.b16 %v4272, %v4269
    %v4309 = vpack.c.b16 %v4273, %v4270
    %v4310 = vpack.c.b16 %v4277, %v4274
    %v4311 = vpack.c.b16 %v4278, %v4275
    %v4312 = vpack.c.b16 %v4279, %v4276
    %v4313 = vpack.c.b16 %v4283, %v4280
    %v4314 = vpack.c.b16 %v4284, %v4281
    %v4315 = vpack.c.b16 %v4285, %v4282
    %v4316 = vpack.c.b16 %v4289, %v4286
    %v4317 = vpack.c.b16 %v4290, %v4287
    %v4318 = vpack.c.b16 %v4291, %v4288
    %v4319 = vpack.c.b16 %v4295, %v4292
    %v4320 = vpack.c.b16 %v4296, %v4293
    %v4321 = vpack.c.b16 %v4297, %v4294
    %4346 = vmatprep.subr.bf16.mxu0 %v4320
    %4347 = vmatpush1.bf16.msra.mxu0 %v4319
    %4348 = vmatprep.subr.bf16.mxu0 %v4317
    %4349 = vmatpush1.bf16.msra.mxu0 %v4316
    %4350 = vmatprep.subr.bf16.mxu0 %v4314
    %4351 = vmatpush1.bf16.msra.mxu0 %v4313
    %4352 = vmatprep.subr.bf16.mxu0 %v4311
    %4353 = vmatpush1.bf16.msra.mxu0 %v4310
    %4354 = vmatprep.subr.bf16.mxu0 %v4308
    %4355 = vmatpush1.bf16.msra.mxu0 %v4307
    %4356 = vmatprep.subr.bf16.mxu0 %v4305
    %4357 = vmatpush1.bf16.msra.mxu0 %v4304
    %4358 = vmatprep.subr.bf16.mxu0 %v4302
    %4359 = vmatpush1.bf16.msra.mxu0 %v4301
    %4360 = vmatprep.subr.bf16.mxu0 %v4299
    %4361 = vmatpush1.bf16.msra.mxu0 %v4298
    %4362 = vmatprep.subr.bf16.mxu0 0
    %4363 = vmatpush2.bf16.msra.mxu0 0
    %4364 = vmatprep.subr.bf16.mxu0 0
    %4365 = vmatpush2.bf16.msra.mxu0 0
    %4366 = vmatprep.subr.bf16.mxu0 0
    %4367 = vmatpush2.bf16.msra.mxu0 0
    %4368 = vmatprep.subr.bf16.mxu0 0
    %4369 = vmatpush2.bf16.msra.mxu0 0
    %4370 = vmatprep.subr.bf16.mxu0 0
    %4371 = vmatpush2.bf16.msra.mxu0 0
    %4372 = vmatprep.subr.bf16.mxu0 0
    %4373 = vmatpush2.bf16.msra.mxu0 0
    %4374 = vmatprep.subr.bf16.mxu0 0
    %4375 = vmatpush2.bf16.msra.mxu0 0
    %4376 = vmatprep.subr.bf16.mxu0 0
    %4377 = vmatpush2.bf16.msra.mxu0 0
    %4378 = vmatprep.mubr.bf16.mxu0 0
    %4379 = vmatmul.mubr.bf16.gmra.mxu0 %v4185
    %v4380 = vpop.f32.mrf.mxu0
    %v4381 = vadd.f32 0.0, %v4380
    %v4382 = vpop.f32.mrf.mxu0
    %v4383 = vadd.f32 0.0, %v4382
    %v4384 = vpop.f32.mrf.mxu0
    %v4385 = vpop.f32.mrf.mxu0
    %4386 = vdwg.mxu0
    %4387 = vmatprep.subr.bf16.mxu0 0
    %4388 = vmatpush1.bf16.msra.mxu0 %v4321
    %4389 = vmatprep.subr.bf16.mxu0 0
    %4390 = vmatpush1.bf16.msra.mxu0 %v4318
    %4391 = vmatprep.subr.bf16.mxu0 0
    %4392 = vmatpush1.bf16.msra.mxu0 %v4315
    %4393 = vmatprep.subr.bf16.mxu0 0
    %4394 = vmatpush1.bf16.msra.mxu0 %v4312
    %4395 = vmatprep.subr.bf16.mxu0 0
    %4396 = vmatpush1.bf16.msra.mxu0 %v4309
    %4397 = vmatprep.subr.bf16.mxu0 0
    %4398 = vmatpush1.bf16.msra.mxu0 %v4306
    %4399 = vmatprep.subr.bf16.mxu0 0
    %4400 = vmatpush1.bf16.msra.mxu0 %v4303
    %4401 = vmatprep.subr.bf16.mxu0 0
    %4402 = vmatpush1.bf16.msra.mxu0 %v4300
    %4403 = vmatprep.subr.bf16.mxu0 0
    %4404 = vmatpush2.bf16.msra.mxu0 0
    %4405 = vmatprep.subr.bf16.mxu0 0
    %4406 = vmatpush2.bf16.msra.mxu0 0
    %4407 = vmatprep.subr.bf16.mxu0 0
    %4408 = vmatpush2.bf16.msra.mxu0 0
    %4409 = vmatprep.subr.bf16.mxu0 0
    %4410 = vmatpush2.bf16.msra.mxu0 0
    %4411 = vmatprep.subr.bf16.mxu0 0
    %4412 = vmatpush2.bf16.msra.mxu0 0
    %4413 = vmatprep.subr.bf16.mxu0 0
    %4414 = vmatpush2.bf16.msra.mxu0 0
    %4415 = vmatprep.subr.bf16.mxu0 0
    %4416 = vmatpush2.bf16.msra.mxu0 0
    %4417 = vmatprep.subr.bf16.mxu0 0
    %4418 = vmatpush2.bf16.msra.mxu0 0
    %4419 = vmatprep.mubr.bf16.mxu0 0
    %4420 = vmatmul.mubr.bf16.gmra.mxu0 %v4185
    %v4421 = vpop.f32.mrf.mxu0
    %v4422 = vadd.f32 0.0, %v4421
    %v4423 = vpop.f32.mrf.mxu0
    %v4424 = vpop.f32.mrf.mxu0
    %v4425 = vpop.f32.mrf.mxu0
    %4426 = vdwg.mxu0
    %v4427 = vadd.f32 %v4182, %v4381
    %v4428 = vxor.u32 %v4427, 2147483648
    %v4429 = vmul.f32 %v4428, 1.442695
    %v4430 = vpow.pop %v4429
    %v4431 = vadd.f32 %v4430, 1.0
    %v4432 = vrcp.pop %v4431
    %v4433 = vmul.f32 1.0, %v4432
    %v4434 = vadd.f32 %v4183, %v4383
    %v4435 = vxor.u32 %v4434, 2147483648
    %v4436 = vmul.f32 %v4435, 1.442695
    %v4437 = vpow.pop %v4436
    %v4438 = vadd.f32 %v4437, 1.0
    %v4439 = vrcp.pop %v4438
    %v4440 = vmul.f32 1.0, %v4439
    %v4441 = vadd.f32 %v4422, %v2843
    %v4442 = vmul.f32 %v4433, %v4441
    %v4443 = vadd.f32 %v4184, %v4442
    %v4444 = vtanh.pop %v4443
    %v4445 = vsub.f32 %v4180, %v4444
    %v4446 = vmul.f32 %v4440, %v4445
    %v4447 = vadd.f32 %v4444, %v4446
    %4448 = vst [vmem:[#allocation10 + $0x28] sm:$0xff] %v4447
    %v4449 = vld [vmem:[#allocation2 + $0x90] sm:$0xff]
    %v4450 = vld [vmem:[#allocation2 + $0x98] sm:$0xff]
    %v4451 = vld [vmem:[#allocation2 + $0xa0] sm:$0xff]
    %v4452 = vpack.c.bf16 %v4447, %v4447
    %v4453 = vld [vmem:[#allocation9] sm:$0xff]
    %v4454 = vld [vmem:[#allocation9 + $0x8] sm:$0xf]
    %v4455 = vld [vmem:[#allocation9 + $0xc] sm:$0xff]
    %v4456 = vld [vmem:[#allocation9 + $0x14] sm:$0xf]
    %v4457 = vld [vmem:[#allocation9 + $0x18] sm:$0xff]
    %v4458 = vld [vmem:[#allocation9 + $0x20] sm:$0xf]
    %v4459 = vld [vmem:[#allocation9 + $0x24] sm:$0xff]
    %v4460 = vld [vmem:[#allocation9 + $0x2c] sm:$0xf]
    %v4461 = vld [vmem:[#allocation9 + $0x30] sm:$0xff]
    %v4462 = vld [vmem:[#allocation9 + $0x38] sm:$0xf]
    %v4463 = vld [vmem:[#allocation9 + $0x3c] sm:$0xff]
    %v4464 = vld [vmem:[#allocation9 + $0x44] sm:$0xf]
    %v4465 = vld [vmem:[#allocation9 + $0x48] sm:$0xff]
    %v4466 = vld [vmem:[#allocation9 + $0x50] sm:$0xf]
    %v4467 = vld [vmem:[#allocation9 + $0x54] sm:$0xff]
    %v4468 = vld [vmem:[#allocation9 + $0x5c] sm:$0xf]
    %v4469 = vld [vmem:[#allocation9 + $0x60] sm:$0xff]
    %v4470 = vld [vmem:[#allocation9 + $0x68] sm:$0xf]
    %v4471 = vld [vmem:[#allocation9 + $0x6c] sm:$0xff]
    %v4472 = vld [vmem:[#allocation9 + $0x74] sm:$0xf]
    %v4473 = vld [vmem:[#allocation9 + $0x78] sm:$0xff]
    %v4474 = vld [vmem:[#allocation9 + $0x80] sm:$0xf]
    %v4475 = vld [vmem:[#allocation9 + $0x84] sm:$0xff]
    %v4476 = vld [vmem:[#allocation9 + $0x8c] sm:$0xf]
    %v4477 = vld [vmem:[#allocation9 + $0x90] sm:$0xff]
    %v4478 = vld [vmem:[#allocation9 + $0x98] sm:$0xf]
    %v4479 = vld [vmem:[#allocation9 + $0x9c] sm:$0xff]
    %v4480 = vld [vmem:[#allocation9 + $0xa4] sm:$0xf]
    %v4481 = vld [vmem:[#allocation9 + $0xa8] sm:$0xff]
    %v4482 = vld [vmem:[#allocation9 + $0xb0] sm:$0xf]
    %v4483 = vld [vmem:[#allocation9 + $0xb4] sm:$0xff]
    %v4484 = vld [vmem:[#allocation9 + $0xbc] sm:$0xf]
    %v4517 = vunpack.c.l.b16 %v4453
    %v4518 = vunpack.c.h.b16 %v4453
    %v4519 = vunpack.c.l.b16 %v4454
    %v4520 = vunpack.c.l.b16 %v4455
    %v4521 = vunpack.c.h.b16 %v4455
    %v4522 = vunpack.c.l.b16 %v4456
    %v4523 = vunpack.c.l.b16 %v4457
    %v4524 = vunpack.c.h.b16 %v4457
    %v4525 = vunpack.c.l.b16 %v4458
    %v4526 = vunpack.c.l.b16 %v4459
    %v4527 = vunpack.c.h.b16 %v4459
    %v4528 = vunpack.c.l.b16 %v4460
    %v4529 = vunpack.c.l.b16 %v4461
    %v4530 = vunpack.c.h.b16 %v4461
    %v4531 = vunpack.c.l.b16 %v4462
    %v4532 = vunpack.c.l.b16 %v4463
    %v4533 = vunpack.c.h.b16 %v4463
    %v4534 = vunpack.c.l.b16 %v4464
    %v4535 = vunpack.c.l.b16 %v4465
    %v4536 = vunpack.c.h.b16 %v4465
    %v4537 = vunpack.c.l.b16 %v4466
    %v4538 = vunpack.c.l.b16 %v4467
    %v4539 = vunpack.c.h.b16 %v4467
    %v4540 = vunpack.c.l.b16 %v4468
    %v4541 = vunpack.c.l.b16 %v4469
    %v4542 = vunpack.c.h.b16 %v4469
    %v4543 = vunpack.c.l.b16 %v4470
    %v4544 = vunpack.c.l.b16 %v4471
    %v4545 = vunpack.c.h.b16 %v4471
    %v4546 = vunpack.c.l.b16 %v4472
    %v4547 = vunpack.c.l.b16 %v4473
    %v4548 = vunpack.c.h.b16 %v4473
    %v4549 = vunpack.c.l.b16 %v4474
    %v4550 = vunpack.c.l.b16 %v4475
    %v4551 = vunpack.c.h.b16 %v4475
    %v4552 = vunpack.c.l.b16 %v4476
    %v4553 = vunpack.c.l.b16 %v4477
    %v4554 = vunpack.c.h.b16 %v4477
    %v4555 = vunpack.c.l.b16 %v4478
    %v4556 = vunpack.c.l.b16 %v4479
    %v4557 = vunpack.c.h.b16 %v4479
    %v4558 = vunpack.c.l.b16 %v4480
    %v4559 = vunpack.c.l.b16 %v4481
    %v4560 = vunpack.c.h.b16 %v4481
    %v4561 = vunpack.c.l.b16 %v4482
    %v4562 = vunpack.c.l.b16 %v4483
    %v4563 = vunpack.c.h.b16 %v4483
    %v4564 = vunpack.c.l.b16 %v4484
    %v4565 = vpack.c.b16 %v4520, %v4517
    %v4566 = vpack.c.b16 %v4521, %v4518
    %v4567 = vpack.c.b16 %v4522, %v4519
    %v4568 = vpack.c.b16 %v4526, %v4523
    %v4569 = vpack.c.b16 %v4527, %v4524
    %v4570 = vpack.c.b16 %v4528, %v4525
    %v4571 = vpack.c.b16 %v4532, %v4529
    %v4572 = vpack.c.b16 %v4533, %v4530
    %v4573 = vpack.c.b16 %v4534, %v4531
    %v4574 = vpack.c.b16 %v4538, %v4535
    %v4575 = vpack.c.b16 %v4539, %v4536
    %v4576 = vpack.c.b16 %v4540, %v4537
    %v4577 = vpack.c.b16 %v4544, %v4541
    %v4578 = vpack.c.b16 %v4545, %v4542
    %v4579 = vpack.c.b16 %v4546, %v4543
    %v4580 = vpack.c.b16 %v4550, %v4547
    %v4581 = vpack.c.b16 %v4551, %v4548
    %v4582 = vpack.c.b16 %v4552, %v4549
    %v4583 = vpack.c.b16 %v4556, %v4553
    %v4584 = vpack.c.b16 %v4557, %v4554
    %v4585 = vpack.c.b16 %v4558, %v4555
    %v4586 = vpack.c.b16 %v4562, %v4559
    %v4587 = vpack.c.b16 %v4563, %v4560
    %v4588 = vpack.c.b16 %v4564, %v4561
    %4613 = vmatprep.subr.bf16.mxu0 %v4587
    %4614 = vmatpush1.bf16.msra.mxu0 %v4586
    %4615 = vmatprep.subr.bf16.mxu0 %v4584
    %4616 = vmatpush1.bf16.msra.mxu0 %v4583
    %4617 = vmatprep.subr.bf16.mxu0 %v4581
    %4618 = vmatpush1.bf16.msra.mxu0 %v4580
    %4619 = vmatprep.subr.bf16.mxu0 %v4578
    %4620 = vmatpush1.bf16.msra.mxu0 %v4577
    %4621 = vmatprep.subr.bf16.mxu0 %v4575
    %4622 = vmatpush1.bf16.msra.mxu0 %v4574
    %4623 = vmatprep.subr.bf16.mxu0 %v4572
    %4624 = vmatpush1.bf16.msra.mxu0 %v4571
    %4625 = vmatprep.subr.bf16.mxu0 %v4569
    %4626 = vmatpush1.bf16.msra.mxu0 %v4568
    %4627 = vmatprep.subr.bf16.mxu0 %v4566
    %4628 = vmatpush1.bf16.msra.mxu0 %v4565
    %4629 = vmatprep.subr.bf16.mxu0 0
    %4630 = vmatpush2.bf16.msra.mxu0 0
    %4631 = vmatprep.subr.bf16.mxu0 0
    %4632 = vmatpush2.bf16.msra.mxu0 0
    %4633 = vmatprep.subr.bf16.mxu0 0
    %4634 = vmatpush2.bf16.msra.mxu0 0
    %4635 = vmatprep.subr.bf16.mxu0 0
    %4636 = vmatpush2.bf16.msra.mxu0 0
    %4637 = vmatprep.subr.bf16.mxu0 0
    %4638 = vmatpush2.bf16.msra.mxu0 0
    %4639 = vmatprep.subr.bf16.mxu0 0
    %4640 = vmatpush2.bf16.msra.mxu0 0
    %4641 = vmatprep.subr.bf16.mxu0 0
    %4642 = vmatpush2.bf16.msra.mxu0 0
    %4643 = vmatprep.subr.bf16.mxu0 0
    %4644 = vmatpush2.bf16.msra.mxu0 0
    %4645 = vmatprep.mubr.bf16.mxu0 0
    %4646 = vmatmul.mubr.bf16.gmra.mxu0 %v4452
    %v4647 = vpop.f32.mrf.mxu0
    %v4648 = vadd.f32 0.0, %v4647
    %v4649 = vpop.f32.mrf.mxu0
    %v4650 = vadd.f32 0.0, %v4649
    %v4651 = vpop.f32.mrf.mxu0
    %v4652 = vpop.f32.mrf.mxu0
    %4653 = vdwg.mxu0
    %4654 = vmatprep.subr.bf16.mxu0 0
    %4655 = vmatpush1.bf16.msra.mxu0 %v4588
    %4656 = vmatprep.subr.bf16.mxu0 0
    %4657 = vmatpush1.bf16.msra.mxu0 %v4585
    %4658 = vmatprep.subr.bf16.mxu0 0
    %4659 = vmatpush1.bf16.msra.mxu0 %v4582
    %4660 = vmatprep.subr.bf16.mxu0 0
    %4661 = vmatpush1.bf16.msra.mxu0 %v4579
    %4662 = vmatprep.subr.bf16.mxu0 0
    %4663 = vmatpush1.bf16.msra.mxu0 %v4576
    %4664 = vmatprep.subr.bf16.mxu0 0
    %4665 = vmatpush1.bf16.msra.mxu0 %v4573
    %4666 = vmatprep.subr.bf16.mxu0 0
    %4667 = vmatpush1.bf16.msra.mxu0 %v4570
    %4668 = vmatprep.subr.bf16.mxu0 0
    %4669 = vmatpush1.bf16.msra.mxu0 %v4567
    %4670 = vmatprep.subr.bf16.mxu0 0
    %4671 = vmatpush2.bf16.msra.mxu0 0
    %4672 = vmatprep.subr.bf16.mxu0 0
    %4673 = vmatpush2.bf16.msra.mxu0 0
    %4674 = vmatprep.subr.bf16.mxu0 0
    %4675 = vmatpush2.bf16.msra.mxu0 0
    %4676 = vmatprep.subr.bf16.mxu0 0
    %4677 = vmatpush2.bf16.msra.mxu0 0
    %4678 = vmatprep.subr.bf16.mxu0 0
    %4679 = vmatpush2.bf16.msra.mxu0 0
    %4680 = vmatprep.subr.bf16.mxu0 0
    %4681 = vmatpush2.bf16.msra.mxu0 0
    %4682 = vmatprep.subr.bf16.mxu0 0
    %4683 = vmatpush2.bf16.msra.mxu0 0
    %4684 = vmatprep.subr.bf16.mxu0 0
    %4685 = vmatpush2.bf16.msra.mxu0 0
    %4686 = vmatprep.mubr.bf16.mxu0 0
    %4687 = vmatmul.mubr.bf16.gmra.mxu0 %v4452
    %v4688 = vpop.f32.mrf.mxu0
    %v4689 = vadd.f32 0.0, %v4688
    %v4690 = vpop.f32.mrf.mxu0
    %v4691 = vpop.f32.mrf.mxu0
    %v4692 = vpop.f32.mrf.mxu0
    %4693 = vdwg.mxu0
    %v4694 = vadd.f32 %v4449, %v4648
    %v4695 = vxor.u32 %v4694, 2147483648
    %v4696 = vmul.f32 %v4695, 1.442695
    %v4697 = vpow.pop %v4696
    %v4698 = vadd.f32 %v4697, 1.0
    %v4699 = vrcp.pop %v4698
    %v4700 = vmul.f32 1.0, %v4699
    %v4701 = vadd.f32 %v4450, %v4650
    %v4702 = vxor.u32 %v4701, 2147483648
    %v4703 = vmul.f32 %v4702, 1.442695
    %v4704 = vpow.pop %v4703
    %v4705 = vadd.f32 %v4704, 1.0
    %v4706 = vrcp.pop %v4705
    %v4707 = vmul.f32 1.0, %v4706
    %v4708 = vadd.f32 %v4689, %v2843
    %v4709 = vmul.f32 %v4700, %v4708
    %v4710 = vadd.f32 %v4451, %v4709
    %v4711 = vtanh.pop %v4710
    %v4712 = vsub.f32 %v4447, %v4711
    %v4713 = vmul.f32 %v4707, %v4712
    %v4714 = vadd.f32 %v4711, %v4713
    %4715 = vst [vmem:[#allocation10 + $0x30] sm:$0xff] %v4714
    %v4716 = vld [vmem:[#allocation2 + $0xa8] sm:$0xff]
    %v4717 = vld [vmem:[#allocation2 + $0xb0] sm:$0xff]
    %v4718 = vld [vmem:[#allocation2 + $0xb8] sm:$0xff]
    %v4719 = vpack.c.bf16 %v4714, %v4714
    %v4720 = vld [vmem:[#allocation9] sm:$0xff]
    %v4721 = vld [vmem:[#allocation9 + $0x8] sm:$0xf]
    %v4722 = vld [vmem:[#allocation9 + $0xc] sm:$0xff]
    %v4723 = vld [vmem:[#allocation9 + $0x14] sm:$0xf]
    %v4724 = vld [vmem:[#allocation9 + $0x18] sm:$0xff]
    %v4725 = vld [vmem:[#allocation9 + $0x20] sm:$0xf]
    %v4726 = vld [vmem:[#allocation9 + $0x24] sm:$0xff]
    %v4727 = vld [vmem:[#allocation9 + $0x2c] sm:$0xf]
    %v4728 = vld [vmem:[#allocation9 + $0x30] sm:$0xff]
    %v4729 = vld [vmem:[#allocation9 + $0x38] sm:$0xf]
    %v4730 = vld [vmem:[#allocation9 + $0x3c] sm:$0xff]
    %v4731 = vld [vmem:[#allocation9 + $0x44] sm:$0xf]
    %v4732 = vld [vmem:[#allocation9 + $0x48] sm:$0xff]
    %v4733 = vld [vmem:[#allocation9 + $0x50] sm:$0xf]
    %v4734 = vld [vmem:[#allocation9 + $0x54] sm:$0xff]
    %v4735 = vld [vmem:[#allocation9 + $0x5c] sm:$0xf]
    %v4736 = vld [vmem:[#allocation9 + $0x60] sm:$0xff]
    %v4737 = vld [vmem:[#allocation9 + $0x68] sm:$0xf]
    %v4738 = vld [vmem:[#allocation9 + $0x6c] sm:$0xff]
    %v4739 = vld [vmem:[#allocation9 + $0x74] sm:$0xf]
    %v4740 = vld [vmem:[#allocation9 + $0x78] sm:$0xff]
    %v4741 = vld [vmem:[#allocation9 + $0x80] sm:$0xf]
    %v4742 = vld [vmem:[#allocation9 + $0x84] sm:$0xff]
    %v4743 = vld [vmem:[#allocation9 + $0x8c] sm:$0xf]
    %v4744 = vld [vmem:[#allocation9 + $0x90] sm:$0xff]
    %v4745 = vld [vmem:[#allocation9 + $0x98] sm:$0xf]
    %v4746 = vld [vmem:[#allocation9 + $0x9c] sm:$0xff]
    %v4747 = vld [vmem:[#allocation9 + $0xa4] sm:$0xf]
    %v4748 = vld [vmem:[#allocation9 + $0xa8] sm:$0xff]
    %v4749 = vld [vmem:[#allocation9 + $0xb0] sm:$0xf]
    %v4750 = vld [vmem:[#allocation9 + $0xb4] sm:$0xff]
    %v4751 = vld [vmem:[#allocation9 + $0xbc] sm:$0xf]
    %v4784 = vunpack.c.l.b16 %v4720
    %v4785 = vunpack.c.h.b16 %v4720
    %v4786 = vunpack.c.l.b16 %v4721
    %v4787 = vunpack.c.l.b16 %v4722
    %v4788 = vunpack.c.h.b16 %v4722
    %v4789 = vunpack.c.l.b16 %v4723
    %v4790 = vunpack.c.l.b16 %v4724
    %v4791 = vunpack.c.h.b16 %v4724
    %v4792 = vunpack.c.l.b16 %v4725
    %v4793 = vunpack.c.l.b16 %v4726
    %v4794 = vunpack.c.h.b16 %v4726
    %v4795 = vunpack.c.l.b16 %v4727
    %v4796 = vunpack.c.l.b16 %v4728
    %v4797 = vunpack.c.h.b16 %v4728
    %v4798 = vunpack.c.l.b16 %v4729
    %v4799 = vunpack.c.l.b16 %v4730
    %v4800 = vunpack.c.h.b16 %v4730
    %v4801 = vunpack.c.l.b16 %v4731
    %v4802 = vunpack.c.l.b16 %v4732
    %v4803 = vunpack.c.h.b16 %v4732
    %v4804 = vunpack.c.l.b16 %v4733
    %v4805 = vunpack.c.l.b16 %v4734
    %v4806 = vunpack.c.h.b16 %v4734
    %v4807 = vunpack.c.l.b16 %v4735
    %v4808 = vunpack.c.l.b16 %v4736
    %v4809 = vunpack.c.h.b16 %v4736
    %v4810 = vunpack.c.l.b16 %v4737
    %v4811 = vunpack.c.l.b16 %v4738
    %v4812 = vunpack.c.h.b16 %v4738
    %v4813 = vunpack.c.l.b16 %v4739
    %v4814 = vunpack.c.l.b16 %v4740
    %v4815 = vunpack.c.h.b16 %v4740
    %v4816 = vunpack.c.l.b16 %v4741
    %v4817 = vunpack.c.l.b16 %v4742
    %v4818 = vunpack.c.h.b16 %v4742
    %v4819 = vunpack.c.l.b16 %v4743
    %v4820 = vunpack.c.l.b16 %v4744
    %v4821 = vunpack.c.h.b16 %v4744
    %v4822 = vunpack.c.l.b16 %v4745
    %v4823 = vunpack.c.l.b16 %v4746
    %v4824 = vunpack.c.h.b16 %v4746
    %v4825 = vunpack.c.l.b16 %v4747
    %v4826 = vunpack.c.l.b16 %v4748
    %v4827 = vunpack.c.h.b16 %v4748
    %v4828 = vunpack.c.l.b16 %v4749
    %v4829 = vunpack.c.l.b16 %v4750
    %v4830 = vunpack.c.h.b16 %v4750
    %v4831 = vunpack.c.l.b16 %v4751
    %v4832 = vpack.c.b16 %v4787, %v4784
    %v4833 = vpack.c.b16 %v4788, %v4785
    %v4834 = vpack.c.b16 %v4789, %v4786
    %v4835 = vpack.c.b16 %v4793, %v4790
    %v4836 = vpack.c.b16 %v4794, %v4791
    %v4837 = vpack.c.b16 %v4795, %v4792
    %v4838 = vpack.c.b16 %v4799, %v4796
    %v4839 = vpack.c.b16 %v4800, %v4797
    %v4840 = vpack.c.b16 %v4801, %v4798
    %v4841 = vpack.c.b16 %v4805, %v4802
    %v4842 = vpack.c.b16 %v4806, %v4803
    %v4843 = vpack.c.b16 %v4807, %v4804
    %v4844 = vpack.c.b16 %v4811, %v4808
    %v4845 = vpack.c.b16 %v4812, %v4809
    %v4846 = vpack.c.b16 %v4813, %v4810
    %v4847 = vpack.c.b16 %v4817, %v4814
    %v4848 = vpack.c.b16 %v4818, %v4815
    %v4849 = vpack.c.b16 %v4819, %v4816
    %v4850 = vpack.c.b16 %v4823, %v4820
    %v4851 = vpack.c.b16 %v4824, %v4821
    %v4852 = vpack.c.b16 %v4825, %v4822
    %v4853 = vpack.c.b16 %v4829, %v4826
    %v4854 = vpack.c.b16 %v4830, %v4827
    %v4855 = vpack.c.b16 %v4831, %v4828
    %4880 = vmatprep.subr.bf16.mxu0 %v4854
    %4881 = vmatpush1.bf16.msra.mxu0 %v4853
    %4882 = vmatprep.subr.bf16.mxu0 %v4851
    %4883 = vmatpush1.bf16.msra.mxu0 %v4850
    %4884 = vmatprep.subr.bf16.mxu0 %v4848
    %4885 = vmatpush1.bf16.msra.mxu0 %v4847
    %4886 = vmatprep.subr.bf16.mxu0 %v4845
    %4887 = vmatpush1.bf16.msra.mxu0 %v4844
    %4888 = vmatprep.subr.bf16.mxu0 %v4842
    %4889 = vmatpush1.bf16.msra.mxu0 %v4841
    %4890 = vmatprep.subr.bf16.mxu0 %v4839
    %4891 = vmatpush1.bf16.msra.mxu0 %v4838
    %4892 = vmatprep.subr.bf16.mxu0 %v4836
    %4893 = vmatpush1.bf16.msra.mxu0 %v4835
    %4894 = vmatprep.subr.bf16.mxu0 %v4833
    %4895 = vmatpush1.bf16.msra.mxu0 %v4832
    %4896 = vmatprep.subr.bf16.mxu0 0
    %4897 = vmatpush2.bf16.msra.mxu0 0
    %4898 = vmatprep.subr.bf16.mxu0 0
    %4899 = vmatpush2.bf16.msra.mxu0 0
    %4900 = vmatprep.subr.bf16.mxu0 0
    %4901 = vmatpush2.bf16.msra.mxu0 0
    %4902 = vmatprep.subr.bf16.mxu0 0
    %4903 = vmatpush2.bf16.msra.mxu0 0
    %4904 = vmatprep.subr.bf16.mxu0 0
    %4905 = vmatpush2.bf16.msra.mxu0 0
    %4906 = vmatprep.subr.bf16.mxu0 0
    %4907 = vmatpush2.bf16.msra.mxu0 0
    %4908 = vmatprep.subr.bf16.mxu0 0
    %4909 = vmatpush2.bf16.msra.mxu0 0
    %4910 = vmatprep.subr.bf16.mxu0 0
    %4911 = vmatpush2.bf16.msra.mxu0 0
    %4912 = vmatprep.mubr.bf16.mxu0 0
    %4913 = vmatmul.mubr.bf16.gmra.mxu0 %v4719
    %v4914 = vpop.f32.mrf.mxu0
    %v4915 = vadd.f32 0.0, %v4914
    %v4916 = vpop.f32.mrf.mxu0
    %v4917 = vadd.f32 0.0, %v4916
    %v4918 = vpop.f32.mrf.mxu0
    %v4919 = vpop.f32.mrf.mxu0
    %4920 = vdwg.mxu0
    %4921 = vmatprep.subr.bf16.mxu0 0
    %4922 = vmatpush1.bf16.msra.mxu0 %v4855
    %4923 = vmatprep.subr.bf16.mxu0 0
    %4924 = vmatpush1.bf16.msra.mxu0 %v4852
    %4925 = vmatprep.subr.bf16.mxu0 0
    %4926 = vmatpush1.bf16.msra.mxu0 %v4849
    %4927 = vmatprep.subr.bf16.mxu0 0
    %4928 = vmatpush1.bf16.msra.mxu0 %v4846
    %4929 = vmatprep.subr.bf16.mxu0 0
    %4930 = vmatpush1.bf16.msra.mxu0 %v4843
    %4931 = vmatprep.subr.bf16.mxu0 0
    %4932 = vmatpush1.bf16.msra.mxu0 %v4840
    %4933 = vmatprep.subr.bf16.mxu0 0
    %4934 = vmatpush1.bf16.msra.mxu0 %v4837
    %4935 = vmatprep.subr.bf16.mxu0 0
    %4936 = vmatpush1.bf16.msra.mxu0 %v4834
    %4937 = vmatprep.subr.bf16.mxu0 0
    %4938 = vmatpush2.bf16.msra.mxu0 0
    %4939 = vmatprep.subr.bf16.mxu0 0
    %4940 = vmatpush2.bf16.msra.mxu0 0
    %4941 = vmatprep.subr.bf16.mxu0 0
    %4942 = vmatpush2.bf16.msra.mxu0 0
    %4943 = vmatprep.subr.bf16.mxu0 0
    %4944 = vmatpush2.bf16.msra.mxu0 0
    %4945 = vmatprep.subr.bf16.mxu0 0
    %4946 = vmatpush2.bf16.msra.mxu0 0
    %4947 = vmatprep.subr.bf16.mxu0 0
    %4948 = vmatpush2.bf16.msra.mxu0 0
    %4949 = vmatprep.subr.bf16.mxu0 0
    %4950 = vmatpush2.bf16.msra.mxu0 0
    %4951 = vmatprep.subr.bf16.mxu0 0
    %4952 = vmatpush2.bf16.msra.mxu0 0
    %4953 = vmatprep.mubr.bf16.mxu0 0
    %4954 = vmatmul.mubr.bf16.gmra.mxu0 %v4719
    %v4955 = vpop.f32.mrf.mxu0
    %v4956 = vadd.f32 0.0, %v4955
    %v4957 = vpop.f32.mrf.mxu0
    %v4958 = vpop.f32.mrf.mxu0
    %v4959 = vpop.f32.mrf.mxu0
    %4960 = vdwg.mxu0
    %v4961 = vadd.f32 %v4716, %v4915
    %v4962 = vxor.u32 %v4961, 2147483648
    %v4963 = vmul.f32 %v4962, 1.442695
    %v4964 = vpow.pop %v4963
    %v4965 = vadd.f32 %v4964, 1.0
    %v4966 = vrcp.pop %v4965
    %v4967 = vmul.f32 1.0, %v4966
    %v4968 = vadd.f32 %v4717, %v4917
    %v4969 = vxor.u32 %v4968, 2147483648
    %v4970 = vmul.f32 %v4969, 1.442695
    %v4971 = vpow.pop %v4970
    %v4972 = vadd.f32 %v4971, 1.0
    %v4973 = vrcp.pop %v4972
    %v4974 = vmul.f32 1.0, %v4973
    %v4975 = vadd.f32 %v4956, %v2843
    %v4976 = vmul.f32 %v4967, %v4975
    %v4977 = vadd.f32 %v4718, %v4976
    %v4978 = vtanh.pop %v4977
    %v4979 = vsub.f32 %v4714, %v4978
    %v4980 = vmul.f32 %v4974, %v4979
    %v4981 = vadd.f32 %v4978, %v4980
    %4982 = vst [vmem:[#allocation10 + $0x38] sm:$0xff] %v4981
    %s4983 = scalar_lea.vmem [#allocation11], 8
    %4984 = vst [vmem:[%s4983] sm:$0xff] %v4981
    // Predicated region
    $region54: #{tpu_custom_call.1} parent=1 // pred_check
      _
    $region55: #{tpu_custom_call.1} parent=1 // pred_check_branch
      %4986 = sbr.rel (0) target = $region57
    $region56: #{tpu_custom_call.1} parent=1 // pred_region
      %s4988 = ssub.s32 1024, 1024
      %4989 = vsyncadd [#allocation6], %s4988
      %s4990 = sshll.u32 [#allocation10], 4
      %s4991 = int_to_ptr.vmem [resolvable:$true] %s4990
      %4996 = dma.vmem_to_hbm [thread:$0]  %s4991, 1024, %s10, [#allocation6], 128, 128, 8
    $region57: #{tpu_custom_call.1} parent=1 // pred_fallthru
      _
    // Predicated region
    $region58: #{tpu_custom_call.1} parent=1 // pred_check
      _
    $region59: #{tpu_custom_call.1} parent=1 // pred_check_branch
      %4998 = sbr.rel (0) target = $region61
    $region60: #{tpu_custom_call.1} parent=1 // pred_region
      %s5000 = ssub.s32 256, 256
      %5001 = vsyncadd [#allocation12], %s5000
      %s5002 = sshll.u32 [#allocation11], 4
      %s5003 = int_to_ptr.vmem [resolvable:$true] %s5002
      %5008 = dma.vmem_to_hbm [thread:$0]  %s5003, 256, %s11, [#allocation12], 128, 128, 8
    $region61: #{tpu_custom_call.1} parent=1 // pred_fallthru
      _
    // Predicated region
    $region62: #{tpu_custom_call.1} parent=1 // pred_check
      _
    $region63: #{tpu_custom_call.1} parent=1 // pred_check_branch
      %5010 = sbr.rel (0) target = $region65
    $region64: #{tpu_custom_call.1} parent=1 // pred_region
      %5011 = dma.done [#allocation6], 1024
    $region65: #{tpu_custom_call.1} parent=1 // pred_fallthru
      _
    // Predicated region
    $region66: #{tpu_custom_call.1} parent=1 // pred_check
      _
    $region67: #{tpu_custom_call.1} parent=1 // pred_check_branch
      %5013 = sbr.rel (0) target = $region69
    $region68: #{tpu_custom_call.1} parent=1 // pred_region
      %5014 = dma.done [#allocation12], 256
    $region69: #{tpu_custom_call.1} parent=1 // pred_fallthru
      _
    %5015 = vsyncpa [#allocation5], 1
    %5016 = vsyncpa [#allocation8], 1
    %5017 = vsyncpa [#allocation6], 1
    %5018 = vsyncpa [#allocation12], 1

</llo_original>
